<compile_context>
chip_gen: v5e
topology: v5e:2x2
jax: 0.10.0
libtpu: 0.0.40
codegen_flags: <defaults>
</compile_context>

<pallas_src>
import functools
import math

import jax
import jax.numpy as jnp
from jax.experimental import pallas as pl
from jax.experimental.pallas import tpu as pltpu


def _round_up(x, m):
    return (x + m - 1) // m * m


def _default_vmem_limit():
    # 3/4 of physical VMEM, capped at 100 MiB (=> ~96 MiB on 128 MiB v5e/v6e,
    # ~48 MiB on 64 MiB v7x).  Falls back to a universally safe 48 MiB.
    try:
        cap = int(pltpu.get_tpu_info().vmem_capacity_bytes)
        return max(32 * 1024 * 1024, min((cap * 3) // 4, 100 * 1024 * 1024))
    except Exception:
        return 48 * 1024 * 1024


_VMEM_LIMIT = _default_vmem_limit()


def _choose_tile(dim, cap, align):
    """Largest tile <= cap that divides `dim` and is a multiple of `align`.
    `dim` must already be a multiple of `align` (the wrappers pad to that)."""
    t = min(dim, max(cap, align))
    t -= t % align
    while t > align and dim % t:
        t -= align
    return max(t, align)


def _pad_row(v, dp, fill=0.0):
    v = jnp.asarray(v, jnp.float32)
    return jnp.pad(v, ((0, dp - v.shape[0]),), constant_values=fill).reshape(1, dp)


# ----------------------------------------------------------------------------
# Fused liquid-layer STACK: for every layer, I = x @ W^T + b (bf16 MXU, f32
# acc), then the dt/tau leaky-integrator recurrence + tanh + LayerNorm, all in
# one kernel so intermediate activations never leave VMEM.  Activations are
# time-major (S, BT, D_pad); each timestep touches one aligned (8,128) tile.
# ----------------------------------------------------------------------------
def _liquid_stack_kernel(*refs, num_layers, d_reals):
    x_ref = refs[0]
    o_ref = refs[-1]
    S, BT, _ = x_ref.shape

    x = x_ref[...]                                 # bf16 (S, BT, Din_p), time-major
    for li in range(num_layers):
        wt_ref, b_ref, alpha_ref, gamma_ref, beta_ref = refs[1 + 5 * li: 6 + 5 * li]
        dout_p = wt_ref.shape[1]
        inv_d = 1.0 / d_reals[li]                  # LayerNorm over the REAL features

        # Fused input projection for the whole (seq, batch-tile) block.
        proj = (jnp.dot(x.reshape(S * BT, x.shape[-1]), wt_ref[...],
                        preferred_element_type=jnp.float32)
                + b_ref[...]).reshape(S, BT, dout_p)

        alpha = alpha_ref[...]                     # dt / tau (precomputed outside)
        gamma = gamma_ref[...]
        beta = beta_ref[...]

        u = jnp.zeros((BT, dout_p), jnp.float32)
        s = jnp.zeros((BT, dout_p), jnp.float32)
        ys = []
        for t in range(S):                         # static, small seq loop
            i_t = proj[t]                          # slice the VALUE (no ref re-read)
            u_new = u + (i_t - u) * alpha          # u_{t+1} = u_t + (I_t - u_t)*dt/tau
            s_new = s + (u - s) * alpha            # uses PRE-update u_t (matches ref)
            out = jnp.tanh(s_new)
            # Padded feature columns are exactly zero, so masked LayerNorm stats
            # reduce to plain sums scaled by 1/d_real.
            mean = jnp.sum(out, axis=-1, keepdims=True) * inv_d
            ex2 = jnp.sum(out * out, axis=-1, keepdims=True) * inv_d
            var = ex2 - mean * mean
            ys.append((out - mean) * jax.lax.rsqrt(var + 1e-5) * gamma + beta)
            u, s = u_new, s_new

        # Single lane-dense value (no per-timestep stores); bf16 between layers.
        x = jnp.stack(ys, axis=0).astype(jnp.bfloat16)     # (S, BT, dout_p)
        # TODO(synk): nn.Dropout between liquid layers is stochastic; eval-mode identity here.

    o_ref[...] = x                                  # one lane-dense bf16 store


def liquid_stack(x_pad, layers, d_reals, bt):
    S, Bp, Ep = x_pad.shape
    grid = (Bp // bt,)
    d_last_p = layers[-1]['wt'].shape[1]

    in_specs = [pl.BlockSpec((S, bt, Ep), lambda b: (0, b, 0))]
    args = [x_pad]
    for lp in layers:
        dip, dop = lp['wt'].shape
        in_specs += [pl.BlockSpec((dip, dop), lambda b: (0, 0)),
                     pl.BlockSpec((1, dop), lambda b: (0, 0)),
                     pl.BlockSpec((1, dop), lambda b: (0, 0)),
                     pl.BlockSpec((1, dop), lambda b: (0, 0)),
                     pl.BlockSpec((1, dop), lambda b: (0, 0))]
        args += [lp['wt'], lp['b'], lp['alpha'], lp['gamma'], lp['beta']]

    kernel = functools.partial(_liquid_stack_kernel,
                               num_layers=len(layers), d_reals=tuple(d_reals))
    return pl.pallas_call(
        kernel,
        out_shape=jax.ShapeDtypeStruct((S, Bp, d_last_p), jnp.bfloat16),
        grid_spec=pltpu.PrefetchScalarGridSpec(
            num_scalar_prefetch=0, grid=grid,
            in_specs=in_specs,
            out_specs=pl.BlockSpec((S, bt, d_last_p), lambda b: (0, b, 0))),
        compiler_params=pltpu.CompilerParams(
            dimension_semantics=("parallel",),
            vmem_limit_bytes=_VMEM_LIMIT),
    )(*args)


# ----------------------------------------------------------------------------
# Fused attention block: in_proj (Q,K,V) -> per-head softmax(QK^T)V -> out_proj
# in a single kernel, batch-tiled grid.  Time->batch relayout is one value
# transpose of the loaded block; per-head outputs are concatenated and written
# with one lane-dense store (no scratch, no masked per-head stores).
# ----------------------------------------------------------------------------
def _attn_block_kernel(x_ref, wq_ref, wk_ref, wv_ref, bq_ref, bk_ref, bv_ref,
                       wo_ref, bo_ref, o_ref, *, num_heads):
    S, BT, Hp = x_ref.shape
    H = wq_ref.shape[1]
    dh = H // num_heads

    # time-major -> batch-major, once, on the loaded value (replaces the old
    # S*BT masked-store relayout loop + scratch buffer).
    xb = jnp.transpose(x_ref[...], (1, 0, 2))          # (BT, S, Hp) bf16
    x2 = xb.reshape(BT * S, Hp)

    # QKV projections (1/sqrt(dh) already folded into wq/bq by prepare_params).
    q = jnp.dot(x2, wq_ref[...], preferred_element_type=jnp.float32) + bq_ref[...]
    k = jnp.dot(x2, wk_ref[...], preferred_element_type=jnp.float32) + bk_ref[...]
    v = jnp.dot(x2, wv_ref[...], preferred_element_type=jnp.float32) + bv_ref[...]
    q = q.reshape(BT, S, H)
    k = k.reshape(BT, S, H)
    v = v.reshape(BT, S, H)

    # Per-head attention (static, small head loop); outputs stay as values.
    ohs = []
    for h in range(num_heads):
        sl = slice(h * dh, (h + 1) * dh)
        qh = q[:, :, sl].astype(jnp.bfloat16)
        kh = k[:, :, sl].astype(jnp.bfloat16)
        vh = v[:, :, sl].astype(jnp.bfloat16)
        s = jnp.einsum('bqd,bkd->bqk', qh, kh, preferred_element_type=jnp.float32)
        s = s - jnp.max(s, axis=-1, keepdims=True)
        p = jnp.exp(s)
        p = p / jnp.sum(p, axis=-1, keepdims=True)     # exact softmax (torch parity)
        ohs.append(jnp.einsum('bqk,bkd->bqd', p.astype(jnp.bfloat16), vh,
                              preferred_element_type=jnp.float32))
    # TODO(synk): attention-weight dropout is stochastic; eval-mode identity here.

    ctx = jnp.concatenate(ohs, axis=-1).reshape(BT * S, H).astype(jnp.bfloat16)
    o_ref[...] = (jnp.dot(ctx, wo_ref[...], preferred_element_type=jnp.float32)
                  + bo_ref[...]).astype(o_ref.dtype)   # single lane-dense store


def attention_block(x_pad, prep, num_heads, bt):
    S, Bp, Hp = x_pad.shape
    grid = (Bp // bt,)

    def full_spec(arr):
        return pl.BlockSpec(arr.shape, lambda b: (0, 0))

    kernel = functools.partial(_attn_block_kernel, num_heads=num_heads)
    return pl.pallas_call(
        kernel,
        out_shape=jax.ShapeDtypeStruct((Bp * S, Hp), jnp.bfloat16),
        grid_spec=pltpu.PrefetchScalarGridSpec(
            num_scalar_prefetch=0, grid=grid,
            in_specs=[pl.BlockSpec((S, bt, Hp), lambda b: (0, b, 0)),
                      full_spec(prep['wq']), full_spec(prep['wk']),
                      full_spec(prep['wv']), full_spec(prep['bq']),
                      full_spec(prep['bk']), full_spec(prep['bv']),
                      full_spec(prep['wo']), full_spec(prep['bo'])],
            out_specs=pl.BlockSpec((bt * S, Hp), lambda b: (b, 0))),
        compiler_params=pltpu.CompilerParams(
            dimension_semantics=("parallel",),
            vmem_limit_bytes=_VMEM_LIMIT),
    )(x_pad, prep['wq'], prep['wk'], prep['wv'], prep['bq'], prep['bk'],
      prep['bv'], prep['wo'], prep['bo'])


# ----------------------------------------------------------------------------
# Tiled, pipelined linear with K-axis accumulation (vocab logits): bf16 x and
# bf16 w stream through the MXU with an f32 accumulator; pl.when init/finalize.
# ----------------------------------------------------------------------------
def _linear_tiled_kernel(x_ref, w_ref, b_ref, o_ref, acc_ref):
    @pl.when(pl.program_id(2) == 0)
    def _():
        acc_ref[...] = jnp.zeros_like(acc_ref)

    acc_ref[...] += jnp.dot(x_ref[...], w_ref[...],
                            preferred_element_type=jnp.float32)

    @pl.when(pl.program_id(2) == pl.num_programs(2) - 1)
    def _():
        o_ref[...] = acc_ref[...] + b_ref[...]


def linear_tiled(x2d, w_bf16, b):
    M, K = x2d.shape
    N = w_bf16.shape[1]
    tm = _choose_tile(M, 256, 8)       # sublane-aligned
    tn = _choose_tile(N, 512, 128)     # lane-aligned
    tk = _choose_tile(K, 512, 128)
    grid = (M // tm, N // tn, K // tk)
    return pl.pallas_call(
        _linear_tiled_kernel,
        out_shape=jax.ShapeDtypeStruct((M, N), jnp.float32),
        grid_spec=pltpu.PrefetchScalarGridSpec(
            num_scalar_prefetch=0,
            grid=grid,
            in_specs=[
                pl.BlockSpec((tm, tk), lambda i, j, k: (i, k)),
                pl.BlockSpec((tk, tn), lambda i, j, k: (k, j)),
                pl.BlockSpec((1, tn), lambda i, j, k: (0, j)),
            ],
            out_specs=pl.BlockSpec((tm, tn), lambda i, j, k: (i, j)),
            scratch_shapes=[pltpu.VMEM((tm, tn), jnp.float32)]),
        compiler_params=pltpu.CompilerParams(
            dimension_semantics=("parallel", "parallel", "arbitrary"),
            vmem_limit_bytes=_VMEM_LIMIT),
    )(x2d, w_bf16, b)


# ----------------------------------------------------------------------------
# Parameters (deterministic synthetic init matching the module's shapes).
# ----------------------------------------------------------------------------
def init_params(key, vocab, embed, hidden_sizes, seq_len):
    keys = jax.random.split(key, 8)
    params = {}
    params['embedding'] = jax.random.normal(keys[0], (vocab, embed), jnp.float32)

    position = jnp.arange(seq_len, dtype=jnp.float32)[:, None]
    div_term = jnp.exp(jnp.arange(0, embed, 2, dtype=jnp.float32) *
                       (-math.log(10000.0) / embed))
    pe = jnp.zeros((seq_len, embed), jnp.float32)
    pe = pe.at[:, 0::2].set(jnp.sin(position * div_term))
    pe = pe.at[:, 1::2].set(jnp.cos(position * div_term))
    params['pe'] = pe

    layers = []
    in_f = embed
    for i, out_f in enumerate(hidden_sizes):
        kw = jax.random.fold_in(keys[1], i)
        W = jax.random.normal(kw, (out_f, in_f), jnp.float32) / math.sqrt(in_f)
        layers.append(dict(
            w=W,                                            # (out, in) PyTorch layout
            b=jnp.zeros((out_f,), jnp.float32),
            tau=jnp.ones((out_f,), jnp.float32),
            gamma=jnp.ones((out_f,), jnp.float32),          # LayerNorm weight
            beta=jnp.zeros((out_f,), jnp.float32)))         # LayerNorm bias
        in_f = out_f
    params['liquid'] = layers

    H = hidden_sizes[-1]
    params['in_proj_w'] = (jax.random.normal(keys[2], (3 * H, H), jnp.float32)
                           / math.sqrt(H))
    params['in_proj_b'] = jnp.zeros((3 * H,), jnp.float32)
    params['out_proj_w'] = (jax.random.normal(keys[3], (H, H), jnp.float32)
                            / math.sqrt(H))
    params['out_proj_b'] = jnp.zeros((H,), jnp.float32)
    params['fc_w'] = (jax.random.normal(keys[4], (vocab, H), jnp.float32)
                      / math.sqrt(H))
    params['fc_b'] = jnp.zeros((vocab,), jnp.float32)
    params['log_dt'] = jnp.zeros((), jnp.float32)           # log(dt = 1.0)
    return params


# ----------------------------------------------------------------------------
# One-time parameter preparation (all padding / transposes / bf16 casts /
# 1/sqrt(dh) folding / alpha=dt/tau), kept OUT of the hot jitted forward.
# ----------------------------------------------------------------------------
def prepare_params(params, num_heads):
    E = params['embedding'].shape[1]
    V = params['fc_w'].shape[0]
    H = params['out_proj_w'].shape[0]
    dh = H // num_heads
    scale = 1.0 / math.sqrt(dh)
    Ep = _round_up(E, 128)
    Hp = _round_up(H, 128)
    Vp = _round_up(V, 128)
    dt = jnp.exp(params['log_dt'])                          # dt = exp(log_dt)

    prep = {
        'emb': jnp.pad(params['embedding'], ((0, 0), (0, Ep - E))),
        'pe': jnp.pad(params['pe'], ((0, 0), (0, Ep - E))),
    }

    layers = []
    d_reals = []
    din_p = Ep
    for lp in params['liquid']:
        dout, din = lp['w'].shape
        dout_p = _round_up(dout, 128)
        wt = jnp.pad(lp['w'].T, ((0, din_p - din), (0, dout_p - dout)))
        layers.append(dict(
            wt=wt.astype(jnp.bfloat16),
            b=_pad_row(lp['b'], dout_p),
            alpha=_pad_row(dt / lp['tau'], dout_p),         # dt/tau hoisted out of kernel
            gamma=_pad_row(lp['gamma'], dout_p),
            beta=_pad_row(lp['beta'], dout_p)))
        d_reals.append(dout)
        din_p = dout_p
    prep['liquid'] = layers

    wq = params['in_proj_w'][:H].T * scale                  # fold 1/sqrt(dh) into Q
    wk = params['in_proj_w'][H:2 * H].T
    wv = params['in_proj_w'][2 * H:].T
    prep['wq'] = jnp.pad(wq, ((0, Hp - H), (0, 0))).astype(jnp.bfloat16)   # (Hp, H)
    prep['wk'] = jnp.pad(wk, ((0, Hp - H), (0, 0))).astype(jnp.bfloat16)
    prep['wv'] = jnp.pad(wv, ((0, Hp - H), (0, 0))).astype(jnp.bfloat16)
    prep['bq'] = (params['in_proj_b'][:H] * scale).reshape(1, H).astype(jnp.float32)
    prep['bk'] = params['in_proj_b'][H:2 * H].reshape(1, H).astype(jnp.float32)
    prep['bv'] = params['in_proj_b'][2 * H:].reshape(1, H).astype(jnp.float32)
    prep['wo'] = jnp.pad(params['out_proj_w'].T,
                         ((0, 0), (0, Hp - H))).astype(jnp.bfloat16)       # (H, Hp)
    prep['bo'] = _pad_row(params['out_proj_b'], Hp)
    prep['fc_w'] = jnp.pad(params['fc_w'].T,
                           ((0, Hp - H), (0, Vp - V))).astype(jnp.bfloat16)  # (Hp, Vp)
    prep['fc_b'] = _pad_row(params['fc_b'], Vp)
    return prep, tuple(d_reals)


# ----------------------------------------------------------------------------
# Full forward pass (eval mode: dropout layers are identity).
# ----------------------------------------------------------------------------
@functools.partial(jax.jit, static_argnames=('num_heads', 'd_reals', 'vocab'))
def liquid_nn_forward(tokens, prep, *, num_heads, d_reals, vocab):
    B, S = tokens.shape
    Vp = prep['fc_w'].shape[1]

    # Batch padding / batch-tile size (sublane-friendly for bf16 blocks).
    Bp = _round_up(B, 8)
    if Bp > 8:
        Bp = _round_up(Bp, 16)
    bt = 8 if Bp == 8 else 16

    # Embedding lookup (gather) + positional encoding: plain-JAX glue.
    x = prep['emb'][tokens] + prep['pe'][None, :S, :]        # (B, S, Ep)
    x = jnp.transpose(x, (1, 0, 2))                          # (S, B, Ep) time-major
    x = jnp.pad(x, ((0, 0), (0, Bp - B), (0, 0))).astype(jnp.bfloat16)

    # Fused liquid-layer stack (all layers in one kernel), bf16 out.
    x = liquid_stack(x, prep['liquid'], d_reals, bt)         # (S, Bp, Dp) bf16

    # Multi-head self-attention + out_proj, fused; batch-major bf16 out.
    attn = attention_block(x, prep, num_heads, bt)           # (Bp*S, Hp) bf16

    # Output (vocab) projection: tiled/pipelined linear, bf16 in / f32 out.
    logits = linear_tiled(attn, prep['fc_w'], prep['fc_b'])  # (Bp*S, Vp) f32

    logits = logits.reshape(Bp, S, Vp)[:B, :, :vocab]        # (B, S, vocab)
    return logits


if __name__ == "__main__":
    vocab_size = 64
    embed_size = 32
    hidden_sizes = [32, 32]
    seq_len = 8
    batch = 2
    num_heads = 4
    assert hidden_sizes[-1] % num_heads == 0

    key = jax.random.PRNGKey(0)
    pkey, tkey = jax.random.split(key)
    params = init_params(pkey, vocab_size, embed_size, hidden_sizes, seq_len)
    prep, d_reals = prepare_params(params, num_heads)
    tokens = jax.random.randint(tkey, (batch, seq_len), 0, vocab_size,
                                dtype=jnp.int32)

    out = liquid_nn_forward(tokens, prep, num_heads=num_heads,
                            d_reals=d_reals, vocab=vocab_size)
    out = jax.block_until_ready(out)
    assert out.shape == (batch, seq_len, vocab_size), out.shape
    assert bool(jnp.all(jnp.isfinite(out)))
    print("KERNEL_OK")
</pallas_src>

<mosaic_0001>
module attributes {stable_mosaic.version = 11 : i64} {
  func.func @_linear_tiled_kernel(%arg0: i32, %arg1: i32, %arg2: i32, %arg3: memref<64x128xbf16, #tpu.memory_space<vmem>>, %arg4: memref<128x128xbf16, #tpu.memory_space<vmem>>, %arg5: memref<1x128xf32, #tpu.memory_space<vmem>>, %arg6: memref<64x128xf32, #tpu.memory_space<vmem>>, %arg7: memref<64x128xf32, #tpu.memory_space<vmem>>) attributes {dimension_semantics = [#tpu.dimension_semantics<parallel>, #tpu.dimension_semantics<parallel>, #tpu.dimension_semantics<arbitrary>], iteration_bounds = array<i64: 1, 1, 1>, scalar_prefetch = 0 : i64, scratch_operands = 1 : i64, tpu.core_type = #tpu.core_type<tc>, window_params = [{transform_indices = @transform_0, window_bounds = array<i64: 64, 128>}, {transform_indices = @transform_1, window_bounds = array<i64: 128, 128>}, {transform_indices = @transform_2, window_bounds = array<i64: 1, 128>}, {transform_indices = @transform_3, window_bounds = array<i64: 64, 128>}]} {
    %c0_i32 = arith.constant 0 : i32
    %0 = arith.cmpi eq, %arg2, %c0_i32 : i32
    %1 = arith.extui %0 : i1 to i32
    %c0_i32_0 = arith.constant 0 : i32
    %2 = arith.cmpi ne, %1, %c0_i32_0 : i32
    scf.if %2 {
      %cst_10 = arith.constant 0.000000e+00 : f32
      %12 = vector.broadcast %cst_10 : f32 to vector<64x128xf32>
      %c0_11 = arith.constant 0 : index
      %c0_12 = arith.constant 0 : index
      %13 = vector.load %arg7[%c0_11, %c0_12] : memref<64x128xf32, #tpu.memory_space<vmem>>, vector<64x128xf32>
      tpu.vector_store %arg7[%c0_11, %c0_12], %12 {strides = array<i32>} : memref<64x128xf32, #tpu.memory_space<vmem>>, vector<64x128xf32>,
    } else {
    }
    %c0 = arith.constant 0 : index
    %c0_1 = arith.constant 0 : index
    %3 = vector.load %arg7[%c0, %c0_1] : memref<64x128xf32, #tpu.memory_space<vmem>>, vector<64x128xf32>
    %c0_2 = arith.constant 0 : index
    %c0_3 = arith.constant 0 : index
    %4 = vector.load %arg3[%c0_2, %c0_3] : memref<64x128xbf16, #tpu.memory_space<vmem>>, vector<64x128xbf16>
    %c0_4 = arith.constant 0 : index
    %c0_5 = arith.constant 0 : index
    %5 = vector.load %arg4[%c0_4, %c0_5] : memref<128x128xbf16, #tpu.memory_space<vmem>>, vector<128x128xbf16>
    %cst = arith.constant dense<0.000000e+00> : vector<64x128xf32>
    %6 = tpu.matmul %4, %5, %cst {dimension_numbers = #tpu.dot_dimension_numbers<[1], [0], [0], [1], [0, 0, 1, 1], [], []>} : vector<64x128xbf16>, vector<128x128xbf16>, vector<64x128xf32> -> vector<64x128xf32>
    %7 = arith.addf %3, %6 : vector<64x128xf32>
    %c0_6 = arith.constant 0 : index
    %c0_7 = arith.constant 0 : index
    %8 = vector.load %arg7[%c0_6, %c0_7] : memref<64x128xf32, #tpu.memory_space<vmem>>, vector<64x128xf32>
    tpu.vector_store %arg7[%c0_6, %c0_7], %7 {strides = array<i32>} : memref<64x128xf32, #tpu.memory_space<vmem>>, vector<64x128xf32>,
    %c0_i32_8 = arith.constant 0 : i32
    %9 = arith.cmpi eq, %arg2, %c0_i32_8 : i32
    %10 = arith.extui %9 : i1 to i32
    %c0_i32_9 = arith.constant 0 : i32
    %11 = arith.cmpi ne, %10, %c0_i32_9 : i32
    scf.if %11 {
      %c0_10 = arith.constant 0 : index
      %c0_11 = arith.constant 0 : index
      %12 = vector.load %arg7[%c0_10, %c0_11] : memref<64x128xf32, #tpu.memory_space<vmem>>, vector<64x128xf32>
      %c0_12 = arith.constant 0 : index
      %c0_13 = arith.constant 0 : index
      %13 = vector.load %arg5[%c0_12, %c0_13] : memref<1x128xf32, #tpu.memory_space<vmem>>, vector<1x128xf32>
      %14 = vector.broadcast %13 : vector<1x128xf32> to vector<64x128xf32>
      %15 = arith.addf %12, %14 : vector<64x128xf32>
      %c0_14 = arith.constant 0 : index
      %c0_15 = arith.constant 0 : index
      %16 = vector.load %arg6[%c0_14, %c0_15] : memref<64x128xf32, #tpu.memory_space<vmem>>, vector<64x128xf32>
      tpu.vector_store %arg6[%c0_14, %c0_15], %15 {strides = array<i32>} : memref<64x128xf32, #tpu.memory_space<vmem>>, vector<64x128xf32>,
    } else {
    }
    return
  }
  func.func @transform_0(%arg0: i32, %arg1: i32, %arg2: i32) -> (i32, i32) {
    %c0_i32 = arith.constant 0 : i32
    return %arg0, %arg2 : i32, i32
  }
  func.func @transform_1(%arg0: i32, %arg1: i32, %arg2: i32) -> (i32, i32) {
    %c0_i32 = arith.constant 0 : i32
    return %arg2, %arg1 : i32, i32
  }
  func.func @transform_2(%arg0: i32, %arg1: i32, %arg2: i32) -> (i32, i32) {
    %c0_i32 = arith.constant 0 : i32
    %c0_i32_0 = arith.constant 0 : i32
    return %c0_i32, %arg1 : i32, i32
  }
  func.func @transform_3(%arg0: i32, %arg1: i32, %arg2: i32) -> (i32, i32) {
    %c0_i32 = arith.constant 0 : i32
    return %arg0, %arg1 : i32, i32
  }
}

module attributes {stable_mosaic.version = 11 : i64} {
  func.func @_attn_block_kernel(%arg0: i32, %arg1: memref<8x8x128xbf16, #tpu.memory_space<vmem>>, %arg2: memref<128x32xbf16, #tpu.memory_space<vmem>>, %arg3: memref<128x32xbf16, #tpu.memory_space<vmem>>, %arg4: memref<128x32xbf16, #tpu.memory_space<vmem>>, %arg5: memref<1x32xf32, #tpu.memory_space<vmem>>, %arg6: memref<1x32xf32, #tpu.memory_space<vmem>>, %arg7: memref<1x32xf32, #tpu.memory_space<vmem>>, %arg8: memref<32x128xbf16, #tpu.memory_space<vmem>>, %arg9: memref<1x128xf32, #tpu.memory_space<vmem>>, %arg10: memref<64x128xbf16, #tpu.memory_space<vmem>>) attributes {dimension_semantics = [#tpu.dimension_semantics<parallel>], iteration_bounds = array<i64: 1>, scalar_prefetch = 0 : i64, scratch_operands = 0 : i64, tpu.core_type = #tpu.core_type<tc>, window_params = [{transform_indices = @transform_0, window_bounds = array<i64: 8, 8, 128>}, {pipeline_mode = #tpu.pipeline_mode<synchronous>, transform_indices = @transform_1, window_bounds = array<i64: 128, 32>}, {pipeline_mode = #tpu.pipeline_mode<synchronous>, transform_indices = @transform_2, window_bounds = array<i64: 128, 32>}, {pipeline_mode = #tpu.pipeline_mode<synchronous>, transform_indices = @transform_3, window_bounds = array<i64: 128, 32>}, {pipeline_mode = #tpu.pipeline_mode<synchronous>, transform_indices = @transform_4, window_bounds = array<i64: 1, 32>}, {pipeline_mode = #tpu.pipeline_mode<synchronous>, transform_indices = @transform_5, window_bounds = array<i64: 1, 32>}, {pipeline_mode = #tpu.pipeline_mode<synchronous>, transform_indices = @transform_6, window_bounds = array<i64: 1, 32>}, {pipeline_mode = #tpu.pipeline_mode<synchronous>, transform_indices = @transform_7, window_bounds = array<i64: 32, 128>}, {pipeline_mode = #tpu.pipeline_mode<synchronous>, transform_indices = @transform_8, window_bounds = array<i64: 1, 128>}, {transform_indices = @transform_9, window_bounds = array<i64: 64, 128>}]} {
    %c0 = arith.constant 0 : index
    %c0_0 = arith.constant 0 : index
    %c0_1 = arith.constant 0 : index
    %0 = vector.load %arg1[%c0, %c0_0, %c0_1] : memref<8x8x128xbf16, #tpu.memory_space<vmem>>, vector<8x8x128xbf16>
    %1 = tpu.transpose %0, [1, 0, 2] : vector<8x8x128xbf16> -> vector<8x8x128xbf16>
    %2 = vector.shape_cast %1 : vector<8x8x128xbf16> to vector<64x128xbf16>
    %c0_2 = arith.constant 0 : index
    %c0_3 = arith.constant 0 : index
    %3 = vector.load %arg2[%c0_2, %c0_3] : memref<128x32xbf16, #tpu.memory_space<vmem>>, vector<128x32xbf16>
    %cst = arith.constant dense<0.000000e+00> : vector<64x32xf32>
    %4 = tpu.matmul %2, %3, %cst {dimension_numbers = #tpu.dot_dimension_numbers<[1], [0], [0], [1], [0, 0, 1, 1], [], []>} : vector<64x128xbf16>, vector<128x32xbf16>, vector<64x32xf32> -> vector<64x32xf32>
    %c0_4 = arith.constant 0 : index
    %c0_5 = arith.constant 0 : index
    %5 = vector.load %arg5[%c0_4, %c0_5] : memref<1x32xf32, #tpu.memory_space<vmem>>, vector<1x32xf32>
    %6 = vector.broadcast %5 : vector<1x32xf32> to vector<64x32xf32>
    %7 = arith.addf %4, %6 : vector<64x32xf32>
    %c0_6 = arith.constant 0 : index
    %c0_7 = arith.constant 0 : index
    %8 = vector.load %arg3[%c0_6, %c0_7] : memref<128x32xbf16, #tpu.memory_space<vmem>>, vector<128x32xbf16>
    %cst_8 = arith.constant dense<0.000000e+00> : vector<64x32xf32>
    %9 = tpu.matmul %2, %8, %cst_8 {dimension_numbers = #tpu.dot_dimension_numbers<[1], [0], [0], [1], [0, 0, 1, 1], [], []>} : vector<64x128xbf16>, vector<128x32xbf16>, vector<64x32xf32> -> vector<64x32xf32>
    %c0_9 = arith.constant 0 : index
    %c0_10 = arith.constant 0 : index
    %10 = vector.load %arg6[%c0_9, %c0_10] : memref<1x32xf32, #tpu.memory_space<vmem>>, vector<1x32xf32>
    %11 = vector.broadcast %10 : vector<1x32xf32> to vector<64x32xf32>
    %12 = arith.addf %9, %11 : vector<64x32xf32>
    %c0_11 = arith.constant 0 : index
    %c0_12 = arith.constant 0 : index
    %13 = vector.load %arg4[%c0_11, %c0_12] : memref<128x32xbf16, #tpu.memory_space<vmem>>, vector<128x32xbf16>
    %cst_13 = arith.constant dense<0.000000e+00> : vector<64x32xf32>
    %14 = tpu.matmul %2, %13, %cst_13 {dimension_numbers = #tpu.dot_dimension_numbers<[1], [0], [0], [1], [0, 0, 1, 1], [], []>} : vector<64x128xbf16>, vector<128x32xbf16>, vector<64x32xf32> -> vector<64x32xf32>
    %c0_14 = arith.constant 0 : index
    %c0_15 = arith.constant 0 : index
    %15 = vector.load %arg7[%c0_14, %c0_15] : memref<1x32xf32, #tpu.memory_space<vmem>>, vector<1x32xf32>
    %16 = vector.broadcast %15 : vector<1x32xf32> to vector<64x32xf32>
    %17 = arith.addf %14, %16 : vector<64x32xf32>
    %18 = vector.shape_cast %7 : vector<64x32xf32> to vector<8x8x32xf32>
    %19 = vector.shape_cast %12 : vector<64x32xf32> to vector<8x8x32xf32>
    %20 = vector.shape_cast %17 : vector<64x32xf32> to vector<8x8x32xf32>
    %21 = vector.extract_strided_slice %18 {offsets = [0, 0, 0], sizes = [8, 8, 8], strides = [1, 1, 1]} : vector<8x8x32xf32> to vector<8x8x8xf32>
    %22 = arith.truncf %21 : vector<8x8x8xf32> to vector<8x8x8xbf16>
    %23 = vector.extract_strided_slice %19 {offsets = [0, 0, 0], sizes = [8, 8, 8], strides = [1, 1, 1]} : vector<8x8x32xf32> to vector<8x8x8xf32>
    %24 = arith.truncf %23 : vector<8x8x8xf32> to vector<8x8x8xbf16>
    %25 = vector.extract_strided_slice %20 {offsets = [0, 0, 0], sizes = [8, 8, 8], strides = [1, 1, 1]} : vector<8x8x32xf32> to vector<8x8x8xf32>
    %26 = arith.truncf %25 : vector<8x8x8xf32> to vector<8x8x8xbf16>
    "tpu.trace_start"() <{level = 10 : i32, message = "bqd,bkd->bqk"}> : () -> ()
    %cst_16 = arith.constant dense<0.000000e+00> : vector<8x8x8xf32>
    %27 = tpu.matmul %22, %24, %cst_16 {dimension_numbers = #tpu.dot_dimension_numbers<[2], [2], [1], [1], [0, 0, 0, 1, 1, 1], [0], [0]>} : vector<8x8x8xbf16>, vector<8x8x8xbf16>, vector<8x8x8xf32> -> vector<8x8x8xf32>
    "tpu.trace_stop"() : () -> ()
    %cst_17 = arith.constant dense<0xFF800000> : vector<8x8xf32>
    %28 = vector.multi_reduction <maximumf>, %27, %cst_17 [2] : vector<8x8x8xf32> to vector<8x8xf32>
    %29 = vector.shape_cast %28 : vector<8x8xf32> to vector<8x8x1xf32>
    %30 = vector.broadcast %29 : vector<8x8x1xf32> to vector<8x8x8xf32>
    %31 = arith.subf %27, %30 : vector<8x8x8xf32>
    %32 = math.exp %31 : vector<8x8x8xf32>
    %cst_18 = arith.constant dense<0.000000e+00> : vector<8x8xf32>
    %33 = vector.multi_reduction <add>, %32, %cst_18 [2] : vector<8x8x8xf32> to vector<8x8xf32>
    %34 = vector.shape_cast %33 : vector<8x8xf32> to vector<8x8x1xf32>
    %35 = vector.broadcast %34 : vector<8x8x1xf32> to vector<8x8x8xf32>
    %36 = arith.divf %32, %35 : vector<8x8x8xf32>
    %37 = arith.truncf %36 : vector<8x8x8xf32> to vector<8x8x8xbf16>
    "tpu.trace_start"() <{level = 10 : i32, message = "bqk,bkd->bqd"}> : () -> ()
    %cst_19 = arith.constant dense<0.000000e+00> : vector<8x8x8xf32>
    %38 = tpu.matmul %37, %26, %cst_19 {dimension_numbers = #tpu.dot_dimension_numbers<[2], [1], [1], [2], [0, 0, 0, 1, 1, 2], [0], [0]>} : vector<8x8x8xbf16>, vector<8x8x8xbf16>, vector<8x8x8xf32> -> vector<8x8x8xf32>
    "tpu.trace_stop"() : () -> ()
    %39 = vector.extract_strided_slice %18 {offsets = [0, 0, 8], sizes = [8, 8, 8], strides = [1, 1, 1]} : vector<8x8x32xf32> to vector<8x8x8xf32>
    %40 = arith.truncf %39 : vector<8x8x8xf32> to vector<8x8x8xbf16>
    %41 = vector.extract_strided_slice %19 {offsets = [0, 0, 8], sizes = [8, 8, 8], strides = [1, 1, 1]} : vector<8x8x32xf32> to vector<8x8x8xf32>
    %42 = arith.truncf %41 : vector<8x8x8xf32> to vector<8x8x8xbf16>
    %43 = vector.extract_strided_slice %20 {offsets = [0, 0, 8], sizes = [8, 8, 8], strides = [1, 1, 1]} : vector<8x8x32xf32> to vector<8x8x8xf32>
    %44 = arith.truncf %43 : vector<8x8x8xf32> to vector<8x8x8xbf16>
    "tpu.trace_start"() <{level = 10 : i32, message = "bqd,bkd->bqk"}> : () -> ()
    %cst_20 = arith.constant dense<0.000000e+00> : vector<8x8x8xf32>
    %45 = tpu.matmul %40, %42, %cst_20 {dimension_numbers = #tpu.dot_dimension_numbers<[2], [2], [1], [1], [0, 0, 0, 1, 1, 1], [0], [0]>} : vector<8x8x8xbf16>, vector<8x8x8xbf16>, vector<8x8x8xf32> -> vector<8x8x8xf32>
    "tpu.trace_stop"() : () -> ()
    %cst_21 = arith.constant dense<0xFF800000> : vector<8x8xf32>
    %46 = vector.multi_reduction <maximumf>, %45, %cst_21 [2] : vector<8x8x8xf32> to vector<8x8xf32>
    %47 = vector.shape_cast %46 : vector<8x8xf32> to vector<8x8x1xf32>
    %48 = vector.broadcast %47 : vector<8x8x1xf32> to vector<8x8x8xf32>
    %49 = arith.subf %45, %48 : vector<8x8x8xf32>
    %50 = math.exp %49 : vector<8x8x8xf32>
    %cst_22 = arith.constant dense<0.000000e+00> : vector<8x8xf32>
    %51 = vector.multi_reduction <add>, %50, %cst_22 [2] : vector<8x8x8xf32> to vector<8x8xf32>
    %52 = vector.shape_cast %51 : vector<8x8xf32> to vector<8x8x1xf32>
    %53 = vector.broadcast %52 : vector<8x8x1xf32> to vector<8x8x8xf32>
    %54 = arith.divf %50, %53 : vector<8x8x8xf32>
    %55 = arith.truncf %54 : vector<8x8x8xf32> to vector<8x8x8xbf16>
    "tpu.trace_start"() <{level = 10 : i32, message = "bqk,bkd->bqd"}> : () -> ()
    %cst_23 = arith.constant dense<0.000000e+00> : vector<8x8x8xf32>
    %56 = tpu.matmul %55, %44, %cst_23 {dimension_numbers = #tpu.dot_dimension_numbers<[2], [1], [1], [2], [0, 0, 0, 1, 1, 2], [0], [0]>} : vector<8x8x8xbf16>, vector<8x8x8xbf16>, vector<8x8x8xf32> -> vector<8x8x8xf32>
    "tpu.trace_stop"() : () -> ()
    %57 = vector.extract_strided_slice %18 {offsets = [0, 0, 16], sizes = [8, 8, 8], strides = [1, 1, 1]} : vector<8x8x32xf32> to vector<8x8x8xf32>
    %58 = arith.truncf %57 : vector<8x8x8xf32> to vector<8x8x8xbf16>
    %59 = vector.extract_strided_slice %19 {offsets = [0, 0, 16], sizes = [8, 8, 8], strides = [1, 1, 1]} : vector<8x8x32xf32> to vector<8x8x8xf32>
    %60 = arith.truncf %59 : vector<8x8x8xf32> to vector<8x8x8xbf16>
    %61 = vector.extract_strided_slice %20 {offsets = [0, 0, 16], sizes = [8, 8, 8], strides = [1, 1, 1]} : vector<8x8x32xf32> to vector<8x8x8xf32>
    %62 = arith.truncf %61 : vector<8x8x8xf32> to vector<8x8x8xbf16>
    "tpu.trace_start"() <{level = 10 : i32, message = "bqd,bkd->bqk"}> : () -> ()
    %cst_24 = arith.constant dense<0.000000e+00> : vector<8x8x8xf32>
    %63 = tpu.matmul %58, %60, %cst_24 {dimension_numbers = #tpu.dot_dimension_numbers<[2], [2], [1], [1], [0, 0, 0, 1, 1, 1], [0], [0]>} : vector<8x8x8xbf16>, vector<8x8x8xbf16>, vector<8x8x8xf32> -> vector<8x8x8xf32>
    "tpu.trace_stop"() : () -> ()
    %cst_25 = arith.constant dense<0xFF800000> : vector<8x8xf32>
    %64 = vector.multi_reduction <maximumf>, %63, %cst_25 [2] : vector<8x8x8xf32> to vector<8x8xf32>
    %65 = vector.shape_cast %64 : vector<8x8xf32> to vector<8x8x1xf32>
    %66 = vector.broadcast %65 : vector<8x8x1xf32> to vector<8x8x8xf32>
    %67 = arith.subf %63, %66 : vector<8x8x8xf32>
    %68 = math.exp %67 : vector<8x8x8xf32>
    %cst_26 = arith.constant dense<0.000000e+00> : vector<8x8xf32>
    %69 = vector.multi_reduction <add>, %68, %cst_26 [2] : vector<8x8x8xf32> to vector<8x8xf32>
    %70 = vector.shape_cast %69 : vector<8x8xf32> to vector<8x8x1xf32>
    %71 = vector.broadcast %70 : vector<8x8x1xf32> to vector<8x8x8xf32>
    %72 = arith.divf %68, %71 : vector<8x8x8xf32>
    %73 = arith.truncf %72 : vector<8x8x8xf32> to vector<8x8x8xbf16>
    "tpu.trace_start"() <{level = 10 : i32, message = "bqk,bkd->bqd"}> : () -> ()
    %cst_27 = arith.constant dense<0.000000e+00> : vector<8x8x8xf32>
    %74 = tpu.matmul %73, %62, %cst_27 {dimension_numbers = #tpu.dot_dimension_numbers<[2], [1], [1], [2], [0, 0, 0, 1, 1, 2], [0], [0]>} : vector<8x8x8xbf16>, vector<8x8x8xbf16>, vector<8x8x8xf32> -> vector<8x8x8xf32>
    "tpu.trace_stop"() : () -> ()
    %75 = vector.extract_strided_slice %18 {offsets = [0, 0, 24], sizes = [8, 8, 8], strides = [1, 1, 1]} : vector<8x8x32xf32> to vector<8x8x8xf32>
    %76 = arith.truncf %75 : vector<8x8x8xf32> to vector<8x8x8xbf16>
    %77 = vector.extract_strided_slice %19 {offsets = [0, 0, 24], sizes = [8, 8, 8], strides = [1, 1, 1]} : vector<8x8x32xf32> to vector<8x8x8xf32>
    %78 = arith.truncf %77 : vector<8x8x8xf32> to vector<8x8x8xbf16>
    %79 = vector.extract_strided_slice %20 {offsets = [0, 0, 24], sizes = [8, 8, 8], strides = [1, 1, 1]} : vector<8x8x32xf32> to vector<8x8x8xf32>
    %80 = arith.truncf %79 : vector<8x8x8xf32> to vector<8x8x8xbf16>
    "tpu.trace_start"() <{level = 10 : i32, message = "bqd,bkd->bqk"}> : () -> ()
    %cst_28 = arith.constant dense<0.000000e+00> : vector<8x8x8xf32>
    %81 = tpu.matmul %76, %78, %cst_28 {dimension_numbers = #tpu.dot_dimension_numbers<[2], [2], [1], [1], [0, 0, 0, 1, 1, 1], [0], [0]>} : vector<8x8x8xbf16>, vector<8x8x8xbf16>, vector<8x8x8xf32> -> vector<8x8x8xf32>
    "tpu.trace_stop"() : () -> ()
    %cst_29 = arith.constant dense<0xFF800000> : vector<8x8xf32>
    %82 = vector.multi_reduction <maximumf>, %81, %cst_29 [2] : vector<8x8x8xf32> to vector<8x8xf32>
    %83 = vector.shape_cast %82 : vector<8x8xf32> to vector<8x8x1xf32>
    %84 = vector.broadcast %83 : vector<8x8x1xf32> to vector<8x8x8xf32>
    %85 = arith.subf %81, %84 : vector<8x8x8xf32>
    %86 = math.exp %85 : vector<8x8x8xf32>
    %cst_30 = arith.constant dense<0.000000e+00> : vector<8x8xf32>
    %87 = vector.multi_reduction <add>, %86, %cst_30 [2] : vector<8x8x8xf32> to vector<8x8xf32>
    %88 = vector.shape_cast %87 : vector<8x8xf32> to vector<8x8x1xf32>
    %89 = vector.broadcast %88 : vector<8x8x1xf32> to vector<8x8x8xf32>
    %90 = arith.divf %86, %89 : vector<8x8x8xf32>
    %91 = arith.truncf %90 : vector<8x8x8xf32> to vector<8x8x8xbf16>
    "tpu.trace_start"() <{level = 10 : i32, message = "bqk,bkd->bqd"}> : () -> ()
    %cst_31 = arith.constant dense<0.000000e+00> : vector<8x8x8xf32>
    %92 = tpu.matmul %91, %80, %cst_31 {dimension_numbers = #tpu.dot_dimension_numbers<[2], [1], [1], [2], [0, 0, 0, 1, 1, 2], [0], [0]>} : vector<8x8x8xbf16>, vector<8x8x8xbf16>, vector<8x8x8xf32> -> vector<8x8x8xf32>
    "tpu.trace_stop"() : () -> ()
    %93 = tpu.concatenate %38, %56, %74, %92 in 2 : vector<8x8x8xf32>, vector<8x8x8xf32>, vector<8x8x8xf32>, vector<8x8x8xf32> -> vector<8x8x32xf32>
    %94 = vector.shape_cast %93 : vector<8x8x32xf32> to vector<64x32xf32>
    %95 = arith.truncf %94 : vector<64x32xf32> to vector<64x32xbf16>
    %c0_32 = arith.constant 0 : index
    %c0_33 = arith.constant 0 : index
    %96 = vector.load %arg8[%c0_32, %c0_33] : memref<32x128xbf16, #tpu.memory_space<vmem>>, vector<32x128xbf16>
    %cst_34 = arith.constant dense<0.000000e+00> : vector<64x128xf32>
    %97 = tpu.matmul %95, %96, %cst_34 {dimension_numbers = #tpu.dot_dimension_numbers<[1], [0], [0], [1], [0, 0, 1, 1], [], []>} : vector<64x32xbf16>, vector<32x128xbf16>, vector<64x128xf32> -> vector<64x128xf32>
    %c0_35 = arith.constant 0 : index
    %c0_36 = arith.constant 0 : index
    %98 = vector.load %arg9[%c0_35, %c0_36] : memref<1x128xf32, #tpu.memory_space<vmem>>, vector<1x128xf32>
    %99 = vector.broadcast %98 : vector<1x128xf32> to vector<64x128xf32>
    %100 = arith.addf %97, %99 : vector<64x128xf32>
    %101 = arith.truncf %100 : vector<64x128xf32> to vector<64x128xbf16>
    %c0_37 = arith.constant 0 : index
    %c0_38 = arith.constant 0 : index
    %102 = vector.load %arg10[%c0_37, %c0_38] : memref<64x128xbf16, #tpu.memory_space<vmem>>, vector<64x128xbf16>
    tpu.vector_store %arg10[%c0_37, %c0_38], %101 {strides = array<i32>} : memref<64x128xbf16, #tpu.memory_space<vmem>>, vector<64x128xbf16>,
    return
  }
  func.func @transform_0(%arg0: i32) -> (i32, i32, i32) {
    %c0_i32 = arith.constant 0 : i32
    %c0_i32_0 = arith.constant 0 : i32
    %c0_i32_1 = arith.constant 0 : i32
    return %c0_i32, %arg0, %c0_i32_0 : i32, i32, i32
  }
  func.func @transform_1(%arg0: i32) -> (i32, i32) {
    %c0_i32 = arith.constant 0 : i32
    %c0_i32_0 = arith.constant 0 : i32
    %c0_i32_1 = arith.constant 0 : i32
    return %c0_i32, %c0_i32_0 : i32, i32
  }
  func.func @transform_2(%arg0: i32) -> (i32, i32) {
    %c0_i32 = arith.constant 0 : i32
    %c0_i32_0 = arith.constant 0 : i32
    %c0_i32_1 = arith.constant 0 : i32
    return %c0_i32, %c0_i32_0 : i32, i32
  }
  func.func @transform_3(%arg0: i32) -> (i32, i32) {
    %c0_i32 = arith.constant 0 : i32
    %c0_i32_0 = arith.constant 0 : i32
    %c0_i32_1 = arith.constant 0 : i32
    return %c0_i32, %c0_i32_0 : i32, i32
  }
  func.func @transform_4(%arg0: i32) -> (i32, i32) {
    %c0_i32 = arith.constant 0 : i32
    %c0_i32_0 = arith.constant 0 : i32
    %c0_i32_1 = arith.constant 0 : i32
    return %c0_i32, %c0_i32_0 : i32, i32
  }
  func.func @transform_5(%arg0: i32) -> (i32, i32) {
    %c0_i32 = arith.constant 0 : i32
    %c0_i32_0 = arith.constant 0 : i32
    %c0_i32_1 = arith.constant 0 : i32
    return %c0_i32, %c0_i32_0 : i32, i32
  }
  func.func @transform_6(%arg0: i32) -> (i32, i32) {
    %c0_i32 = arith.constant 0 : i32
    %c0_i32_0 = arith.constant 0 : i32
    %c0_i32_1 = arith.constant 0 : i32
    return %c0_i32, %c0_i32_0 : i32, i32
  }
  func.func @transform_7(%arg0: i32) -> (i32, i32) {
    %c0_i32 = arith.constant 0 : i32
    %c0_i32_0 = arith.constant 0 : i32
    %c0_i32_1 = arith.constant 0 : i32
    return %c0_i32, %c0_i32_0 : i32, i32
  }
  func.func @transform_8(%arg0: i32) -> (i32, i32) {
    %c0_i32 = arith.constant 0 : i32
    %c0_i32_0 = arith.constant 0 : i32
    %c0_i32_1 = arith.constant 0 : i32
    return %c0_i32, %c0_i32_0 : i32, i32
  }
  func.func @transform_9(%arg0: i32) -> (i32, i32) {
    %c0_i32 = arith.constant 0 : i32
    %c0_i32_0 = arith.constant 0 : i32
    return %arg0, %c0_i32 : i32, i32
  }
}

module attributes {stable_mosaic.version = 11 : i64} {
  func.func @_liquid_stack_kernel(%arg0: i32, %arg1: memref<8x8x128xbf16, #tpu.memory_space<vmem>>, %arg2: memref<128x128xbf16, #tpu.memory_space<vmem>>, %arg3: memref<1x128xf32, #tpu.memory_space<vmem>>, %arg4: memref<1x128xf32, #tpu.memory_space<vmem>>, %arg5: memref<1x128xf32, #tpu.memory_space<vmem>>, %arg6: memref<1x128xf32, #tpu.memory_space<vmem>>, %arg7: memref<128x128xbf16, #tpu.memory_space<vmem>>, %arg8: memref<1x128xf32, #tpu.memory_space<vmem>>, %arg9: memref<1x128xf32, #tpu.memory_space<vmem>>, %arg10: memref<1x128xf32, #tpu.memory_space<vmem>>, %arg11: memref<1x128xf32, #tpu.memory_space<vmem>>, %arg12: memref<8x8x128xbf16, #tpu.memory_space<vmem>>) attributes {dimension_semantics = [#tpu.dimension_semantics<parallel>], iteration_bounds = array<i64: 1>, scalar_prefetch = 0 : i64, scratch_operands = 0 : i64, tpu.core_type = #tpu.core_type<tc>, window_params = [{transform_indices = @transform_0, window_bounds = array<i64: 8, 8, 128>}, {pipeline_mode = #tpu.pipeline_mode<synchronous>, transform_indices = @transform_1, window_bounds = array<i64: 128, 128>}, {pipeline_mode = #tpu.pipeline_mode<synchronous>, transform_indices = @transform_2, window_bounds = array<i64: 1, 128>}, {pipeline_mode = #tpu.pipeline_mode<synchronous>, transform_indices = @transform_3, window_bounds = array<i64: 1, 128>}, {pipeline_mode = #tpu.pipeline_mode<synchronous>, transform_indices = @transform_4, window_bounds = array<i64: 1, 128>}, {pipeline_mode = #tpu.pipeline_mode<synchronous>, transform_indices = @transform_5, window_bounds = array<i64: 1, 128>}, {pipeline_mode = #tpu.pipeline_mode<synchronous>, transform_indices = @transform_6, window_bounds = array<i64: 128, 128>}, {pipeline_mode = #tpu.pipeline_mode<synchronous>, transform_indices = @transform_7, window_bounds = array<i64: 1, 128>}, {pipeline_mode = #tpu.pipeline_mode<synchronous>, transform_indices = @transform_8, window_bounds = array<i64: 1, 128>}, {pipeline_mode = #tpu.pipeline_mode<synchronous>, transform_indices = @transform_9, window_bounds = array<i64: 1, 128>}, {pipeline_mode = #tpu.pipeline_mode<synchronous>, transform_indices = @transform_10, window_bounds = array<i64: 1, 128>}, {transform_indices = @transform_11, window_bounds = array<i64: 8, 8, 128>}]} {
    %c0 = arith.constant 0 : index
    %c0_0 = arith.constant 0 : index
    %c0_1 = arith.constant 0 : index
    %0 = vector.load %arg1[%c0, %c0_0, %c0_1] : memref<8x8x128xbf16, #tpu.memory_space<vmem>>, vector<8x8x128xbf16>
    %1 = vector.shape_cast %0 : vector<8x8x128xbf16> to vector<64x128xbf16>
    %c0_2 = arith.constant 0 : index
    %c0_3 = arith.constant 0 : index
    %2 = vector.load %arg2[%c0_2, %c0_3] : memref<128x128xbf16, #tpu.memory_space<vmem>>, vector<128x128xbf16>
    %cst = arith.constant dense<0.000000e+00> : vector<64x128xf32>
    %3 = tpu.matmul %1, %2, %cst {dimension_numbers = #tpu.dot_dimension_numbers<[1], [0], [0], [1], [0, 0, 1, 1], [], []>} : vector<64x128xbf16>, vector<128x128xbf16>, vector<64x128xf32> -> vector<64x128xf32>
    %c0_4 = arith.constant 0 : index
    %c0_5 = arith.constant 0 : index
    %4 = vector.load %arg3[%c0_4, %c0_5] : memref<1x128xf32, #tpu.memory_space<vmem>>, vector<1x128xf32>
    %5 = vector.broadcast %4 : vector<1x128xf32> to vector<64x128xf32>
    %6 = arith.addf %3, %5 : vector<64x128xf32>
    %7 = vector.shape_cast %6 : vector<64x128xf32> to vector<8x8x128xf32>
    %c0_6 = arith.constant 0 : index
    %c0_7 = arith.constant 0 : index
    %8 = vector.load %arg4[%c0_6, %c0_7] : memref<1x128xf32, #tpu.memory_space<vmem>>, vector<1x128xf32>
    %c0_8 = arith.constant 0 : index
    %c0_9 = arith.constant 0 : index
    %9 = vector.load %arg5[%c0_8, %c0_9] : memref<1x128xf32, #tpu.memory_space<vmem>>, vector<1x128xf32>
    %c0_10 = arith.constant 0 : index
    %c0_11 = arith.constant 0 : index
    %10 = vector.load %arg6[%c0_10, %c0_11] : memref<1x128xf32, #tpu.memory_space<vmem>>, vector<1x128xf32>
    %cst_12 = arith.constant 0.000000e+00 : f32
    %11 = vector.broadcast %cst_12 : f32 to vector<8x128xf32>
    %cst_13 = arith.constant 0.000000e+00 : f32
    %12 = vector.broadcast %cst_13 : f32 to vector<8x128xf32>
    %13 = vector.extract_strided_slice %7 {offsets = [0, 0, 0], sizes = [1, 8, 128], strides = [1, 1, 1]} : vector<8x8x128xf32> to vector<1x8x128xf32>
    %14 = vector.shape_cast %13 : vector<1x8x128xf32> to vector<8x128xf32>
    %15 = arith.subf %14, %11 : vector<8x128xf32>
    %16 = vector.broadcast %8 : vector<1x128xf32> to vector<8x128xf32>
    %17 = arith.mulf %15, %16 : vector<8x128xf32>
    %18 = arith.addf %11, %17 : vector<8x128xf32>
    %19 = arith.subf %11, %12 : vector<8x128xf32>
    %20 = vector.broadcast %8 : vector<1x128xf32> to vector<8x128xf32>
    %21 = arith.mulf %19, %20 : vector<8x128xf32>
    %22 = arith.addf %12, %21 : vector<8x128xf32>
    %23 = math.tanh %22 : vector<8x128xf32>
    %cst_14 = arith.constant dense<0.000000e+00> : vector<8xf32>
    %24 = vector.multi_reduction <add>, %23, %cst_14 [1] : vector<8x128xf32> to vector<8xf32>
    %25 = vector.shape_cast %24 : vector<8xf32> to vector<8x1xf32>
    %cst_15 = arith.constant 3.125000e-02 : f32
    %26 = vector.broadcast %cst_15 : f32 to vector<8x1xf32>
    %27 = arith.mulf %25, %26 : vector<8x1xf32>
    %28 = arith.mulf %23, %23 : vector<8x128xf32>
    %cst_16 = arith.constant dense<0.000000e+00> : vector<8xf32>
    %29 = vector.multi_reduction <add>, %28, %cst_16 [1] : vector<8x128xf32> to vector<8xf32>
    %30 = vector.shape_cast %29 : vector<8xf32> to vector<8x1xf32>
    %cst_17 = arith.constant 3.125000e-02 : f32
    %31 = vector.broadcast %cst_17 : f32 to vector<8x1xf32>
    %32 = arith.mulf %30, %31 : vector<8x1xf32>
    %33 = arith.mulf %27, %27 : vector<8x1xf32>
    %34 = arith.subf %32, %33 : vector<8x1xf32>
    %35 = vector.broadcast %27 : vector<8x1xf32> to vector<8x128xf32>
    %36 = arith.subf %23, %35 : vector<8x128xf32>
    %cst_18 = arith.constant 9.99999974E-6 : f32
    %37 = vector.broadcast %cst_18 : f32 to vector<8x1xf32>
    %38 = arith.addf %34, %37 : vector<8x1xf32>
    %39 = math.rsqrt %38 : vector<8x1xf32>
    %40 = vector.broadcast %39 : vector<8x1xf32> to vector<8x128xf32>
    %41 = arith.mulf %36, %40 : vector<8x128xf32>
    %42 = vector.broadcast %9 : vector<1x128xf32> to vector<8x128xf32>
    %43 = arith.mulf %41, %42 : vector<8x128xf32>
    %44 = vector.broadcast %10 : vector<1x128xf32> to vector<8x128xf32>
    %45 = arith.addf %43, %44 : vector<8x128xf32>
    %46 = vector.extract_strided_slice %7 {offsets = [1, 0, 0], sizes = [1, 8, 128], strides = [1, 1, 1]} : vector<8x8x128xf32> to vector<1x8x128xf32>
    %47 = vector.shape_cast %46 : vector<1x8x128xf32> to vector<8x128xf32>
    %48 = arith.subf %47, %18 : vector<8x128xf32>
    %49 = vector.broadcast %8 : vector<1x128xf32> to vector<8x128xf32>
    %50 = arith.mulf %48, %49 : vector<8x128xf32>
    %51 = arith.addf %18, %50 : vector<8x128xf32>
    %52 = arith.subf %18, %22 : vector<8x128xf32>
    %53 = vector.broadcast %8 : vector<1x128xf32> to vector<8x128xf32>
    %54 = arith.mulf %52, %53 : vector<8x128xf32>
    %55 = arith.addf %22, %54 : vector<8x128xf32>
    %56 = math.tanh %55 : vector<8x128xf32>
    %cst_19 = arith.constant dense<0.000000e+00> : vector<8xf32>
    %57 = vector.multi_reduction <add>, %56, %cst_19 [1] : vector<8x128xf32> to vector<8xf32>
    %58 = vector.shape_cast %57 : vector<8xf32> to vector<8x1xf32>
    %cst_20 = arith.constant 3.125000e-02 : f32
    %59 = vector.broadcast %cst_20 : f32 to vector<8x1xf32>
    %60 = arith.mulf %58, %59 : vector<8x1xf32>
    %61 = arith.mulf %56, %56 : vector<8x128xf32>
    %cst_21 = arith.constant dense<0.000000e+00> : vector<8xf32>
    %62 = vector.multi_reduction <add>, %61, %cst_21 [1] : vector<8x128xf32> to vector<8xf32>
    %63 = vector.shape_cast %62 : vector<8xf32> to vector<8x1xf32>
    %cst_22 = arith.constant 3.125000e-02 : f32
    %64 = vector.broadcast %cst_22 : f32 to vector<8x1xf32>
    %65 = arith.mulf %63, %64 : vector<8x1xf32>
    %66 = arith.mulf %60, %60 : vector<8x1xf32>
    %67 = arith.subf %65, %66 : vector<8x1xf32>
    %68 = vector.broadcast %60 : vector<8x1xf32> to vector<8x128xf32>
    %69 = arith.subf %56, %68 : vector<8x128xf32>
    %cst_23 = arith.constant 9.99999974E-6 : f32
    %70 = vector.broadcast %cst_23 : f32 to vector<8x1xf32>
    %71 = arith.addf %67, %70 : vector<8x1xf32>
    %72 = math.rsqrt %71 : vector<8x1xf32>
    %73 = vector.broadcast %72 : vector<8x1xf32> to vector<8x128xf32>
    %74 = arith.mulf %69, %73 : vector<8x128xf32>
    %75 = vector.broadcast %9 : vector<1x128xf32> to vector<8x128xf32>
    %76 = arith.mulf %74, %75 : vector<8x128xf32>
    %77 = vector.broadcast %10 : vector<1x128xf32> to vector<8x128xf32>
    %78 = arith.addf %76, %77 : vector<8x128xf32>
    %79 = vector.extract_strided_slice %7 {offsets = [2, 0, 0], sizes = [1, 8, 128], strides = [1, 1, 1]} : vector<8x8x128xf32> to vector<1x8x128xf32>
    %80 = vector.shape_cast %79 : vector<1x8x128xf32> to vector<8x128xf32>
    %81 = arith.subf %80, %51 : vector<8x128xf32>
    %82 = vector.broadcast %8 : vector<1x128xf32> to vector<8x128xf32>
    %83 = arith.mulf %81, %82 : vector<8x128xf32>
    %84 = arith.addf %51, %83 : vector<8x128xf32>
    %85 = arith.subf %51, %55 : vector<8x128xf32>
    %86 = vector.broadcast %8 : vector<1x128xf32> to vector<8x128xf32>
    %87 = arith.mulf %85, %86 : vector<8x128xf32>
    %88 = arith.addf %55, %87 : vector<8x128xf32>
    %89 = math.tanh %88 : vector<8x128xf32>
    %cst_24 = arith.constant dense<0.000000e+00> : vector<8xf32>
    %90 = vector.multi_reduction <add>, %89, %cst_24 [1] : vector<8x128xf32> to vector<8xf32>
    %91 = vector.shape_cast %90 : vector<8xf32> to vector<8x1xf32>
    %cst_25 = arith.constant 3.125000e-02 : f32
    %92 = vector.broadcast %cst_25 : f32 to vector<8x1xf32>
    %93 = arith.mulf %91, %92 : vector<8x1xf32>
    %94 = arith.mulf %89, %89 : vector<8x128xf32>
    %cst_26 = arith.constant dense<0.000000e+00> : vector<8xf32>
    %95 = vector.multi_reduction <add>, %94, %cst_26 [1] : vector<8x128xf32> to vector<8xf32>
    %96 = vector.shape_cast %95 : vector<8xf32> to vector<8x1xf32>
    %cst_27 = arith.constant 3.125000e-02 : f32
    %97 = vector.broadcast %cst_27 : f32 to vector<8x1xf32>
    %98 = arith.mulf %96, %97 : vector<8x1xf32>
    %99 = arith.mulf %93, %93 : vector<8x1xf32>
    %100 = arith.subf %98, %99 : vector<8x1xf32>
    %101 = vector.broadcast %93 : vector<8x1xf32> to vector<8x128xf32>
    %102 = arith.subf %89, %101 : vector<8x128xf32>
    %cst_28 = arith.constant 9.99999974E-6 : f32
    %103 = vector.broadcast %cst_28 : f32 to vector<8x1xf32>
    %104 = arith.addf %100, %103 : vector<8x1xf32>
    %105 = math.rsqrt %104 : vector<8x1xf32>
    %106 = vector.broadcast %105 : vector<8x1xf32> to vector<8x128xf32>
    %107 = arith.mulf %102, %106 : vector<8x128xf32>
    %108 = vector.broadcast %9 : vector<1x128xf32> to vector<8x128xf32>
    %109 = arith.mulf %107, %108 : vector<8x128xf32>
    %110 = vector.broadcast %10 : vector<1x128xf32> to vector<8x128xf32>
    %111 = arith.addf %109, %110 : vector<8x128xf32>
    %112 = vector.extract_strided_slice %7 {offsets = [3, 0, 0], sizes = [1, 8, 128], strides = [1, 1, 1]} : vector<8x8x128xf32> to vector<1x8x128xf32>
    %113 = vector.shape_cast %112 : vector<1x8x128xf32> to vector<8x128xf32>
    %114 = arith.subf %113, %84 : vector<8x128xf32>
    %115 = vector.broadcast %8 : vector<1x128xf32> to vector<8x128xf32>
    %116 = arith.mulf %114, %115 : vector<8x128xf32>
    %117 = arith.addf %84, %116 : vector<8x128xf32>
    %118 = arith.subf %84, %88 : vector<8x128xf32>
    %119 = vector.broadcast %8 : vector<1x128xf32> to vector<8x128xf32>
    %120 = arith.mulf %118, %119 : vector<8x128xf32>
    %121 = arith.addf %88, %120 : vector<8x128xf32>
    %122 = math.tanh %121 : vector<8x128xf32>
    %cst_29 = arith.constant dense<0.000000e+00> : vector<8xf32>
    %123 = vector.multi_reduction <add>, %122, %cst_29 [1] : vector<8x128xf32> to vector<8xf32>
    %124 = vector.shape_cast %123 : vector<8xf32> to vector<8x1xf32>
    %cst_30 = arith.constant 3.125000e-02 : f32
    %125 = vector.broadcast %cst_30 : f32 to vector<8x1xf32>
    %126 = arith.mulf %124, %125 : vector<8x1xf32>
    %127 = arith.mulf %122, %122 : vector<8x128xf32>
    %cst_31 = arith.constant dense<0.000000e+00> : vector<8xf32>
    %128 = vector.multi_reduction <add>, %127, %cst_31 [1] : vector<8x128xf32> to vector<8xf32>
    %129 = vector.shape_cast %128 : vector<8xf32> to vector<8x1xf32>
    %cst_32 = arith.constant 3.125000e-02 : f32
    %130 = vector.broadcast %cst_32 : f32 to vector<8x1xf32>
    %131 = arith.mulf %129, %130 : vector<8x1xf32>
    %132 = arith.mulf %126, %126 : vector<8x1xf32>
    %133 = arith.subf %131, %132 : vector<8x1xf32>
    %134 = vector.broadcast %126 : vector<8x1xf32> to vector<8x128xf32>
    %135 = arith.subf %122, %134 : vector<8x128xf32>
    %cst_33 = arith.constant 9.99999974E-6 : f32
    %136 = vector.broadcast %cst_33 : f32 to vector<8x1xf32>
    %137 = arith.addf %133, %136 : vector<8x1xf32>
    %138 = math.rsqrt %137 : vector<8x1xf32>
    %139 = vector.broadcast %138 : vector<8x1xf32> to vector<8x128xf32>
    %140 = arith.mulf %135, %139 : vector<8x128xf32>
    %141 = vector.broadcast %9 : vector<1x128xf32> to vector<8x128xf32>
    %142 = arith.mulf %140, %141 : vector<8x128xf32>
    %143 = vector.broadcast %10 : vector<1x128xf32> to vector<8x128xf32>
    %144 = arith.addf %142, %143 : vector<8x128xf32>
    %145 = vector.extract_strided_slice %7 {offsets = [4, 0, 0], sizes = [1, 8, 128], strides = [1, 1, 1]} : vector<8x8x128xf32> to vector<1x8x128xf32>
    %146 = vector.shape_cast %145 : vector<1x8x128xf32> to vector<8x128xf32>
    %147 = arith.subf %146, %117 : vector<8x128xf32>
    %148 = vector.broadcast %8 : vector<1x128xf32> to vector<8x128xf32>
    %149 = arith.mulf %147, %148 : vector<8x128xf32>
    %150 = arith.addf %117, %149 : vector<8x128xf32>
    %151 = arith.subf %117, %121 : vector<8x128xf32>
    %152 = vector.broadcast %8 : vector<1x128xf32> to vector<8x128xf32>
    %153 = arith.mulf %151, %152 : vector<8x128xf32>
    %154 = arith.addf %121, %153 : vector<8x128xf32>
    %155 = math.tanh %154 : vector<8x128xf32>
    %cst_34 = arith.constant dense<0.000000e+00> : vector<8xf32>
    %156 = vector.multi_reduction <add>, %155, %cst_34 [1] : vector<8x128xf32> to vector<8xf32>
    %157 = vector.shape_cast %156 : vector<8xf32> to vector<8x1xf32>
    %cst_35 = arith.constant 3.125000e-02 : f32
    %158 = vector.broadcast %cst_35 : f32 to vector<8x1xf32>
    %159 = arith.mulf %157, %158 : vector<8x1xf32>
    %160 = arith.mulf %155, %155 : vector<8x128xf32>
    %cst_36 = arith.constant dense<0.000000e+00> : vector<8xf32>
    %161 = vector.multi_reduction <add>, %160, %cst_36 [1] : vector<8x128xf32> to vector<8xf32>
    %162 = vector.shape_cast %161 : vector<8xf32> to vector<8x1xf32>
    %cst_37 = arith.constant 3.125000e-02 : f32
    %163 = vector.broadcast %cst_37 : f32 to vector<8x1xf32>
    %164 = arith.mulf %162, %163 : vector<8x1xf32>
    %165 = arith.mulf %159, %159 : vector<8x1xf32>
    %166 = arith.subf %164, %165 : vector<8x1xf32>
    %167 = vector.broadcast %159 : vector<8x1xf32> to vector<8x128xf32>
    %168 = arith.subf %155, %167 : vector<8x128xf32>
    %cst_38 = arith.constant 9.99999974E-6 : f32
    %169 = vector.broadcast %cst_38 : f32 to vector<8x1xf32>
    %170 = arith.addf %166, %169 : vector<8x1xf32>
    %171 = math.rsqrt %170 : vector<8x1xf32>
    %172 = vector.broadcast %171 : vector<8x1xf32> to vector<8x128xf32>
    %173 = arith.mulf %168, %172 : vector<8x128xf32>
    %174 = vector.broadcast %9 : vector<1x128xf32> to vector<8x128xf32>
    %175 = arith.mulf %173, %174 : vector<8x128xf32>
    %176 = vector.broadcast %10 : vector<1x128xf32> to vector<8x128xf32>
    %177 = arith.addf %175, %176 : vector<8x128xf32>
    %178 = vector.extract_strided_slice %7 {offsets = [5, 0, 0], sizes = [1, 8, 128], strides = [1, 1, 1]} : vector<8x8x128xf32> to vector<1x8x128xf32>
    %179 = vector.shape_cast %178 : vector<1x8x128xf32> to vector<8x128xf32>
    %180 = arith.subf %179, %150 : vector<8x128xf32>
    %181 = vector.broadcast %8 : vector<1x128xf32> to vector<8x128xf32>
    %182 = arith.mulf %180, %181 : vector<8x128xf32>
    %183 = arith.addf %150, %182 : vector<8x128xf32>
    %184 = arith.subf %150, %154 : vector<8x128xf32>
    %185 = vector.broadcast %8 : vector<1x128xf32> to vector<8x128xf32>
    %186 = arith.mulf %184, %185 : vector<8x128xf32>
    %187 = arith.addf %154, %186 : vector<8x128xf32>
    %188 = math.tanh %187 : vector<8x128xf32>
    %cst_39 = arith.constant dense<0.000000e+00> : vector<8xf32>
    %189 = vector.multi_reduction <add>, %188, %cst_39 [1] : vector<8x128xf32> to vector<8xf32>
    %190 = vector.shape_cast %189 : vector<8xf32> to vector<8x1xf32>
    %cst_40 = arith.constant 3.125000e-02 : f32
    %191 = vector.broadcast %cst_40 : f32 to vector<8x1xf32>
    %192 = arith.mulf %190, %191 : vector<8x1xf32>
    %193 = arith.mulf %188, %188 : vector<8x128xf32>
    %cst_41 = arith.constant dense<0.000000e+00> : vector<8xf32>
    %194 = vector.multi_reduction <add>, %193, %cst_41 [1] : vector<8x128xf32> to vector<8xf32>
    %195 = vector.shape_cast %194 : vector<8xf32> to vector<8x1xf32>
    %cst_42 = arith.constant 3.125000e-02 : f32
    %196 = vector.broadcast %cst_42 : f32 to vector<8x1xf32>
    %197 = arith.mulf %195, %196 : vector<8x1xf32>
    %198 = arith.mulf %192, %192 : vector<8x1xf32>
    %199 = arith.subf %197, %198 : vector<8x1xf32>
    %200 = vector.broadcast %192 : vector<8x1xf32> to vector<8x128xf32>
    %201 = arith.subf %188, %200 : vector<8x128xf32>
    %cst_43 = arith.constant 9.99999974E-6 : f32
    %202 = vector.broadcast %cst_43 : f32 to vector<8x1xf32>
    %203 = arith.addf %199, %202 : vector<8x1xf32>
    %204 = math.rsqrt %203 : vector<8x1xf32>
    %205 = vector.broadcast %204 : vector<8x1xf32> to vector<8x128xf32>
    %206 = arith.mulf %201, %205 : vector<8x128xf32>
    %207 = vector.broadcast %9 : vector<1x128xf32> to vector<8x128xf32>
    %208 = arith.mulf %206, %207 : vector<8x128xf32>
    %209 = vector.broadcast %10 : vector<1x128xf32> to vector<8x128xf32>
    %210 = arith.addf %208, %209 : vector<8x128xf32>
    %211 = vector.extract_strided_slice %7 {offsets = [6, 0, 0], sizes = [1, 8, 128], strides = [1, 1, 1]} : vector<8x8x128xf32> to vector<1x8x128xf32>
    %212 = vector.shape_cast %211 : vector<1x8x128xf32> to vector<8x128xf32>
    %213 = arith.subf %212, %183 : vector<8x128xf32>
    %214 = vector.broadcast %8 : vector<1x128xf32> to vector<8x128xf32>
    %215 = arith.mulf %213, %214 : vector<8x128xf32>
    %216 = arith.addf %183, %215 : vector<8x128xf32>
    %217 = arith.subf %183, %187 : vector<8x128xf32>
    %218 = vector.broadcast %8 : vector<1x128xf32> to vector<8x128xf32>
    %219 = arith.mulf %217, %218 : vector<8x128xf32>
    %220 = arith.addf %187, %219 : vector<8x128xf32>
    %221 = math.tanh %220 : vector<8x128xf32>
    %cst_44 = arith.constant dense<0.000000e+00> : vector<8xf32>
    %222 = vector.multi_reduction <add>, %221, %cst_44 [1] : vector<8x128xf32> to vector<8xf32>
    %223 = vector.shape_cast %222 : vector<8xf32> to vector<8x1xf32>
    %cst_45 = arith.constant 3.125000e-02 : f32
    %224 = vector.broadcast %cst_45 : f32 to vector<8x1xf32>
    %225 = arith.mulf %223, %224 : vector<8x1xf32>
    %226 = arith.mulf %221, %221 : vector<8x128xf32>
    %cst_46 = arith.constant dense<0.000000e+00> : vector<8xf32>
    %227 = vector.multi_reduction <add>, %226, %cst_46 [1] : vector<8x128xf32> to vector<8xf32>
    %228 = vector.shape_cast %227 : vector<8xf32> to vector<8x1xf32>
    %cst_47 = arith.constant 3.125000e-02 : f32
    %229 = vector.broadcast %cst_47 : f32 to vector<8x1xf32>
    %230 = arith.mulf %228, %229 : vector<8x1xf32>
    %231 = arith.mulf %225, %225 : vector<8x1xf32>
    %232 = arith.subf %230, %231 : vector<8x1xf32>
    %233 = vector.broadcast %225 : vector<8x1xf32> to vector<8x128xf32>
    %234 = arith.subf %221, %233 : vector<8x128xf32>
    %cst_48 = arith.constant 9.99999974E-6 : f32
    %235 = vector.broadcast %cst_48 : f32 to vector<8x1xf32>
    %236 = arith.addf %232, %235 : vector<8x1xf32>
    %237 = math.rsqrt %236 : vector<8x1xf32>
    %238 = vector.broadcast %237 : vector<8x1xf32> to vector<8x128xf32>
    %239 = arith.mulf %234, %238 : vector<8x128xf32>
    %240 = vector.broadcast %9 : vector<1x128xf32> to vector<8x128xf32>
    %241 = arith.mulf %239, %240 : vector<8x128xf32>
    %242 = vector.broadcast %10 : vector<1x128xf32> to vector<8x128xf32>
    %243 = arith.addf %241, %242 : vector<8x128xf32>
    %244 = arith.subf %216, %220 : vector<8x128xf32>
    %245 = vector.broadcast %8 : vector<1x128xf32> to vector<8x128xf32>
    %246 = arith.mulf %244, %245 : vector<8x128xf32>
    %247 = arith.addf %220, %246 : vector<8x128xf32>
    %248 = math.tanh %247 : vector<8x128xf32>
    %cst_49 = arith.constant dense<0.000000e+00> : vector<8xf32>
    %249 = vector.multi_reduction <add>, %248, %cst_49 [1] : vector<8x128xf32> to vector<8xf32>
    %250 = vector.shape_cast %249 : vector<8xf32> to vector<8x1xf32>
    %cst_50 = arith.constant 3.125000e-02 : f32
    %251 = vector.broadcast %cst_50 : f32 to vector<8x1xf32>
    %252 = arith.mulf %250, %251 : vector<8x1xf32>
    %253 = arith.mulf %248, %248 : vector<8x128xf32>
    %cst_51 = arith.constant dense<0.000000e+00> : vector<8xf32>
    %254 = vector.multi_reduction <add>, %253, %cst_51 [1] : vector<8x128xf32> to vector<8xf32>
    %255 = vector.shape_cast %254 : vector<8xf32> to vector<8x1xf32>
    %cst_52 = arith.constant 3.125000e-02 : f32
    %256 = vector.broadcast %cst_52 : f32 to vector<8x1xf32>
    %257 = arith.mulf %255, %256 : vector<8x1xf32>
    %258 = arith.mulf %252, %252 : vector<8x1xf32>
    %259 = arith.subf %257, %258 : vector<8x1xf32>
    %260 = vector.broadcast %252 : vector<8x1xf32> to vector<8x128xf32>
    %261 = arith.subf %248, %260 : vector<8x128xf32>
    %cst_53 = arith.constant 9.99999974E-6 : f32
    %262 = vector.broadcast %cst_53 : f32 to vector<8x1xf32>
    %263 = arith.addf %259, %262 : vector<8x1xf32>
    %264 = math.rsqrt %263 : vector<8x1xf32>
    %265 = vector.broadcast %264 : vector<8x1xf32> to vector<8x128xf32>
    %266 = arith.mulf %261, %265 : vector<8x128xf32>
    %267 = vector.broadcast %9 : vector<1x128xf32> to vector<8x128xf32>
    %268 = arith.mulf %266, %267 : vector<8x128xf32>
    %269 = vector.broadcast %10 : vector<1x128xf32> to vector<8x128xf32>
    %270 = arith.addf %268, %269 : vector<8x128xf32>
    %271 = vector.shape_cast %45 : vector<8x128xf32> to vector<1x8x128xf32>
    %272 = vector.shape_cast %78 : vector<8x128xf32> to vector<1x8x128xf32>
    %273 = vector.shape_cast %111 : vector<8x128xf32> to vector<1x8x128xf32>
    %274 = vector.shape_cast %144 : vector<8x128xf32> to vector<1x8x128xf32>
    %275 = vector.shape_cast %177 : vector<8x128xf32> to vector<1x8x128xf32>
    %276 = vector.shape_cast %210 : vector<8x128xf32> to vector<1x8x128xf32>
    %277 = vector.shape_cast %243 : vector<8x128xf32> to vector<1x8x128xf32>
    %278 = vector.shape_cast %270 : vector<8x128xf32> to vector<1x8x128xf32>
    %279 = tpu.concatenate %271, %272, %273, %274, %275, %276, %277, %278 in 0 : vector<1x8x128xf32>, vector<1x8x128xf32>, vector<1x8x128xf32>, vector<1x8x128xf32>, vector<1x8x128xf32>, vector<1x8x128xf32>, vector<1x8x128xf32>, vector<1x8x128xf32> -> vector<8x8x128xf32>
    %280 = arith.truncf %279 : vector<8x8x128xf32> to vector<8x8x128xbf16>
    %281 = vector.shape_cast %280 : vector<8x8x128xbf16> to vector<64x128xbf16>
    %c0_54 = arith.constant 0 : index
    %c0_55 = arith.constant 0 : index
    %282 = vector.load %arg7[%c0_54, %c0_55] : memref<128x128xbf16, #tpu.memory_space<vmem>>, vector<128x128xbf16>
    %cst_56 = arith.constant dense<0.000000e+00> : vector<64x128xf32>
    %283 = tpu.matmul %281, %282, %cst_56 {dimension_numbers = #tpu.dot_dimension_numbers<[1], [0], [0], [1], [0, 0, 1, 1], [], []>} : vector<64x128xbf16>, vector<128x128xbf16>, vector<64x128xf32> -> vector<64x128xf32>
    %c0_57 = arith.constant 0 : index
    %c0_58 = arith.constant 0 : index
    %284 = vector.load %arg8[%c0_57, %c0_58] : memref<1x128xf32, #tpu.memory_space<vmem>>, vector<1x128xf32>
    %285 = vector.broadcast %284 : vector<1x128xf32> to vector<64x128xf32>
    %286 = arith.addf %283, %285 : vector<64x128xf32>
    %287 = vector.shape_cast %286 : vector<64x128xf32> to vector<8x8x128xf32>
    %c0_59 = arith.constant 0 : index
    %c0_60 = arith.constant 0 : index
    %288 = vector.load %arg9[%c0_59, %c0_60] : memref<1x128xf32, #tpu.memory_space<vmem>>, vector<1x128xf32>
    %c0_61 = arith.constant 0 : index
    %c0_62 = arith.constant 0 : index
    %289 = vector.load %arg10[%c0_61, %c0_62] : memref<1x128xf32, #tpu.memory_space<vmem>>, vector<1x128xf32>
    %c0_63 = arith.constant 0 : index
    %c0_64 = arith.constant 0 : index
    %290 = vector.load %arg11[%c0_63, %c0_64] : memref<1x128xf32, #tpu.memory_space<vmem>>, vector<1x128xf32>
    %cst_65 = arith.constant 0.000000e+00 : f32
    %291 = vector.broadcast %cst_65 : f32 to vector<8x128xf32>
    %cst_66 = arith.constant 0.000000e+00 : f32
    %292 = vector.broadcast %cst_66 : f32 to vector<8x128xf32>
    %293 = vector.extract_strided_slice %287 {offsets = [0, 0, 0], sizes = [1, 8, 128], strides = [1, 1, 1]} : vector<8x8x128xf32> to vector<1x8x128xf32>
    %294 = vector.shape_cast %293 : vector<1x8x128xf32> to vector<8x128xf32>
    %295 = arith.subf %294, %291 : vector<8x128xf32>
    %296 = vector.broadcast %288 : vector<1x128xf32> to vector<8x128xf32>
    %297 = arith.mulf %295, %296 : vector<8x128xf32>
    %298 = arith.addf %291, %297 : vector<8x128xf32>
    %299 = arith.subf %291, %292 : vector<8x128xf32>
    %300 = vector.broadcast %288 : vector<1x128xf32> to vector<8x128xf32>
    %301 = arith.mulf %299, %300 : vector<8x128xf32>
    %302 = arith.addf %292, %301 : vector<8x128xf32>
    %303 = math.tanh %302 : vector<8x128xf32>
    %cst_67 = arith.constant dense<0.000000e+00> : vector<8xf32>
    %304 = vector.multi_reduction <add>, %303, %cst_67 [1] : vector<8x128xf32> to vector<8xf32>
    %305 = vector.shape_cast %304 : vector<8xf32> to vector<8x1xf32>
    %cst_68 = arith.constant 3.125000e-02 : f32
    %306 = vector.broadcast %cst_68 : f32 to vector<8x1xf32>
    %307 = arith.mulf %305, %306 : vector<8x1xf32>
    %308 = arith.mulf %303, %303 : vector<8x128xf32>
    %cst_69 = arith.constant dense<0.000000e+00> : vector<8xf32>
    %309 = vector.multi_reduction <add>, %308, %cst_69 [1] : vector<8x128xf32> to vector<8xf32>
    %310 = vector.shape_cast %309 : vector<8xf32> to vector<8x1xf32>
    %cst_70 = arith.constant 3.125000e-02 : f32
    %311 = vector.broadcast %cst_70 : f32 to vector<8x1xf32>
    %312 = arith.mulf %310, %311 : vector<8x1xf32>
    %313 = arith.mulf %307, %307 : vector<8x1xf32>
    %314 = arith.subf %312, %313 : vector<8x1xf32>
    %315 = vector.broadcast %307 : vector<8x1xf32> to vector<8x128xf32>
    %316 = arith.subf %303, %315 : vector<8x128xf32>
    %cst_71 = arith.constant 9.99999974E-6 : f32
    %317 = vector.broadcast %cst_71 : f32 to vector<8x1xf32>
    %318 = arith.addf %314, %317 : vector<8x1xf32>
    %319 = math.rsqrt %318 : vector<8x1xf32>
    %320 = vector.broadcast %319 : vector<8x1xf32> to vector<8x128xf32>
    %321 = arith.mulf %316, %320 : vector<8x128xf32>
    %322 = vector.broadcast %289 : vector<1x128xf32> to vector<8x128xf32>
    %323 = arith.mulf %321, %322 : vector<8x128xf32>
    %324 = vector.broadcast %290 : vector<1x128xf32> to vector<8x128xf32>
    %325 = arith.addf %323, %324 : vector<8x128xf32>
    %326 = vector.extract_strided_slice %287 {offsets = [1, 0, 0], sizes = [1, 8, 128], strides = [1, 1, 1]} : vector<8x8x128xf32> to vector<1x8x128xf32>
    %327 = vector.shape_cast %326 : vector<1x8x128xf32> to vector<8x128xf32>
    %328 = arith.subf %327, %298 : vector<8x128xf32>
    %329 = vector.broadcast %288 : vector<1x128xf32> to vector<8x128xf32>
    %330 = arith.mulf %328, %329 : vector<8x128xf32>
    %331 = arith.addf %298, %330 : vector<8x128xf32>
    %332 = arith.subf %298, %302 : vector<8x128xf32>
    %333 = vector.broadcast %288 : vector<1x128xf32> to vector<8x128xf32>
    %334 = arith.mulf %332, %333 : vector<8x128xf32>
    %335 = arith.addf %302, %334 : vector<8x128xf32>
    %336 = math.tanh %335 : vector<8x128xf32>
    %cst_72 = arith.constant dense<0.000000e+00> : vector<8xf32>
    %337 = vector.multi_reduction <add>, %336, %cst_72 [1] : vector<8x128xf32> to vector<8xf32>
    %338 = vector.shape_cast %337 : vector<8xf32> to vector<8x1xf32>
    %cst_73 = arith.constant 3.125000e-02 : f32
    %339 = vector.broadcast %cst_73 : f32 to vector<8x1xf32>
    %340 = arith.mulf %338, %339 : vector<8x1xf32>
    %341 = arith.mulf %336, %336 : vector<8x128xf32>
    %cst_74 = arith.constant dense<0.000000e+00> : vector<8xf32>
    %342 = vector.multi_reduction <add>, %341, %cst_74 [1] : vector<8x128xf32> to vector<8xf32>
    %343 = vector.shape_cast %342 : vector<8xf32> to vector<8x1xf32>
    %cst_75 = arith.constant 3.125000e-02 : f32
    %344 = vector.broadcast %cst_75 : f32 to vector<8x1xf32>
    %345 = arith.mulf %343, %344 : vector<8x1xf32>
    %346 = arith.mulf %340, %340 : vector<8x1xf32>
    %347 = arith.subf %345, %346 : vector<8x1xf32>
    %348 = vector.broadcast %340 : vector<8x1xf32> to vector<8x128xf32>
    %349 = arith.subf %336, %348 : vector<8x128xf32>
    %cst_76 = arith.constant 9.99999974E-6 : f32
    %350 = vector.broadcast %cst_76 : f32 to vector<8x1xf32>
    %351 = arith.addf %347, %350 : vector<8x1xf32>
    %352 = math.rsqrt %351 : vector<8x1xf32>
    %353 = vector.broadcast %352 : vector<8x1xf32> to vector<8x128xf32>
    %354 = arith.mulf %349, %353 : vector<8x128xf32>
    %355 = vector.broadcast %289 : vector<1x128xf32> to vector<8x128xf32>
    %356 = arith.mulf %354, %355 : vector<8x128xf32>
    %357 = vector.broadcast %290 : vector<1x128xf32> to vector<8x128xf32>
    %358 = arith.addf %356, %357 : vector<8x128xf32>
    %359 = vector.extract_strided_slice %287 {offsets = [2, 0, 0], sizes = [1, 8, 128], strides = [1, 1, 1]} : vector<8x8x128xf32> to vector<1x8x128xf32>
    %360 = vector.shape_cast %359 : vector<1x8x128xf32> to vector<8x128xf32>
    %361 = arith.subf %360, %331 : vector<8x128xf32>
    %362 = vector.broadcast %288 : vector<1x128xf32> to vector<8x128xf32>
    %363 = arith.mulf %361, %362 : vector<8x128xf32>
    %364 = arith.addf %331, %363 : vector<8x128xf32>
    %365 = arith.subf %331, %335 : vector<8x128xf32>
    %366 = vector.broadcast %288 : vector<1x128xf32> to vector<8x128xf32>
    %367 = arith.mulf %365, %366 : vector<8x128xf32>
    %368 = arith.addf %335, %367 : vector<8x128xf32>
    %369 = math.tanh %368 : vector<8x128xf32>
    %cst_77 = arith.constant dense<0.000000e+00> : vector<8xf32>
    %370 = vector.multi_reduction <add>, %369, %cst_77 [1] : vector<8x128xf32> to vector<8xf32>
    %371 = vector.shape_cast %370 : vector<8xf32> to vector<8x1xf32>
    %cst_78 = arith.constant 3.125000e-02 : f32
    %372 = vector.broadcast %cst_78 : f32 to vector<8x1xf32>
    %373 = arith.mulf %371, %372 : vector<8x1xf32>
    %374 = arith.mulf %369, %369 : vector<8x128xf32>
    %cst_79 = arith.constant dense<0.000000e+00> : vector<8xf32>
    %375 = vector.multi_reduction <add>, %374, %cst_79 [1] : vector<8x128xf32> to vector<8xf32>
    %376 = vector.shape_cast %375 : vector<8xf32> to vector<8x1xf32>
    %cst_80 = arith.constant 3.125000e-02 : f32
    %377 = vector.broadcast %cst_80 : f32 to vector<8x1xf32>
    %378 = arith.mulf %376, %377 : vector<8x1xf32>
    %379 = arith.mulf %373, %373 : vector<8x1xf32>
    %380 = arith.subf %378, %379 : vector<8x1xf32>
    %381 = vector.broadcast %373 : vector<8x1xf32> to vector<8x128xf32>
    %382 = arith.subf %369, %381 : vector<8x128xf32>
    %cst_81 = arith.constant 9.99999974E-6 : f32
    %383 = vector.broadcast %cst_81 : f32 to vector<8x1xf32>
    %384 = arith.addf %380, %383 : vector<8x1xf32>
    %385 = math.rsqrt %384 : vector<8x1xf32>
    %386 = vector.broadcast %385 : vector<8x1xf32> to vector<8x128xf32>
    %387 = arith.mulf %382, %386 : vector<8x128xf32>
    %388 = vector.broadcast %289 : vector<1x128xf32> to vector<8x128xf32>
    %389 = arith.mulf %387, %388 : vector<8x128xf32>
    %390 = vector.broadcast %290 : vector<1x128xf32> to vector<8x128xf32>
    %391 = arith.addf %389, %390 : vector<8x128xf32>
    %392 = vector.extract_strided_slice %287 {offsets = [3, 0, 0], sizes = [1, 8, 128], strides = [1, 1, 1]} : vector<8x8x128xf32> to vector<1x8x128xf32>
    %393 = vector.shape_cast %392 : vector<1x8x128xf32> to vector<8x128xf32>
    %394 = arith.subf %393, %364 : vector<8x128xf32>
    %395 = vector.broadcast %288 : vector<1x128xf32> to vector<8x128xf32>
    %396 = arith.mulf %394, %395 : vector<8x128xf32>
    %397 = arith.addf %364, %396 : vector<8x128xf32>
    %398 = arith.subf %364, %368 : vector<8x128xf32>
    %399 = vector.broadcast %288 : vector<1x128xf32> to vector<8x128xf32>
    %400 = arith.mulf %398, %399 : vector<8x128xf32>
    %401 = arith.addf %368, %400 : vector<8x128xf32>
    %402 = math.tanh %401 : vector<8x128xf32>
    %cst_82 = arith.constant dense<0.000000e+00> : vector<8xf32>
    %403 = vector.multi_reduction <add>, %402, %cst_82 [1] : vector<8x128xf32> to vector<8xf32>
    %404 = vector.shape_cast %403 : vector<8xf32> to vector<8x1xf32>
    %cst_83 = arith.constant 3.125000e-02 : f32
    %405 = vector.broadcast %cst_83 : f32 to vector<8x1xf32>
    %406 = arith.mulf %404, %405 : vector<8x1xf32>
    %407 = arith.mulf %402, %402 : vector<8x128xf32>
    %cst_84 = arith.constant dense<0.000000e+00> : vector<8xf32>
    %408 = vector.multi_reduction <add>, %407, %cst_84 [1] : vector<8x128xf32> to vector<8xf32>
    %409 = vector.shape_cast %408 : vector<8xf32> to vector<8x1xf32>
    %cst_85 = arith.constant 3.125000e-02 : f32
    %410 = vector.broadcast %cst_85 : f32 to vector<8x1xf32>
    %411 = arith.mulf %409, %410 : vector<8x1xf32>
    %412 = arith.mulf %406, %406 : vector<8x1xf32>
    %413 = arith.subf %411, %412 : vector<8x1xf32>
    %414 = vector.broadcast %406 : vector<8x1xf32> to vector<8x128xf32>
    %415 = arith.subf %402, %414 : vector<8x128xf32>
    %cst_86 = arith.constant 9.99999974E-6 : f32
    %416 = vector.broadcast %cst_86 : f32 to vector<8x1xf32>
    %417 = arith.addf %413, %416 : vector<8x1xf32>
    %418 = math.rsqrt %417 : vector<8x1xf32>
    %419 = vector.broadcast %418 : vector<8x1xf32> to vector<8x128xf32>
    %420 = arith.mulf %415, %419 : vector<8x128xf32>
    %421 = vector.broadcast %289 : vector<1x128xf32> to vector<8x128xf32>
    %422 = arith.mulf %420, %421 : vector<8x128xf32>
    %423 = vector.broadcast %290 : vector<1x128xf32> to vector<8x128xf32>
    %424 = arith.addf %422, %423 : vector<8x128xf32>
    %425 = vector.extract_strided_slice %287 {offsets = [4, 0, 0], sizes = [1, 8, 128], strides = [1, 1, 1]} : vector<8x8x128xf32> to vector<1x8x128xf32>
    %426 = vector.shape_cast %425 : vector<1x8x128xf32> to vector<8x128xf32>
    %427 = arith.subf %426, %397 : vector<8x128xf32>
    %428 = vector.broadcast %288 : vector<1x128xf32> to vector<8x128xf32>
    %429 = arith.mulf %427, %428 : vector<8x128xf32>
    %430 = arith.addf %397, %429 : vector<8x128xf32>
    %431 = arith.subf %397, %401 : vector<8x128xf32>
    %432 = vector.broadcast %288 : vector<1x128xf32> to vector<8x128xf32>
    %433 = arith.mulf %431, %432 : vector<8x128xf32>
    %434 = arith.addf %401, %433 : vector<8x128xf32>
    %435 = math.tanh %434 : vector<8x128xf32>
    %cst_87 = arith.constant dense<0.000000e+00> : vector<8xf32>
    %436 = vector.multi_reduction <add>, %435, %cst_87 [1] : vector<8x128xf32> to vector<8xf32>
    %437 = vector.shape_cast %436 : vector<8xf32> to vector<8x1xf32>
    %cst_88 = arith.constant 3.125000e-02 : f32
    %438 = vector.broadcast %cst_88 : f32 to vector<8x1xf32>
    %439 = arith.mulf %437, %438 : vector<8x1xf32>
    %440 = arith.mulf %435, %435 : vector<8x128xf32>
    %cst_89 = arith.constant dense<0.000000e+00> : vector<8xf32>
    %441 = vector.multi_reduction <add>, %440, %cst_89 [1] : vector<8x128xf32> to vector<8xf32>
    %442 = vector.shape_cast %441 : vector<8xf32> to vector<8x1xf32>
    %cst_90 = arith.constant 3.125000e-02 : f32
    %443 = vector.broadcast %cst_90 : f32 to vector<8x1xf32>
    %444 = arith.mulf %442, %443 : vector<8x1xf32>
    %445 = arith.mulf %439, %439 : vector<8x1xf32>
    %446 = arith.subf %444, %445 : vector<8x1xf32>
    %447 = vector.broadcast %439 : vector<8x1xf32> to vector<8x128xf32>
    %448 = arith.subf %435, %447 : vector<8x128xf32>
    %cst_91 = arith.constant 9.99999974E-6 : f32
    %449 = vector.broadcast %cst_91 : f32 to vector<8x1xf32>
    %450 = arith.addf %446, %449 : vector<8x1xf32>
    %451 = math.rsqrt %450 : vector<8x1xf32>
    %452 = vector.broadcast %451 : vector<8x1xf32> to vector<8x128xf32>
    %453 = arith.mulf %448, %452 : vector<8x128xf32>
    %454 = vector.broadcast %289 : vector<1x128xf32> to vector<8x128xf32>
    %455 = arith.mulf %453, %454 : vector<8x128xf32>
    %456 = vector.broadcast %290 : vector<1x128xf32> to vector<8x128xf32>
    %457 = arith.addf %455, %456 : vector<8x128xf32>
    %458 = vector.extract_strided_slice %287 {offsets = [5, 0, 0], sizes = [1, 8, 128], strides = [1, 1, 1]} : vector<8x8x128xf32> to vector<1x8x128xf32>
    %459 = vector.shape_cast %458 : vector<1x8x128xf32> to vector<8x128xf32>
    %460 = arith.subf %459, %430 : vector<8x128xf32>
    %461 = vector.broadcast %288 : vector<1x128xf32> to vector<8x128xf32>
    %462 = arith.mulf %460, %461 : vector<8x128xf32>
    %463 = arith.addf %430, %462 : vector<8x128xf32>
    %464 = arith.subf %430, %434 : vector<8x128xf32>
    %465 = vector.broadcast %288 : vector<1x128xf32> to vector<8x128xf32>
    %466 = arith.mulf %464, %465 : vector<8x128xf32>
    %467 = arith.addf %434, %466 : vector<8x128xf32>
    %468 = math.tanh %467 : vector<8x128xf32>
    %cst_92 = arith.constant dense<0.000000e+00> : vector<8xf32>
    %469 = vector.multi_reduction <add>, %468, %cst_92 [1] : vector<8x128xf32> to vector<8xf32>
    %470 = vector.shape_cast %469 : vector<8xf32> to vector<8x1xf32>
    %cst_93 = arith.constant 3.125000e-02 : f32
    %471 = vector.broadcast %cst_93 : f32 to vector<8x1xf32>
    %472 = arith.mulf %470, %471 : vector<8x1xf32>
    %473 = arith.mulf %468, %468 : vector<8x128xf32>
    %cst_94 = arith.constant dense<0.000000e+00> : vector<8xf32>
    %474 = vector.multi_reduction <add>, %473, %cst_94 [1] : vector<8x128xf32> to vector<8xf32>
    %475 = vector.shape_cast %474 : vector<8xf32> to vector<8x1xf32>
    %cst_95 = arith.constant 3.125000e-02 : f32
    %476 = vector.broadcast %cst_95 : f32 to vector<8x1xf32>
    %477 = arith.mulf %475, %476 : vector<8x1xf32>
    %478 = arith.mulf %472, %472 : vector<8x1xf32>
    %479 = arith.subf %477, %478 : vector<8x1xf32>
    %480 = vector.broadcast %472 : vector<8x1xf32> to vector<8x128xf32>
    %481 = arith.subf %468, %480 : vector<8x128xf32>
    %cst_96 = arith.constant 9.99999974E-6 : f32
    %482 = vector.broadcast %cst_96 : f32 to vector<8x1xf32>
    %483 = arith.addf %479, %482 : vector<8x1xf32>
    %484 = math.rsqrt %483 : vector<8x1xf32>
    %485 = vector.broadcast %484 : vector<8x1xf32> to vector<8x128xf32>
    %486 = arith.mulf %481, %485 : vector<8x128xf32>
    %487 = vector.broadcast %289 : vector<1x128xf32> to vector<8x128xf32>
    %488 = arith.mulf %486, %487 : vector<8x128xf32>
    %489 = vector.broadcast %290 : vector<1x128xf32> to vector<8x128xf32>
    %490 = arith.addf %488, %489 : vector<8x128xf32>
    %491 = vector.extract_strided_slice %287 {offsets = [6, 0, 0], sizes = [1, 8, 128], strides = [1, 1, 1]} : vector<8x8x128xf32> to vector<1x8x128xf32>
    %492 = vector.shape_cast %491 : vector<1x8x128xf32> to vector<8x128xf32>
    %493 = arith.subf %492, %463 : vector<8x128xf32>
    %494 = vector.broadcast %288 : vector<1x128xf32> to vector<8x128xf32>
    %495 = arith.mulf %493, %494 : vector<8x128xf32>
    %496 = arith.addf %463, %495 : vector<8x128xf32>
    %497 = arith.subf %463, %467 : vector<8x128xf32>
    %498 = vector.broadcast %288 : vector<1x128xf32> to vector<8x128xf32>
    %499 = arith.mulf %497, %498 : vector<8x128xf32>
    %500 = arith.addf %467, %499 : vector<8x128xf32>
    %501 = math.tanh %500 : vector<8x128xf32>
    %cst_97 = arith.constant dense<0.000000e+00> : vector<8xf32>
    %502 = vector.multi_reduction <add>, %501, %cst_97 [1] : vector<8x128xf32> to vector<8xf32>
    %503 = vector.shape_cast %502 : vector<8xf32> to vector<8x1xf32>
    %cst_98 = arith.constant 3.125000e-02 : f32
    %504 = vector.broadcast %cst_98 : f32 to vector<8x1xf32>
    %505 = arith.mulf %503, %504 : vector<8x1xf32>
    %506 = arith.mulf %501, %501 : vector<8x128xf32>
    %cst_99 = arith.constant dense<0.000000e+00> : vector<8xf32>
    %507 = vector.multi_reduction <add>, %506, %cst_99 [1] : vector<8x128xf32> to vector<8xf32>
    %508 = vector.shape_cast %507 : vector<8xf32> to vector<8x1xf32>
    %cst_100 = arith.constant 3.125000e-02 : f32
    %509 = vector.broadcast %cst_100 : f32 to vector<8x1xf32>
    %510 = arith.mulf %508, %509 : vector<8x1xf32>
    %511 = arith.mulf %505, %505 : vector<8x1xf32>
    %512 = arith.subf %510, %511 : vector<8x1xf32>
    %513 = vector.broadcast %505 : vector<8x1xf32> to vector<8x128xf32>
    %514 = arith.subf %501, %513 : vector<8x128xf32>
    %cst_101 = arith.constant 9.99999974E-6 : f32
    %515 = vector.broadcast %cst_101 : f32 to vector<8x1xf32>
    %516 = arith.addf %512, %515 : vector<8x1xf32>
    %517 = math.rsqrt %516 : vector<8x1xf32>
    %518 = vector.broadcast %517 : vector<8x1xf32> to vector<8x128xf32>
    %519 = arith.mulf %514, %518 : vector<8x128xf32>
    %520 = vector.broadcast %289 : vector<1x128xf32> to vector<8x128xf32>
    %521 = arith.mulf %519, %520 : vector<8x128xf32>
    %522 = vector.broadcast %290 : vector<1x128xf32> to vector<8x128xf32>
    %523 = arith.addf %521, %522 : vector<8x128xf32>
    %524 = arith.subf %496, %500 : vector<8x128xf32>
    %525 = vector.broadcast %288 : vector<1x128xf32> to vector<8x128xf32>
    %526 = arith.mulf %524, %525 : vector<8x128xf32>
    %527 = arith.addf %500, %526 : vector<8x128xf32>
    %528 = math.tanh %527 : vector<8x128xf32>
    %cst_102 = arith.constant dense<0.000000e+00> : vector<8xf32>
    %529 = vector.multi_reduction <add>, %528, %cst_102 [1] : vector<8x128xf32> to vector<8xf32>
    %530 = vector.shape_cast %529 : vector<8xf32> to vector<8x1xf32>
    %cst_103 = arith.constant 3.125000e-02 : f32
    %531 = vector.broadcast %cst_103 : f32 to vector<8x1xf32>
    %532 = arith.mulf %530, %531 : vector<8x1xf32>
    %533 = arith.mulf %528, %528 : vector<8x128xf32>
    %cst_104 = arith.constant dense<0.000000e+00> : vector<8xf32>
    %534 = vector.multi_reduction <add>, %533, %cst_104 [1] : vector<8x128xf32> to vector<8xf32>
    %535 = vector.shape_cast %534 : vector<8xf32> to vector<8x1xf32>
    %cst_105 = arith.constant 3.125000e-02 : f32
    %536 = vector.broadcast %cst_105 : f32 to vector<8x1xf32>
    %537 = arith.mulf %535, %536 : vector<8x1xf32>
    %538 = arith.mulf %532, %532 : vector<8x1xf32>
    %539 = arith.subf %537, %538 : vector<8x1xf32>
    %540 = vector.broadcast %532 : vector<8x1xf32> to vector<8x128xf32>
    %541 = arith.subf %528, %540 : vector<8x128xf32>
    %cst_106 = arith.constant 9.99999974E-6 : f32
    %542 = vector.broadcast %cst_106 : f32 to vector<8x1xf32>
    %543 = arith.addf %539, %542 : vector<8x1xf32>
    %544 = math.rsqrt %543 : vector<8x1xf32>
    %545 = vector.broadcast %544 : vector<8x1xf32> to vector<8x128xf32>
    %546 = arith.mulf %541, %545 : vector<8x128xf32>
    %547 = vector.broadcast %289 : vector<1x128xf32> to vector<8x128xf32>
    %548 = arith.mulf %546, %547 : vector<8x128xf32>
    %549 = vector.broadcast %290 : vector<1x128xf32> to vector<8x128xf32>
    %550 = arith.addf %548, %549 : vector<8x128xf32>
    %551 = vector.shape_cast %325 : vector<8x128xf32> to vector<1x8x128xf32>
    %552 = vector.shape_cast %358 : vector<8x128xf32> to vector<1x8x128xf32>
    %553 = vector.shape_cast %391 : vector<8x128xf32> to vector<1x8x128xf32>
    %554 = vector.shape_cast %424 : vector<8x128xf32> to vector<1x8x128xf32>
    %555 = vector.shape_cast %457 : vector<8x128xf32> to vector<1x8x128xf32>
    %556 = vector.shape_cast %490 : vector<8x128xf32> to vector<1x8x128xf32>
    %557 = vector.shape_cast %523 : vector<8x128xf32> to vector<1x8x128xf32>
    %558 = vector.shape_cast %550 : vector<8x128xf32> to vector<1x8x128xf32>
    %559 = tpu.concatenate %551, %552, %553, %554, %555, %556, %557, %558 in 0 : vector<1x8x128xf32>, vector<1x8x128xf32>, vector<1x8x128xf32>, vector<1x8x128xf32>, vector<1x8x128xf32>, vector<1x8x128xf32>, vector<1x8x128xf32>, vector<1x8x128xf32> -> vector<8x8x128xf32>
    %560 = arith.truncf %559 : vector<8x8x128xf32> to vector<8x8x128xbf16>
    %c0_107 = arith.constant 0 : index
    %c0_108 = arith.constant 0 : index
    %c0_109 = arith.constant 0 : index
    %561 = vector.load %arg12[%c0_107, %c0_108, %c0_109] : memref<8x8x128xbf16, #tpu.memory_space<vmem>>, vector<8x8x128xbf16>
    tpu.vector_store %arg12[%c0_107, %c0_108, %c0_109], %560 {strides = array<i32>} : memref<8x8x128xbf16, #tpu.memory_space<vmem>>, vector<8x8x128xbf16>,
    return
  }
  func.func @transform_0(%arg0: i32) -> (i32, i32, i32) {
    %c0_i32 = arith.constant 0 : i32
    %c0_i32_0 = arith.constant 0 : i32
    %c0_i32_1 = arith.constant 0 : i32
    return %c0_i32, %arg0, %c0_i32_0 : i32, i32, i32
  }
  func.func @transform_1(%arg0: i32) -> (i32, i32) {
    %c0_i32 = arith.constant 0 : i32
    %c0_i32_0 = arith.constant 0 : i32
    %c0_i32_1 = arith.constant 0 : i32
    return %c0_i32, %c0_i32_0 : i32, i32
  }
  func.func @transform_2(%arg0: i32) -> (i32, i32) {
    %c0_i32 = arith.constant 0 : i32
    %c0_i32_0 = arith.constant 0 : i32
    %c0_i32_1 = arith.constant 0 : i32
    return %c0_i32, %c0_i32_0 : i32, i32
  }
  func.func @transform_3(%arg0: i32) -> (i32, i32) {
    %c0_i32 = arith.constant 0 : i32
    %c0_i32_0 = arith.constant 0 : i32
    %c0_i32_1 = arith.constant 0 : i32
    return %c0_i32, %c0_i32_0 : i32, i32
  }
  func.func @transform_4(%arg0: i32) -> (i32, i32) {
    %c0_i32 = arith.constant 0 : i32
    %c0_i32_0 = arith.constant 0 : i32
    %c0_i32_1 = arith.constant 0 : i32
    return %c0_i32, %c0_i32_0 : i32, i32
  }
  func.func @transform_5(%arg0: i32) -> (i32, i32) {
    %c0_i32 = arith.constant 0 : i32
    %c0_i32_0 = arith.constant 0 : i32
    %c0_i32_1 = arith.constant 0 : i32
    return %c0_i32, %c0_i32_0 : i32, i32
  }
  func.func @transform_6(%arg0: i32) -> (i32, i32) {
    %c0_i32 = arith.constant 0 : i32
    %c0_i32_0 = arith.constant 0 : i32
    %c0_i32_1 = arith.constant 0 : i32
    return %c0_i32, %c0_i32_0 : i32, i32
  }
  func.func @transform_7(%arg0: i32) -> (i32, i32) {
    %c0_i32 = arith.constant 0 : i32
    %c0_i32_0 = arith.constant 0 : i32
    %c0_i32_1 = arith.constant 0 : i32
    return %c0_i32, %c0_i32_0 : i32, i32
  }
  func.func @transform_8(%arg0: i32) -> (i32, i32) {
    %c0_i32 = arith.constant 0 : i32
    %c0_i32_0 = arith.constant 0 : i32
    %c0_i32_1 = arith.constant 0 : i32
    return %c0_i32, %c0_i32_0 : i32, i32
  }
  func.func @transform_9(%arg0: i32) -> (i32, i32) {
    %c0_i32 = arith.constant 0 : i32
    %c0_i32_0 = arith.constant 0 : i32
    %c0_i32_1 = arith.constant 0 : i32
    return %c0_i32, %c0_i32_0 : i32, i32
  }
  func.func @transform_10(%arg0: i32) -> (i32, i32) {
    %c0_i32 = arith.constant 0 : i32
    %c0_i32_0 = arith.constant 0 : i32
    %c0_i32_1 = arith.constant 0 : i32
    return %c0_i32, %c0_i32_0 : i32, i32
  }
  func.func @transform_11(%arg0: i32) -> (i32, i32, i32) {
    %c0_i32 = arith.constant 0 : i32
    %c0_i32_0 = arith.constant 0 : i32
    %c0_i32_1 = arith.constant 0 : i32
    return %c0_i32, %arg0, %c0_i32_0 : i32, i32, i32
  }
}

</mosaic_0001>

<llo_original>
// kernel: liquid_nn_forward.5
$region0: #{liquid_nn_forward.5}
  #allocation0 [shape = 'u32[]', space=smem, size = 0x4, offset = 0x4, fixed_abs, tag = 'smem constant byte address 0x4 - core index']
  #allocation1 [shape = 'u32[72,128]{1,0:T(1,128)}', space=vmem, size = 0x9000, scoped, tag = 'internal scratch']
  #allocation2 [shape = 'f32[64,128]{1,0:T(8,128)}', space=vmem, size = 0x8000, scoped, tag = 'scratch operand']
  %s0 = inlined_call_operand.vmem [shape: bf16[64,128], index: 0, kind: input, shape index: {}]
  %s1 = inlined_call_operand.vmem [shape: bf16[128,128], index: 1, kind: input, shape index: {}]
  %s2 = inlined_call_operand.vmem [shape: f32[1,128], index: 2, kind: input, shape index: {}]
  %s3 = inlined_call_operand.vmem [shape: f32[64,128], index: 3, kind: output, shape index: {}]
  %s4 = sld [smem:[#allocation0]]
  $region30: #{liquid_nn_forward.5} parent=0
    _
  %s6 = ssub.s32 1, %s4
  %s7 = scalar_select 0, %s6, %s4
  // Predicated region
  $region2: #{liquid_nn_forward.5} parent=0 // pred_check
    _
  $region3: #{liquid_nn_forward.5} parent=0 // pred_check_branch
    %9 = sbr.rel (0) target = $region5
  $region4: #{liquid_nn_forward.5} parent=0 // pred_region
    _
  $region5: #{liquid_nn_forward.5} parent=0 // pred_fallthru
    _
  // Predicated region
  $region6: #{liquid_nn_forward.5} parent=0 // pred_check
    _
  $region7: #{liquid_nn_forward.5} parent=0 // pred_check_branch
    %11 = sbr.rel (0) target = $region9
  $region8: #{liquid_nn_forward.5} parent=0 // pred_region
    _
  $region9: #{liquid_nn_forward.5} parent=0 // pred_fallthru
    _
  // Predicated region
  $region10: #{liquid_nn_forward.5} parent=0 // pred_check
    _
  $region11: #{liquid_nn_forward.5} parent=0 // pred_check_branch
    %13 = sbr.rel (0) target = $region13
  $region12: #{liquid_nn_forward.5} parent=0 // pred_region
    _
  $region13: #{liquid_nn_forward.5} parent=0 // pred_fallthru
    _
  %p14 = scmp.eq.s32.totalorder 0, 0
  // Predicated region
  $region14: #{liquid_nn_forward.5} parent=0 // pred_check
    %p15 = pneg %p14
  $region15: #{liquid_nn_forward.5} parent=0 // pred_check_branch
    %17 = sbr.rel (%p15) target = $region17
  $region16: #{liquid_nn_forward.5} parent=0 // pred_region
    %18 = vst [vmem:[#allocation2] sm:$0xff] 0.0
    %19 = vst [vmem:[#allocation2 + $0x8] sm:$0xff] 0.0
    %20 = vst [vmem:[#allocation2 + $0x10] sm:$0xff] 0.0
    %21 = vst [vmem:[#allocation2 + $0x18] sm:$0xff] 0.0
    %22 = vst [vmem:[#allocation2 + $0x20] sm:$0xff] 0.0
    %23 = vst [vmem:[#allocation2 + $0x28] sm:$0xff] 0.0
    %24 = vst [vmem:[#allocation2 + $0x30] sm:$0xff] 0.0
    %25 = vst [vmem:[#allocation2 + $0x38] sm:$0xff] 0.0
  $region17: #{liquid_nn_forward.5} parent=0 // pred_fallthru
    _
  %v26 = vld [vmem:[#allocation2] sm:$0xff]
  %v27 = vld [vmem:[#allocation2 + $0x8] sm:$0xff]
  %v28 = vld [vmem:[#allocation2 + $0x10] sm:$0xff]
  %v29 = vld [vmem:[#allocation2 + $0x18] sm:$0xff]
  %v30 = vld [vmem:[#allocation2 + $0x20] sm:$0xff]
  %v31 = vld [vmem:[#allocation2 + $0x28] sm:$0xff]
  %v32 = vld [vmem:[#allocation2 + $0x30] sm:$0xff]
  %v33 = vld [vmem:[#allocation2 + $0x38] sm:$0xff]
  %v34 = vld [vmem:[%s0] sm:$0xf]
  %v35 = vld [vmem:[%s0 + $0x4] sm:$0xf]
  %v36 = vld [vmem:[%s0 + $0x8] sm:$0xf]
  %v37 = vld [vmem:[%s0 + $0xc] sm:$0xf]
  %v38 = vld [vmem:[%s0 + $0x10] sm:$0xf]
  %v39 = vld [vmem:[%s0 + $0x14] sm:$0xf]
  %v40 = vld [vmem:[%s0 + $0x18] sm:$0xf]
  %v41 = vld [vmem:[%s0 + $0x1c] sm:$0xf]
  %v42 = vld [vmem:[%s1] sm:$0xf]
  %v43 = vld [vmem:[%s1 + $0x4] sm:$0xf]
  %v44 = vld [vmem:[%s1 + $0x8] sm:$0xf]
  %v45 = vld [vmem:[%s1 + $0xc] sm:$0xf]
  %v46 = vld [vmem:[%s1 + $0x10] sm:$0xf]
  %v47 = vld [vmem:[%s1 + $0x14] sm:$0xf]
  %v48 = vld [vmem:[%s1 + $0x18] sm:$0xf]
  %v49 = vld [vmem:[%s1 + $0x1c] sm:$0xf]
  %v50 = vld [vmem:[%s1 + $0x20] sm:$0xf]
  %v51 = vld [vmem:[%s1 + $0x24] sm:$0xf]
  %v52 = vld [vmem:[%s1 + $0x28] sm:$0xf]
  %v53 = vld [vmem:[%s1 + $0x2c] sm:$0xf]
  %v54 = vld [vmem:[%s1 + $0x30] sm:$0xf]
  %v55 = vld [vmem:[%s1 + $0x34] sm:$0xf]
  %v56 = vld [vmem:[%s1 + $0x38] sm:$0xf]
  %v57 = vld [vmem:[%s1 + $0x3c] sm:$0xf]
  %v66 = vunpack.c.l.b16 %v34
  %v67 = vunpack.c.l.b16 %v35
  %v68 = vunpack.c.l.b16 %v36
  %v69 = vunpack.c.l.b16 %v37
  %v70 = vunpack.c.l.b16 %v38
  %v71 = vunpack.c.l.b16 %v39
  %v72 = vunpack.c.l.b16 %v40
  %v73 = vunpack.c.l.b16 %v41
  %v74 = vpack.c.b16 %v67, %v66
  %v75 = vpack.c.b16 %v69, %v68
  %v76 = vpack.c.b16 %v71, %v70
  %v77 = vpack.c.b16 %v73, %v72
  %v98 = vunpack.c.l.b16 %v42
  %v99 = vunpack.c.l.b16 %v43
  %v100 = vunpack.c.l.b16 %v44
  %v101 = vunpack.c.l.b16 %v45
  %v102 = vunpack.c.l.b16 %v46
  %v103 = vunpack.c.l.b16 %v47
  %v104 = vunpack.c.l.b16 %v48
  %v105 = vunpack.c.l.b16 %v49
  %v106 = vunpack.c.l.b16 %v50
  %v107 = vunpack.c.l.b16 %v51
  %v108 = vunpack.c.l.b16 %v52
  %v109 = vunpack.c.l.b16 %v53
  %v110 = vunpack.c.l.b16 %v54
  %v111 = vunpack.c.l.b16 %v55
  %v112 = vunpack.c.l.b16 %v56
  %v113 = vunpack.c.l.b16 %v57
  %v114 = vpack.c.b16 %v99, %v98
  %v115 = vpack.c.b16 %v101, %v100
  %v116 = vpack.c.b16 %v103, %v102
  %v117 = vpack.c.b16 %v105, %v104
  %v118 = vpack.c.b16 %v107, %v106
  %v119 = vpack.c.b16 %v109, %v108
  %v120 = vpack.c.b16 %v111, %v110
  %v121 = vpack.c.b16 %v113, %v112
  %130 = vmatpush.bf16.msra.mxu0 %v121
  %131 = vmatpush.bf16.msra.mxu0 %v120
  %132 = vmatpush.bf16.msra.mxu0 %v119
  %133 = vmatpush.bf16.msra.mxu0 %v118
  %134 = vmatpush.bf16.msra.mxu0 %v117
  %135 = vmatpush.bf16.msra.mxu0 %v116
  %136 = vmatpush.bf16.msra.mxu0 %v115
  %137 = vmatpush.bf16.msra.mxu0 %v114
  %138 = vmatmul.bf16.gmra.mxu0 %v74
  %v139 = vpop.f32.mrf.mxu0
  %v140 = vadd.f32 0.0, %v139
  %v141 = vpop.f32.mrf.mxu0
  %v142 = vadd.f32 0.0, %v141
  %143 = vmatmul.bf16.gmra.mxu0 %v75
  %v144 = vpop.f32.mrf.mxu0
  %v145 = vadd.f32 0.0, %v144
  %v146 = vpop.f32.mrf.mxu0
  %v147 = vadd.f32 0.0, %v146
  %148 = vmatmul.bf16.gmra.mxu0 %v76
  %v149 = vpop.f32.mrf.mxu0
  %v150 = vadd.f32 0.0, %v149
  %v151 = vpop.f32.mrf.mxu0
  %v152 = vadd.f32 0.0, %v151
  %153 = vmatmul.bf16.gmra.mxu0 %v77
  %v154 = vpop.f32.mrf.mxu0
  %v155 = vadd.f32 0.0, %v154
  %v156 = vpop.f32.mrf.mxu0
  %v157 = vadd.f32 0.0, %v156
  %158 = vdwg.mxu0
  %v159 = vadd.f32 %v26, %v140
  %v160 = vadd.f32 %v27, %v142
  %v161 = vadd.f32 %v28, %v145
  %v162 = vadd.f32 %v29, %v147
  %v163 = vadd.f32 %v30, %v150
  %v164 = vadd.f32 %v31, %v152
  %v165 = vadd.f32 %v32, %v155
  %v166 = vadd.f32 %v33, %v157
  %167 = vst [vmem:[#allocation2] sm:$0xff] %v159
  %168 = vst [vmem:[#allocation2 + $0x8] sm:$0xff] %v160
  %169 = vst [vmem:[#allocation2 + $0x10] sm:$0xff] %v161
  %170 = vst [vmem:[#allocation2 + $0x18] sm:$0xff] %v162
  %171 = vst [vmem:[#allocation2 + $0x20] sm:$0xff] %v163
  %172 = vst [vmem:[#allocation2 + $0x28] sm:$0xff] %v164
  %173 = vst [vmem:[#allocation2 + $0x30] sm:$0xff] %v165
  %174 = vst [vmem:[#allocation2 + $0x38] sm:$0xff] %v166
  // Predicated region
  $region18: #{liquid_nn_forward.5} parent=0 // pred_check
    %p175 = pneg %p14
  $region19: #{liquid_nn_forward.5} parent=0 // pred_check_branch
    %177 = sbr.rel (%p175) target = $region21
  $region20: #{liquid_nn_forward.5} parent=0 // pred_region
    %v178 = vld [vmem:[#allocation2] sm:$0xff]
    %v179 = vld [vmem:[#allocation2 + $0x8] sm:$0xff]
    %v180 = vld [vmem:[#allocation2 + $0x10] sm:$0xff]
    %v181 = vld [vmem:[#allocation2 + $0x18] sm:$0xff]
    %v182 = vld [vmem:[#allocation2 + $0x20] sm:$0xff]
    %v183 = vld [vmem:[#allocation2 + $0x28] sm:$0xff]
    %v184 = vld [vmem:[#allocation2 + $0x30] sm:$0xff]
    %v185 = vld [vmem:[#allocation2 + $0x38] sm:$0xff]
    %v186 = vld [vmem:[%s2] sm:$0x1]
    %v188 = vperm.slane %v186, 0
    %v190 = vadd.f32 %v178, %v188
    %v191 = vadd.f32 %v179, %v188
    %v192 = vadd.f32 %v180, %v188
    %v193 = vadd.f32 %v181, %v188
    %v194 = vadd.f32 %v182, %v188
    %v195 = vadd.f32 %v183, %v188
    %v196 = vadd.f32 %v184, %v188
    %v197 = vadd.f32 %v185, %v188
    %198 = vst [vmem:[%s3] sm:$0xff] %v190
    %199 = vst [vmem:[%s3 + $0x8] sm:$0xff] %v191
    %200 = vst [vmem:[%s3 + $0x10] sm:$0xff] %v192
    %201 = vst [vmem:[%s3 + $0x18] sm:$0xff] %v193
    %202 = vst [vmem:[%s3 + $0x20] sm:$0xff] %v194
    %203 = vst [vmem:[%s3 + $0x28] sm:$0xff] %v195
    %204 = vst [vmem:[%s3 + $0x30] sm:$0xff] %v196
    %205 = vst [vmem:[%s3 + $0x38] sm:$0xff] %v197
  $region21: #{liquid_nn_forward.5} parent=0 // pred_fallthru
    _
  // Predicated region
  $region22: #{liquid_nn_forward.5} parent=0 // pred_check
    _
  $region23: #{liquid_nn_forward.5} parent=0 // pred_check_branch
    %207 = sbr.rel (0) target = $region25
  $region24: #{liquid_nn_forward.5} parent=0 // pred_region
    _
  $region25: #{liquid_nn_forward.5} parent=0 // pred_fallthru
    _
  // Predicated region
  $region26: #{liquid_nn_forward.5} parent=0 // pred_check
    _
  $region27: #{liquid_nn_forward.5} parent=0 // pred_check_branch
    %209 = sbr.rel (0) target = $region29
  $region28: #{liquid_nn_forward.5} parent=0 // pred_region
    _
  $region29: #{liquid_nn_forward.5} parent=0 // pred_fallthru
    _

// kernel: liquid_nn_forward.3
$region0: #{liquid_nn_forward.3}
  #allocation0 [shape = 'u32[]', space=smem, size = 0x4, offset = 0x4, fixed_abs, tag = 'smem constant byte address 0x4 - core index']
  #allocation1 [shape = 'u32[72,128]{1,0:T(1,128)}', space=vmem, size = 0x9000, scoped, tag = 'internal scratch']
  %s0 = inlined_call_operand.vmem [shape: bf16[8,8,128], index: 0, kind: input, shape index: {}]
  %s1 = inlined_call_operand.vmem [shape: bf16[128,128], index: 1, kind: input, shape index: {}]
  %s2 = inlined_call_operand.vmem [shape: f32[1,128], index: 2, kind: input, shape index: {}]
  %s3 = inlined_call_operand.vmem [shape: f32[1,128], index: 3, kind: input, shape index: {}]
  %s4 = inlined_call_operand.vmem [shape: f32[1,128], index: 4, kind: input, shape index: {}]
  %s5 = inlined_call_operand.vmem [shape: f32[1,128], index: 5, kind: input, shape index: {}]
  %s6 = inlined_call_operand.vmem [shape: bf16[128,128], index: 6, kind: input, shape index: {}]
  %s7 = inlined_call_operand.vmem [shape: f32[1,128], index: 7, kind: input, shape index: {}]
  %s8 = inlined_call_operand.vmem [shape: f32[1,128], index: 8, kind: input, shape index: {}]
  %s9 = inlined_call_operand.vmem [shape: f32[1,128], index: 9, kind: input, shape index: {}]
  %s10 = inlined_call_operand.vmem [shape: f32[1,128], index: 10, kind: input, shape index: {}]
  %s11 = inlined_call_operand.vmem [shape: bf16[8,8,128], index: 11, kind: output, shape index: {}]
  %s12 = sld [smem:[#allocation0]]
  $region54: #{liquid_nn_forward.3} parent=0
    _
  %s14 = ssub.s32 1, %s12
  %s15 = scalar_select 0, %s14, %s12
  // Predicated region
  $region2: #{liquid_nn_forward.3} parent=0 // pred_check
    _
  $region3: #{liquid_nn_forward.3} parent=0 // pred_check_branch
    %17 = sbr.rel (0) target = $region5
  $region4: #{liquid_nn_forward.3} parent=0 // pred_region
    _
  $region5: #{liquid_nn_forward.3} parent=0 // pred_fallthru
    _
  // Predicated region
  $region6: #{liquid_nn_forward.3} parent=0 // pred_check
    _
  $region7: #{liquid_nn_forward.3} parent=0 // pred_check_branch
    %19 = sbr.rel (0) target = $region9
  $region8: #{liquid_nn_forward.3} parent=0 // pred_region
    _
  $region9: #{liquid_nn_forward.3} parent=0 // pred_fallthru
    _
  // Predicated region
  $region10: #{liquid_nn_forward.3} parent=0 // pred_check
    _
  $region11: #{liquid_nn_forward.3} parent=0 // pred_check_branch
    %21 = sbr.rel (0) target = $region13
  $region12: #{liquid_nn_forward.3} parent=0 // pred_region
    _
  $region13: #{liquid_nn_forward.3} parent=0 // pred_fallthru
    _
  // Predicated region
  $region14: #{liquid_nn_forward.3} parent=0 // pred_check
    _
  $region15: #{liquid_nn_forward.3} parent=0 // pred_check_branch
    %23 = sbr.rel (0) target = $region17
  $region16: #{liquid_nn_forward.3} parent=0 // pred_region
    _
  $region17: #{liquid_nn_forward.3} parent=0 // pred_fallthru
    _
  // Predicated region
  $region18: #{liquid_nn_forward.3} parent=0 // pred_check
    _
  $region19: #{liquid_nn_forward.3} parent=0 // pred_check_branch
    %25 = sbr.rel (0) target = $region21
  $region20: #{liquid_nn_forward.3} parent=0 // pred_region
    _
  $region21: #{liquid_nn_forward.3} parent=0 // pred_fallthru
    _
  // Predicated region
  $region22: #{liquid_nn_forward.3} parent=0 // pred_check
    _
  $region23: #{liquid_nn_forward.3} parent=0 // pred_check_branch
    %27 = sbr.rel (0) target = $region25
  $region24: #{liquid_nn_forward.3} parent=0 // pred_region
    _
  $region25: #{liquid_nn_forward.3} parent=0 // pred_fallthru
    _
  // Predicated region
  $region26: #{liquid_nn_forward.3} parent=0 // pred_check
    _
  $region27: #{liquid_nn_forward.3} parent=0 // pred_check_branch
    %29 = sbr.rel (0) target = $region29
  $region28: #{liquid_nn_forward.3} parent=0 // pred_region
    _
  $region29: #{liquid_nn_forward.3} parent=0 // pred_fallthru
    _
  // Predicated region
  $region30: #{liquid_nn_forward.3} parent=0 // pred_check
    _
  $region31: #{liquid_nn_forward.3} parent=0 // pred_check_branch
    %31 = sbr.rel (0) target = $region33
  $region32: #{liquid_nn_forward.3} parent=0 // pred_region
    _
  $region33: #{liquid_nn_forward.3} parent=0 // pred_fallthru
    _
  // Predicated region
  $region34: #{liquid_nn_forward.3} parent=0 // pred_check
    _
  $region35: #{liquid_nn_forward.3} parent=0 // pred_check_branch
    %33 = sbr.rel (0) target = $region37
  $region36: #{liquid_nn_forward.3} parent=0 // pred_region
    _
  $region37: #{liquid_nn_forward.3} parent=0 // pred_fallthru
    _
  // Predicated region
  $region38: #{liquid_nn_forward.3} parent=0 // pred_check
    _
  $region39: #{liquid_nn_forward.3} parent=0 // pred_check_branch
    %35 = sbr.rel (0) target = $region41
  $region40: #{liquid_nn_forward.3} parent=0 // pred_region
    _
  $region41: #{liquid_nn_forward.3} parent=0 // pred_fallthru
    _
  // Predicated region
  $region42: #{liquid_nn_forward.3} parent=0 // pred_check
    _
  $region43: #{liquid_nn_forward.3} parent=0 // pred_check_branch
    %37 = sbr.rel (0) target = $region45
  $region44: #{liquid_nn_forward.3} parent=0 // pred_region
    _
  $region45: #{liquid_nn_forward.3} parent=0 // pred_fallthru
    _
  %v38 = vld [vmem:[%s0] sm:$0xf]
  %v39 = vld [vmem:[%s0 + $0x4] sm:$0xf]
  %v40 = vld [vmem:[%s0 + $0x8] sm:$0xf]
  %v41 = vld [vmem:[%s0 + $0xc] sm:$0xf]
  %v42 = vld [vmem:[%s0 + $0x10] sm:$0xf]
  %v43 = vld [vmem:[%s0 + $0x14] sm:$0xf]
  %v44 = vld [vmem:[%s0 + $0x18] sm:$0xf]
  %v45 = vld [vmem:[%s0 + $0x1c] sm:$0xf]
  %v46 = vld [vmem:[%s1] sm:$0xf]
  %v47 = vld [vmem:[%s1 + $0x4] sm:$0xf]
  %v48 = vld [vmem:[%s1 + $0x8] sm:$0xf]
  %v49 = vld [vmem:[%s1 + $0xc] sm:$0xf]
  %v50 = vld [vmem:[%s1 + $0x10] sm:$0xf]
  %v51 = vld [vmem:[%s1 + $0x14] sm:$0xf]
  %v52 = vld [vmem:[%s1 + $0x18] sm:$0xf]
  %v53 = vld [vmem:[%s1 + $0x1c] sm:$0xf]
  %v54 = vld [vmem:[%s1 + $0x20] sm:$0xf]
  %v55 = vld [vmem:[%s1 + $0x24] sm:$0xf]
  %v56 = vld [vmem:[%s1 + $0x28] sm:$0xf]
  %v57 = vld [vmem:[%s1 + $0x2c] sm:$0xf]
  %v58 = vld [vmem:[%s1 + $0x30] sm:$0xf]
  %v59 = vld [vmem:[%s1 + $0x34] sm:$0xf]
  %v60 = vld [vmem:[%s1 + $0x38] sm:$0xf]
  %v61 = vld [vmem:[%s1 + $0x3c] sm:$0xf]
  %v62 = vld [vmem:[%s2] sm:$0x1]
  %v64 = vperm.slane %v62, 0
  %v74 = vunpack.c.l.b16 %v38
  %v75 = vunpack.c.l.b16 %v39
  %v76 = vunpack.c.l.b16 %v40
  %v77 = vunpack.c.l.b16 %v41
  %v78 = vunpack.c.l.b16 %v42
  %v79 = vunpack.c.l.b16 %v43
  %v80 = vunpack.c.l.b16 %v44
  %v81 = vunpack.c.l.b16 %v45
  %v82 = vpack.c.b16 %v75, %v74
  %v83 = vpack.c.b16 %v77, %v76
  %v84 = vpack.c.b16 %v79, %v78
  %v85 = vpack.c.b16 %v81, %v80
  %v106 = vunpack.c.l.b16 %v46
  %v107 = vunpack.c.l.b16 %v47
  %v108 = vunpack.c.l.b16 %v48
  %v109 = vunpack.c.l.b16 %v49
  %v110 = vunpack.c.l.b16 %v50
  %v111 = vunpack.c.l.b16 %v51
  %v112 = vunpack.c.l.b16 %v52
  %v113 = vunpack.c.l.b16 %v53
  %v114 = vunpack.c.l.b16 %v54
  %v115 = vunpack.c.l.b16 %v55
  %v116 = vunpack.c.l.b16 %v56
  %v117 = vunpack.c.l.b16 %v57
  %v118 = vunpack.c.l.b16 %v58
  %v119 = vunpack.c.l.b16 %v59
  %v120 = vunpack.c.l.b16 %v60
  %v121 = vunpack.c.l.b16 %v61
  %v122 = vpack.c.b16 %v107, %v106
  %v123 = vpack.c.b16 %v109, %v108
  %v124 = vpack.c.b16 %v111, %v110
  %v125 = vpack.c.b16 %v113, %v112
  %v126 = vpack.c.b16 %v115, %v114
  %v127 = vpack.c.b16 %v117, %v116
  %v128 = vpack.c.b16 %v119, %v118
  %v129 = vpack.c.b16 %v121, %v120
  %138 = vmatpush.bf16.msra.mxu0 %v129
  %139 = vmatpush.bf16.msra.mxu0 %v128
  %140 = vmatpush.bf16.msra.mxu0 %v127
  %141 = vmatpush.bf16.msra.mxu0 %v126
  %142 = vmatpush.bf16.msra.mxu0 %v125
  %143 = vmatpush.bf16.msra.mxu0 %v124
  %144 = vmatpush.bf16.msra.mxu0 %v123
  %145 = vmatpush.bf16.msra.mxu0 %v122
  %146 = vmatmul.bf16.gmra.mxu0 %v82
  %v147 = vpop.f32.mrf.mxu0
  %v148 = vadd.f32 %v64, %v147
  %v149 = vpop.f32.mrf.mxu0
  %v150 = vadd.f32 %v64, %v149
  %151 = vmatmul.bf16.gmra.mxu0 %v83
  %v152 = vpop.f32.mrf.mxu0
  %v153 = vadd.f32 %v64, %v152
  %v154 = vpop.f32.mrf.mxu0
  %v155 = vadd.f32 %v64, %v154
  %156 = vmatmul.bf16.gmra.mxu0 %v84
  %v157 = vpop.f32.mrf.mxu0
  %v158 = vadd.f32 %v64, %v157
  %v159 = vpop.f32.mrf.mxu0
  %v160 = vadd.f32 %v64, %v159
  %161 = vmatmul.bf16.gmra.mxu0 %v85
  %v162 = vpop.f32.mrf.mxu0
  %v163 = vadd.f32 %v64, %v162
  %v164 = vpop.f32.mrf.mxu0
  %165 = vdwg.mxu0
  %v166 = vld [vmem:[%s3] sm:$0x1]
  %v167 = vld [vmem:[%s4] sm:$0x1]
  %v168 = vld [vmem:[%s5] sm:$0x1]
  %v170 = vperm.slane %v166, 0
  %v172 = vmul.f32 %v148, %v170
  %v173 = vadd.f32 %v172, 0.0
  %v174 = vmul.f32 %v170, 0.0
  %v175 = vadd.f32 %v174, 0.0
  %v176 = vtanh.pop %v175
  %177 = vadd.xlane.f32.xlu0 %v176
  %v178 = vpop.xlane.xlu0 %177
  %v179 = vmul.f32 %v178, 0.03125
  %v180 = vmul.f32 %v176, %v176
  %181 = vadd.xlane.f32.xlu0 %v180
  %v182 = vpop.xlane.xlu0 %181
  %v183 = vmul.f32 %v182, 0.03125
  %v184 = vmul.f32 %v179, %v179
  %v185 = vsub.f32 %v183, %v184
  %v186 = vsub.f32 %v176, %v179
  %v187 = vadd.f32 %v185, 1e-05
  %v188 = vrsqrt.pop %v187
  %v189 = vmul.f32 %v188, %v187
  %v190 = vmul.f32 %v189, %v188
  %v191 = vmul.f32 0.5, %v190
  %v192 = vsub.f32 1.5, %v191
  %v193 = vmul.f32 %v188, %v192
  %vm194 = vweird.f32 %v187
  %vm195 = vweird.f32 %v188
  %vm196 = vmor %vm194, %vm195
  %v197 = vsel %vm196, %v188, %v193
  %v198 = vmul.f32 %v186, %v197
  %v200 = vperm.slane %v167, 0
  %v202 = vmul.f32 %v198, %v200
  %v204 = vperm.slane %v168, 0
  %v206 = vadd.f32 %v202, %v204
  %v207 = vsub.f32 %v150, %v173
  %v208 = vmul.f32 %v207, %v170
  %v209 = vadd.f32 %v173, %v208
  %v210 = vsub.f32 %v173, %v175
  %v211 = vmul.f32 %v210, %v170
  %v212 = vadd.f32 %v175, %v211
  %v213 = vtanh.pop %v212
  %214 = vadd.xlane.f32.xlu0 %v213
  %v215 = vpop.xlane.xlu0 %214
  %v216 = vmul.f32 %v215, 0.03125
  %v217 = vmul.f32 %v213, %v213
  %218 = vadd.xlane.f32.xlu0 %v217
  %v219 = vpop.xlane.xlu0 %218
  %v220 = vmul.f32 %v219, 0.03125
  %v221 = vmul.f32 %v216, %v216
  %v222 = vsub.f32 %v220, %v221
  %v223 = vsub.f32 %v213, %v216
  %v224 = vadd.f32 %v222, 1e-05
  %v225 = vrsqrt.pop %v224
  %v226 = vmul.f32 %v225, %v224
  %v227 = vmul.f32 %v226, %v225
  %v228 = vmul.f32 0.5, %v227
  %v229 = vsub.f32 1.5, %v228
  %v230 = vmul.f32 %v225, %v229
  %vm231 = vweird.f32 %v224
  %vm232 = vweird.f32 %v225
  %vm233 = vmor %vm231, %vm232
  %v234 = vsel %vm233, %v225, %v230
  %v235 = vmul.f32 %v223, %v234
  %v236 = vmul.f32 %v235, %v200
  %v237 = vadd.f32 %v236, %v204
  %v238 = vsub.f32 %v153, %v209
  %v239 = vmul.f32 %v238, %v170
  %v240 = vadd.f32 %v209, %v239
  %v241 = vsub.f32 %v209, %v212
  %v242 = vmul.f32 %v241, %v170
  %v243 = vadd.f32 %v212, %v242
  %v244 = vtanh.pop %v243
  %245 = vadd.xlane.f32.xlu0 %v244
  %v246 = vpop.xlane.xlu0 %245
  %v247 = vmul.f32 %v246, 0.03125
  %v248 = vmul.f32 %v244, %v244
  %249 = vadd.xlane.f32.xlu0 %v248
  %v250 = vpop.xlane.xlu0 %249
  %v251 = vmul.f32 %v250, 0.03125
  %v252 = vmul.f32 %v247, %v247
  %v253 = vsub.f32 %v251, %v252
  %v254 = vsub.f32 %v244, %v247
  %v255 = vadd.f32 %v253, 1e-05
  %v256 = vrsqrt.pop %v255
  %v257 = vmul.f32 %v256, %v255
  %v258 = vmul.f32 %v257, %v256
  %v259 = vmul.f32 0.5, %v258
  %v260 = vsub.f32 1.5, %v259
  %v261 = vmul.f32 %v256, %v260
  %vm262 = vweird.f32 %v255
  %vm263 = vweird.f32 %v256
  %vm264 = vmor %vm262, %vm263
  %v265 = vsel %vm264, %v256, %v261
  %v266 = vmul.f32 %v254, %v265
  %v267 = vmul.f32 %v266, %v200
  %v268 = vadd.f32 %v267, %v204
  %v269 = vsub.f32 %v155, %v240
  %v270 = vmul.f32 %v269, %v170
  %v271 = vadd.f32 %v240, %v270
  %v272 = vsub.f32 %v240, %v243
  %v273 = vmul.f32 %v272, %v170
  %v274 = vadd.f32 %v243, %v273
  %v275 = vtanh.pop %v274
  %276 = vadd.xlane.f32.xlu0 %v275
  %v277 = vpop.xlane.xlu0 %276
  %v278 = vmul.f32 %v277, 0.03125
  %v279 = vmul.f32 %v275, %v275
  %280 = vadd.xlane.f32.xlu0 %v279
  %v281 = vpop.xlane.xlu0 %280
  %v282 = vmul.f32 %v281, 0.03125
  %v283 = vmul.f32 %v278, %v278
  %v284 = vsub.f32 %v282, %v283
  %v285 = vsub.f32 %v275, %v278
  %v286 = vadd.f32 %v284, 1e-05
  %v287 = vrsqrt.pop %v286
  %v288 = vmul.f32 %v287, %v286
  %v289 = vmul.f32 %v288, %v287
  %v290 = vmul.f32 0.5, %v289
  %v291 = vsub.f32 1.5, %v290
  %v292 = vmul.f32 %v287, %v291
  %vm293 = vweird.f32 %v286
  %vm294 = vweird.f32 %v287
  %vm295 = vmor %vm293, %vm294
  %v296 = vsel %vm295, %v287, %v292
  %v297 = vmul.f32 %v285, %v296
  %v298 = vmul.f32 %v297, %v200
  %v299 = vadd.f32 %v298, %v204
  %v300 = vsub.f32 %v158, %v271
  %v301 = vmul.f32 %v300, %v170
  %v302 = vadd.f32 %v271, %v301
  %v303 = vsub.f32 %v271, %v274
  %v304 = vmul.f32 %v303, %v170
  %v305 = vadd.f32 %v274, %v304
  %v306 = vtanh.pop %v305
  %307 = vadd.xlane.f32.xlu0 %v306
  %v308 = vpop.xlane.xlu0 %307
  %v309 = vmul.f32 %v308, 0.03125
  %v310 = vmul.f32 %v306, %v306
  %311 = vadd.xlane.f32.xlu0 %v310
  %v312 = vpop.xlane.xlu0 %311
  %v313 = vmul.f32 %v312, 0.03125
  %v314 = vmul.f32 %v309, %v309
  %v315 = vsub.f32 %v313, %v314
  %v316 = vsub.f32 %v306, %v309
  %v317 = vadd.f32 %v315, 1e-05
  %v318 = vrsqrt.pop %v317
  %v319 = vmul.f32 %v318, %v317
  %v320 = vmul.f32 %v319, %v318
  %v321 = vmul.f32 0.5, %v320
  %v322 = vsub.f32 1.5, %v321
  %v323 = vmul.f32 %v318, %v322
  %vm324 = vweird.f32 %v317
  %vm325 = vweird.f32 %v318
  %vm326 = vmor %vm324, %vm325
  %v327 = vsel %vm326, %v318, %v323
  %v328 = vmul.f32 %v316, %v327
  %v329 = vmul.f32 %v328, %v200
  %v330 = vadd.f32 %v329, %v204
  %v331 = vsub.f32 %v160, %v302
  %v332 = vmul.f32 %v331, %v170
  %v333 = vadd.f32 %v302, %v332
  %v334 = vsub.f32 %v302, %v305
  %v335 = vmul.f32 %v334, %v170
  %v336 = vadd.f32 %v305, %v335
  %v337 = vtanh.pop %v336
  %338 = vadd.xlane.f32.xlu0 %v337
  %v339 = vpop.xlane.xlu0 %338
  %v340 = vmul.f32 %v339, 0.03125
  %v341 = vmul.f32 %v337, %v337
  %342 = vadd.xlane.f32.xlu0 %v341
  %v343 = vpop.xlane.xlu0 %342
  %v344 = vmul.f32 %v343, 0.03125
  %v345 = vmul.f32 %v340, %v340
  %v346 = vsub.f32 %v344, %v345
  %v347 = vsub.f32 %v337, %v340
  %v348 = vadd.f32 %v346, 1e-05
  %v349 = vrsqrt.pop %v348
  %v350 = vmul.f32 %v349, %v348
  %v351 = vmul.f32 %v350, %v349
  %v352 = vmul.f32 0.5, %v351
  %v353 = vsub.f32 1.5, %v352
  %v354 = vmul.f32 %v349, %v353
  %vm355 = vweird.f32 %v348
  %vm356 = vweird.f32 %v349
  %vm357 = vmor %vm355, %vm356
  %v358 = vsel %vm357, %v349, %v354
  %v359 = vmul.f32 %v347, %v358
  %v360 = vmul.f32 %v359, %v200
  %v361 = vadd.f32 %v360, %v204
  %v362 = vsub.f32 %v163, %v333
  %v363 = vmul.f32 %v362, %v170
  %v364 = vadd.f32 %v333, %v363
  %v365 = vsub.f32 %v333, %v336
  %v366 = vmul.f32 %v365, %v170
  %v367 = vadd.f32 %v336, %v366
  %v368 = vtanh.pop %v367
  %369 = vadd.xlane.f32.xlu0 %v368
  %v370 = vpop.xlane.xlu0 %369
  %v371 = vmul.f32 %v370, 0.03125
  %v372 = vmul.f32 %v368, %v368
  %373 = vadd.xlane.f32.xlu0 %v372
  %v374 = vpop.xlane.xlu0 %373
  %v375 = vmul.f32 %v374, 0.03125
  %v376 = vmul.f32 %v371, %v371
  %v377 = vsub.f32 %v375, %v376
  %v378 = vsub.f32 %v368, %v371
  %v379 = vadd.f32 %v377, 1e-05
  %v380 = vrsqrt.pop %v379
  %v381 = vmul.f32 %v380, %v379
  %v382 = vmul.f32 %v381, %v380
  %v383 = vmul.f32 0.5, %v382
  %v384 = vsub.f32 1.5, %v383
  %v385 = vmul.f32 %v380, %v384
  %vm386 = vweird.f32 %v379
  %vm387 = vweird.f32 %v380
  %vm388 = vmor %vm386, %vm387
  %v389 = vsel %vm388, %v380, %v385
  %v390 = vmul.f32 %v378, %v389
  %v391 = vmul.f32 %v390, %v200
  %v392 = vadd.f32 %v391, %v204
  %v393 = vsub.f32 %v364, %v367
  %v394 = vmul.f32 %v393, %v170
  %v395 = vadd.f32 %v367, %v394
  %v396 = vtanh.pop %v395
  %397 = vadd.xlane.f32.xlu0 %v396
  %v398 = vpop.xlane.xlu0 %397
  %v399 = vmul.f32 %v398, 0.03125
  %v400 = vmul.f32 %v396, %v396
  %401 = vadd.xlane.f32.xlu0 %v400
  %v402 = vpop.xlane.xlu0 %401
  %v403 = vmul.f32 %v402, 0.03125
  %v404 = vmul.f32 %v399, %v399
  %v405 = vsub.f32 %v403, %v404
  %v406 = vsub.f32 %v396, %v399
  %v407 = vadd.f32 %v405, 1e-05
  %v408 = vrsqrt.pop %v407
  %v409 = vmul.f32 %v408, %v407
  %v410 = vmul.f32 %v409, %v408
  %v411 = vmul.f32 0.5, %v410
  %v412 = vsub.f32 1.5, %v411
  %v413 = vmul.f32 %v408, %v412
  %vm414 = vweird.f32 %v407
  %vm415 = vweird.f32 %v408
  %vm416 = vmor %vm414, %vm415
  %v417 = vsel %vm416, %v408, %v413
  %v418 = vmul.f32 %v406, %v417
  %v419 = vmul.f32 %v418, %v200
  %v420 = vadd.f32 %v419, %v204
  %v421 = vpack.c.bf16 %v206, %v206
  %v422 = vpack.c.bf16 %v237, %v237
  %v423 = vpack.c.bf16 %v268, %v268
  %v424 = vpack.c.bf16 %v299, %v299
  %v425 = vpack.c.bf16 %v330, %v330
  %v426 = vpack.c.bf16 %v361, %v361
  %v427 = vpack.c.bf16 %v392, %v392
  %v428 = vpack.c.bf16 %v420, %v420
  %v429 = vld [vmem:[%s6] sm:$0xf]
  %v430 = vld [vmem:[%s6 + $0x4] sm:$0xf]
  %v431 = vld [vmem:[%s6 + $0x8] sm:$0xf]
  %v432 = vld [vmem:[%s6 + $0xc] sm:$0xf]
  %v433 = vld [vmem:[%s6 + $0x10] sm:$0xf]
  %v434 = vld [vmem:[%s6 + $0x14] sm:$0xf]
  %v435 = vld [vmem:[%s6 + $0x18] sm:$0xf]
  %v436 = vld [vmem:[%s6 + $0x1c] sm:$0xf]
  %v437 = vld [vmem:[%s6 + $0x20] sm:$0xf]
  %v438 = vld [vmem:[%s6 + $0x24] sm:$0xf]
  %v439 = vld [vmem:[%s6 + $0x28] sm:$0xf]
  %v440 = vld [vmem:[%s6 + $0x2c] sm:$0xf]
  %v441 = vld [vmem:[%s6 + $0x30] sm:$0xf]
  %v442 = vld [vmem:[%s6 + $0x34] sm:$0xf]
  %v443 = vld [vmem:[%s6 + $0x38] sm:$0xf]
  %v444 = vld [vmem:[%s6 + $0x3c] sm:$0xf]
  %v445 = vld [vmem:[%s7] sm:$0x1]
  %v447 = vperm.slane %v445, 0
  %v457 = vunpack.c.l.b16 %v421
  %v458 = vunpack.c.l.b16 %v422
  %v459 = vunpack.c.l.b16 %v423
  %v460 = vunpack.c.l.b16 %v424
  %v461 = vunpack.c.l.b16 %v425
  %v462 = vunpack.c.l.b16 %v426
  %v463 = vunpack.c.l.b16 %v427
  %v464 = vunpack.c.l.b16 %v428
  %v465 = vpack.c.b16 %v458, %v457
  %v466 = vpack.c.b16 %v460, %v459
  %v467 = vpack.c.b16 %v462, %v461
  %v468 = vpack.c.b16 %v464, %v463
  %v489 = vunpack.c.l.b16 %v429
  %v490 = vunpack.c.l.b16 %v430
  %v491 = vunpack.c.l.b16 %v431
  %v492 = vunpack.c.l.b16 %v432
  %v493 = vunpack.c.l.b16 %v433
  %v494 = vunpack.c.l.b16 %v434
  %v495 = vunpack.c.l.b16 %v435
  %v496 = vunpack.c.l.b16 %v436
  %v497 = vunpack.c.l.b16 %v437
  %v498 = vunpack.c.l.b16 %v438
  %v499 = vunpack.c.l.b16 %v439
  %v500 = vunpack.c.l.b16 %v440
  %v501 = vunpack.c.l.b16 %v441
  %v502 = vunpack.c.l.b16 %v442
  %v503 = vunpack.c.l.b16 %v443
  %v504 = vunpack.c.l.b16 %v444
  %v505 = vpack.c.b16 %v490, %v489
  %v506 = vpack.c.b16 %v492, %v491
  %v507 = vpack.c.b16 %v494, %v493
  %v508 = vpack.c.b16 %v496, %v495
  %v509 = vpack.c.b16 %v498, %v497
  %v510 = vpack.c.b16 %v500, %v499
  %v511 = vpack.c.b16 %v502, %v501
  %v512 = vpack.c.b16 %v504, %v503
  %521 = vmatpush.bf16.msra.mxu0 %v512
  %522 = vmatpush.bf16.msra.mxu0 %v511
  %523 = vmatpush.bf16.msra.mxu0 %v510
  %524 = vmatpush.bf16.msra.mxu0 %v509
  %525 = vmatpush.bf16.msra.mxu0 %v508
  %526 = vmatpush.bf16.msra.mxu0 %v507
  %527 = vmatpush.bf16.msra.mxu0 %v506
  %528 = vmatpush.bf16.msra.mxu0 %v505
  %529 = vmatmul.bf16.gmra.mxu0 %v465
  %v530 = vpop.f32.mrf.mxu0
  %v531 = vadd.f32 %v447, %v530
  %v532 = vpop.f32.mrf.mxu0
  %v533 = vadd.f32 %v447, %v532
  %534 = vmatmul.bf16.gmra.mxu0 %v466
  %v535 = vpop.f32.mrf.mxu0
  %v536 = vadd.f32 %v447, %v535
  %v537 = vpop.f32.mrf.mxu0
  %v538 = vadd.f32 %v447, %v537
  %539 = vmatmul.bf16.gmra.mxu0 %v467
  %v540 = vpop.f32.mrf.mxu0
  %v541 = vadd.f32 %v447, %v540
  %v542 = vpop.f32.mrf.mxu0
  %v543 = vadd.f32 %v447, %v542
  %544 = vmatmul.bf16.gmra.mxu0 %v468
  %v545 = vpop.f32.mrf.mxu0
  %v546 = vadd.f32 %v447, %v545
  %v547 = vpop.f32.mrf.mxu0
  %548 = vdwg.mxu0
  %v549 = vld [vmem:[%s8] sm:$0x1]
  %v550 = vld [vmem:[%s9] sm:$0x1]
  %v551 = vld [vmem:[%s10] sm:$0x1]
  %v553 = vperm.slane %v549, 0
  %v555 = vmul.f32 %v531, %v553
  %v556 = vadd.f32 %v555, 0.0
  %v557 = vmul.f32 %v553, 0.0
  %v558 = vadd.f32 %v557, 0.0
  %v559 = vtanh.pop %v558
  %560 = vadd.xlane.f32.xlu0 %v559
  %v561 = vpop.xlane.xlu0 %560
  %v562 = vmul.f32 %v561, 0.03125
  %v563 = vmul.f32 %v559, %v559
  %564 = vadd.xlane.f32.xlu0 %v563
  %v565 = vpop.xlane.xlu0 %564
  %v566 = vmul.f32 %v565, 0.03125
  %v567 = vmul.f32 %v562, %v562
  %v568 = vsub.f32 %v566, %v567
  %v569 = vsub.f32 %v559, %v562
  %v570 = vadd.f32 %v568, 1e-05
  %v571 = vrsqrt.pop %v570
  %v572 = vmul.f32 %v571, %v570
  %v573 = vmul.f32 %v572, %v571
  %v574 = vmul.f32 0.5, %v573
  %v575 = vsub.f32 1.5, %v574
  %v576 = vmul.f32 %v571, %v575
  %vm577 = vweird.f32 %v570
  %vm578 = vweird.f32 %v571
  %vm579 = vmor %vm577, %vm578
  %v580 = vsel %vm579, %v571, %v576
  %v581 = vmul.f32 %v569, %v580
  %v583 = vperm.slane %v550, 0
  %v585 = vmul.f32 %v581, %v583
  %v587 = vperm.slane %v551, 0
  %v589 = vadd.f32 %v585, %v587
  %v590 = vsub.f32 %v533, %v556
  %v591 = vmul.f32 %v590, %v553
  %v592 = vadd.f32 %v556, %v591
  %v593 = vsub.f32 %v556, %v558
  %v594 = vmul.f32 %v593, %v553
  %v595 = vadd.f32 %v558, %v594
  %v596 = vtanh.pop %v595
  %597 = vadd.xlane.f32.xlu0 %v596
  %v598 = vpop.xlane.xlu0 %597
  %v599 = vmul.f32 %v598, 0.03125
  %v600 = vmul.f32 %v596, %v596
  %601 = vadd.xlane.f32.xlu0 %v600
  %v602 = vpop.xlane.xlu0 %601
  %v603 = vmul.f32 %v602, 0.03125
  %v604 = vmul.f32 %v599, %v599
  %v605 = vsub.f32 %v603, %v604
  %v606 = vsub.f32 %v596, %v599
  %v607 = vadd.f32 %v605, 1e-05
  %v608 = vrsqrt.pop %v607
  %v609 = vmul.f32 %v608, %v607
  %v610 = vmul.f32 %v609, %v608
  %v611 = vmul.f32 0.5, %v610
  %v612 = vsub.f32 1.5, %v611
  %v613 = vmul.f32 %v608, %v612
  %vm614 = vweird.f32 %v607
  %vm615 = vweird.f32 %v608
  %vm616 = vmor %vm614, %vm615
  %v617 = vsel %vm616, %v608, %v613
  %v618 = vmul.f32 %v606, %v617
  %v619 = vmul.f32 %v618, %v583
  %v620 = vadd.f32 %v619, %v587
  %v621 = vsub.f32 %v536, %v592
  %v622 = vmul.f32 %v621, %v553
  %v623 = vadd.f32 %v592, %v622
  %v624 = vsub.f32 %v592, %v595
  %v625 = vmul.f32 %v624, %v553
  %v626 = vadd.f32 %v595, %v625
  %v627 = vtanh.pop %v626
  %628 = vadd.xlane.f32.xlu0 %v627
  %v629 = vpop.xlane.xlu0 %628
  %v630 = vmul.f32 %v629, 0.03125
  %v631 = vmul.f32 %v627, %v627
  %632 = vadd.xlane.f32.xlu0 %v631
  %v633 = vpop.xlane.xlu0 %632
  %v634 = vmul.f32 %v633, 0.03125
  %v635 = vmul.f32 %v630, %v630
  %v636 = vsub.f32 %v634, %v635
  %v637 = vsub.f32 %v627, %v630
  %v638 = vadd.f32 %v636, 1e-05
  %v639 = vrsqrt.pop %v638
  %v640 = vmul.f32 %v639, %v638
  %v641 = vmul.f32 %v640, %v639
  %v642 = vmul.f32 0.5, %v641
  %v643 = vsub.f32 1.5, %v642
  %v644 = vmul.f32 %v639, %v643
  %vm645 = vweird.f32 %v638
  %vm646 = vweird.f32 %v639
  %vm647 = vmor %vm645, %vm646
  %v648 = vsel %vm647, %v639, %v644
  %v649 = vmul.f32 %v637, %v648
  %v650 = vmul.f32 %v649, %v583
  %v651 = vadd.f32 %v650, %v587
  %v652 = vsub.f32 %v538, %v623
  %v653 = vmul.f32 %v652, %v553
  %v654 = vadd.f32 %v623, %v653
  %v655 = vsub.f32 %v623, %v626
  %v656 = vmul.f32 %v655, %v553
  %v657 = vadd.f32 %v626, %v656
  %v658 = vtanh.pop %v657
  %659 = vadd.xlane.f32.xlu0 %v658
  %v660 = vpop.xlane.xlu0 %659
  %v661 = vmul.f32 %v660, 0.03125
  %v662 = vmul.f32 %v658, %v658
  %663 = vadd.xlane.f32.xlu0 %v662
  %v664 = vpop.xlane.xlu0 %663
  %v665 = vmul.f32 %v664, 0.03125
  %v666 = vmul.f32 %v661, %v661
  %v667 = vsub.f32 %v665, %v666
  %v668 = vsub.f32 %v658, %v661
  %v669 = vadd.f32 %v667, 1e-05
  %v670 = vrsqrt.pop %v669
  %v671 = vmul.f32 %v670, %v669
  %v672 = vmul.f32 %v671, %v670
  %v673 = vmul.f32 0.5, %v672
  %v674 = vsub.f32 1.5, %v673
  %v675 = vmul.f32 %v670, %v674
  %vm676 = vweird.f32 %v669
  %vm677 = vweird.f32 %v670
  %vm678 = vmor %vm676, %vm677
  %v679 = vsel %vm678, %v670, %v675
  %v680 = vmul.f32 %v668, %v679
  %v681 = vmul.f32 %v680, %v583
  %v682 = vadd.f32 %v681, %v587
  %v683 = vsub.f32 %v541, %v654
  %v684 = vmul.f32 %v683, %v553
  %v685 = vadd.f32 %v654, %v684
  %v686 = vsub.f32 %v654, %v657
  %v687 = vmul.f32 %v686, %v553
  %v688 = vadd.f32 %v657, %v687
  %v689 = vtanh.pop %v688
  %690 = vadd.xlane.f32.xlu0 %v689
  %v691 = vpop.xlane.xlu0 %690
  %v692 = vmul.f32 %v691, 0.03125
  %v693 = vmul.f32 %v689, %v689
  %694 = vadd.xlane.f32.xlu0 %v693
  %v695 = vpop.xlane.xlu0 %694
  %v696 = vmul.f32 %v695, 0.03125
  %v697 = vmul.f32 %v692, %v692
  %v698 = vsub.f32 %v696, %v697
  %v699 = vsub.f32 %v689, %v692
  %v700 = vadd.f32 %v698, 1e-05
  %v701 = vrsqrt.pop %v700
  %v702 = vmul.f32 %v701, %v700
  %v703 = vmul.f32 %v702, %v701
  %v704 = vmul.f32 0.5, %v703
  %v705 = vsub.f32 1.5, %v704
  %v706 = vmul.f32 %v701, %v705
  %vm707 = vweird.f32 %v700
  %vm708 = vweird.f32 %v701
  %vm709 = vmor %vm707, %vm708
  %v710 = vsel %vm709, %v701, %v706
  %v711 = vmul.f32 %v699, %v710
  %v712 = vmul.f32 %v711, %v583
  %v713 = vadd.f32 %v712, %v587
  %v714 = vsub.f32 %v543, %v685
  %v715 = vmul.f32 %v714, %v553
  %v716 = vadd.f32 %v685, %v715
  %v717 = vsub.f32 %v685, %v688
  %v718 = vmul.f32 %v717, %v553
  %v719 = vadd.f32 %v688, %v718
  %v720 = vtanh.pop %v719
  %721 = vadd.xlane.f32.xlu0 %v720
  %v722 = vpop.xlane.xlu0 %721
  %v723 = vmul.f32 %v722, 0.03125
  %v724 = vmul.f32 %v720, %v720
  %725 = vadd.xlane.f32.xlu0 %v724
  %v726 = vpop.xlane.xlu0 %725
  %v727 = vmul.f32 %v726, 0.03125
  %v728 = vmul.f32 %v723, %v723
  %v729 = vsub.f32 %v727, %v728
  %v730 = vsub.f32 %v720, %v723
  %v731 = vadd.f32 %v729, 1e-05
  %v732 = vrsqrt.pop %v731
  %v733 = vmul.f32 %v732, %v731
  %v734 = vmul.f32 %v733, %v732
  %v735 = vmul.f32 0.5, %v734
  %v736 = vsub.f32 1.5, %v735
  %v737 = vmul.f32 %v732, %v736
  %vm738 = vweird.f32 %v731
  %vm739 = vweird.f32 %v732
  %vm740 = vmor %vm738, %vm739
  %v741 = vsel %vm740, %v732, %v737
  %v742 = vmul.f32 %v730, %v741
  %v743 = vmul.f32 %v742, %v583
  %v744 = vadd.f32 %v743, %v587
  %v745 = vsub.f32 %v546, %v716
  %v746 = vmul.f32 %v745, %v553
  %v747 = vadd.f32 %v716, %v746
  %v748 = vsub.f32 %v716, %v719
  %v749 = vmul.f32 %v748, %v553
  %v750 = vadd.f32 %v719, %v749
  %v751 = vtanh.pop %v750
  %752 = vadd.xlane.f32.xlu0 %v751
  %v753 = vpop.xlane.xlu0 %752
  %v754 = vmul.f32 %v753, 0.03125
  %v755 = vmul.f32 %v751, %v751
  %756 = vadd.xlane.f32.xlu0 %v755
  %v757 = vpop.xlane.xlu0 %756
  %v758 = vmul.f32 %v757, 0.03125
  %v759 = vmul.f32 %v754, %v754
  %v760 = vsub.f32 %v758, %v759
  %v761 = vsub.f32 %v751, %v754
  %v762 = vadd.f32 %v760, 1e-05
  %v763 = vrsqrt.pop %v762
  %v764 = vmul.f32 %v763, %v762
  %v765 = vmul.f32 %v764, %v763
  %v766 = vmul.f32 0.5, %v765
  %v767 = vsub.f32 1.5, %v766
  %v768 = vmul.f32 %v763, %v767
  %vm769 = vweird.f32 %v762
  %vm770 = vweird.f32 %v763
  %vm771 = vmor %vm769, %vm770
  %v772 = vsel %vm771, %v763, %v768
  %v773 = vmul.f32 %v761, %v772
  %v774 = vmul.f32 %v773, %v583
  %v775 = vadd.f32 %v774, %v587
  %v776 = vsub.f32 %v747, %v750
  %v777 = vmul.f32 %v776, %v553
  %v778 = vadd.f32 %v750, %v777
  %v779 = vtanh.pop %v778
  %780 = vadd.xlane.f32.xlu0 %v779
  %v781 = vpop.xlane.xlu0 %780
  %v782 = vmul.f32 %v781, 0.03125
  %v783 = vmul.f32 %v779, %v779
  %784 = vadd.xlane.f32.xlu0 %v783
  %v785 = vpop.xlane.xlu0 %784
  %v786 = vmul.f32 %v785, 0.03125
  %v787 = vmul.f32 %v782, %v782
  %v788 = vsub.f32 %v786, %v787
  %v789 = vsub.f32 %v779, %v782
  %v790 = vadd.f32 %v788, 1e-05
  %v791 = vrsqrt.pop %v790
  %v792 = vmul.f32 %v791, %v790
  %v793 = vmul.f32 %v792, %v791
  %v794 = vmul.f32 0.5, %v793
  %v795 = vsub.f32 1.5, %v794
  %v796 = vmul.f32 %v791, %v795
  %vm797 = vweird.f32 %v790
  %vm798 = vweird.f32 %v791
  %vm799 = vmor %vm797, %vm798
  %v800 = vsel %vm799, %v791, %v796
  %v801 = vmul.f32 %v789, %v800
  %v802 = vmul.f32 %v801, %v583
  %v803 = vadd.f32 %v802, %v587
  %v804 = vpack.c.bf16 %v589, %v589
  %v805 = vpack.c.bf16 %v620, %v620
  %v806 = vpack.c.bf16 %v651, %v651
  %v807 = vpack.c.bf16 %v682, %v682
  %v808 = vpack.c.bf16 %v713, %v713
  %v809 = vpack.c.bf16 %v744, %v744
  %v810 = vpack.c.bf16 %v775, %v775
  %v811 = vpack.c.bf16 %v803, %v803
  %812 = vst [vmem:[%s11] sm:$0xf] %v804
  %813 = vst [vmem:[%s11 + $0x4] sm:$0xf] %v805
  %814 = vst [vmem:[%s11 + $0x8] sm:$0xf] %v806
  %815 = vst [vmem:[%s11 + $0xc] sm:$0xf] %v807
  %816 = vst [vmem:[%s11 + $0x10] sm:$0xf] %v808
  %817 = vst [vmem:[%s11 + $0x14] sm:$0xf] %v809
  %818 = vst [vmem:[%s11 + $0x18] sm:$0xf] %v810
  %819 = vst [vmem:[%s11 + $0x1c] sm:$0xf] %v811
  // Predicated region
  $region46: #{liquid_nn_forward.3} parent=0 // pred_check
    _
  $region47: #{liquid_nn_forward.3} parent=0 // pred_check_branch
    %821 = sbr.rel (0) target = $region49
  $region48: #{liquid_nn_forward.3} parent=0 // pred_region
    _
  $region49: #{liquid_nn_forward.3} parent=0 // pred_fallthru
    _
  // Predicated region
  $region50: #{liquid_nn_forward.3} parent=0 // pred_check
    _
  $region51: #{liquid_nn_forward.3} parent=0 // pred_check_branch
    %823 = sbr.rel (0) target = $region53
  $region52: #{liquid_nn_forward.3} parent=0 // pred_region
    _
  $region53: #{liquid_nn_forward.3} parent=0 // pred_fallthru
    _

// kernel: liquid_nn_forward.4
$region0: #{liquid_nn_forward.4}
  #allocation0 [shape = 'u32[]', space=smem, size = 0x4, offset = 0x4, fixed_abs, tag = 'smem constant byte address 0x4 - core index']
  #allocation1 [shape = 'u32[72,128]{1,0:T(1,128)}', space=vmem, size = 0x9000, scoped, tag = 'internal scratch']
  %s0 = inlined_call_operand.vmem [shape: bf16[8,8,128], index: 0, kind: input, shape index: {}]
  %s1 = inlined_call_operand.vmem [shape: bf16[128,32], index: 1, kind: input, shape index: {}]
  %s2 = inlined_call_operand.vmem [shape: bf16[128,32], index: 2, kind: input, shape index: {}]
  %s3 = inlined_call_operand.vmem [shape: bf16[128,32], index: 3, kind: input, shape index: {}]
  %s4 = inlined_call_operand.vmem [shape: f32[1,32], index: 4, kind: input, shape index: {}]
  %s5 = inlined_call_operand.vmem [shape: f32[1,32], index: 5, kind: input, shape index: {}]
  %s6 = inlined_call_operand.vmem [shape: f32[1,32], index: 6, kind: input, shape index: {}]
  %s7 = inlined_call_operand.vmem [shape: bf16[32,128], index: 7, kind: input, shape index: {}]
  %s8 = inlined_call_operand.vmem [shape: f32[1,128], index: 8, kind: input, shape index: {}]
  %s9 = inlined_call_operand.vmem [shape: bf16[64,128], index: 9, kind: output, shape index: {}]
  %s10 = sld [smem:[#allocation0]]
  $region46: #{liquid_nn_forward.4} parent=0
    _
  %s12 = ssub.s32 1, %s10
  %s13 = scalar_select 0, %s12, %s10
  // Predicated region
  $region2: #{liquid_nn_forward.4} parent=0 // pred_check
    _
  $region3: #{liquid_nn_forward.4} parent=0 // pred_check_branch
    %15 = sbr.rel (0) target = $region5
  $region4: #{liquid_nn_forward.4} parent=0 // pred_region
    _
  $region5: #{liquid_nn_forward.4} parent=0 // pred_fallthru
    _
  // Predicated region
  $region6: #{liquid_nn_forward.4} parent=0 // pred_check
    _
  $region7: #{liquid_nn_forward.4} parent=0 // pred_check_branch
    %17 = sbr.rel (0) target = $region9
  $region8: #{liquid_nn_forward.4} parent=0 // pred_region
    _
  $region9: #{liquid_nn_forward.4} parent=0 // pred_fallthru
    _
  // Predicated region
  $region10: #{liquid_nn_forward.4} parent=0 // pred_check
    _
  $region11: #{liquid_nn_forward.4} parent=0 // pred_check_branch
    %19 = sbr.rel (0) target = $region13
  $region12: #{liquid_nn_forward.4} parent=0 // pred_region
    _
  $region13: #{liquid_nn_forward.4} parent=0 // pred_fallthru
    _
  // Predicated region
  $region14: #{liquid_nn_forward.4} parent=0 // pred_check
    _
  $region15: #{liquid_nn_forward.4} parent=0 // pred_check_branch
    %21 = sbr.rel (0) target = $region17
  $region16: #{liquid_nn_forward.4} parent=0 // pred_region
    _
  $region17: #{liquid_nn_forward.4} parent=0 // pred_fallthru
    _
  // Predicated region
  $region18: #{liquid_nn_forward.4} parent=0 // pred_check
    _
  $region19: #{liquid_nn_forward.4} parent=0 // pred_check_branch
    %23 = sbr.rel (0) target = $region21
  $region20: #{liquid_nn_forward.4} parent=0 // pred_region
    _
  $region21: #{liquid_nn_forward.4} parent=0 // pred_fallthru
    _
  // Predicated region
  $region22: #{liquid_nn_forward.4} parent=0 // pred_check
    _
  $region23: #{liquid_nn_forward.4} parent=0 // pred_check_branch
    %25 = sbr.rel (0) target = $region25
  $region24: #{liquid_nn_forward.4} parent=0 // pred_region
    _
  $region25: #{liquid_nn_forward.4} parent=0 // pred_fallthru
    _
  // Predicated region
  $region26: #{liquid_nn_forward.4} parent=0 // pred_check
    _
  $region27: #{liquid_nn_forward.4} parent=0 // pred_check_branch
    %27 = sbr.rel (0) target = $region29
  $region28: #{liquid_nn_forward.4} parent=0 // pred_region
    _
  $region29: #{liquid_nn_forward.4} parent=0 // pred_fallthru
    _
  // Predicated region
  $region30: #{liquid_nn_forward.4} parent=0 // pred_check
    _
  $region31: #{liquid_nn_forward.4} parent=0 // pred_check_branch
    %29 = sbr.rel (0) target = $region33
  $region32: #{liquid_nn_forward.4} parent=0 // pred_region
    _
  $region33: #{liquid_nn_forward.4} parent=0 // pred_fallthru
    _
  // Predicated region
  $region34: #{liquid_nn_forward.4} parent=0 // pred_check
    _
  $region35: #{liquid_nn_forward.4} parent=0 // pred_check_branch
    %31 = sbr.rel (0) target = $region37
  $region36: #{liquid_nn_forward.4} parent=0 // pred_region
    _
  $region37: #{liquid_nn_forward.4} parent=0 // pred_fallthru
    _
  %v33 = vld [vmem:[%s0] sm:$0xf]
  %v34 = vld [vmem:[%s0 + $0x4] sm:$0xf]
  %v35 = vld [vmem:[%s0 + $0x8] sm:$0xf]
  %v36 = vld [vmem:[%s0 + $0xc] sm:$0xf]
  %v37 = vld [vmem:[%s0 + $0x10] sm:$0xf]
  %v38 = vld [vmem:[%s0 + $0x14] sm:$0xf]
  %v39 = vld [vmem:[%s0 + $0x18] sm:$0xf]
  %v40 = vld [vmem:[%s0 + $0x1c] sm:$0xf]
  %v41 = vrot.slane %v37, 4
  %vm42 = vcmask 1047556
  %v43 = vsel %vm42, %v41, %v33
  %v45 = vunpack.c.l.s4 1983009808
  %v46 = vunpack.c.0.s8 %v45
  %v47 = vperm.slane %v43, %v46
  %v48 = vrot.slane %v39, 4
  %v49 = vsel %vm42, %v48, %v35
  %v51 = vunpack.c.l.s4 1983009808
  %v52 = vunpack.c.0.s8 %v51
  %v53 = vperm.slane %v49, %v52
  %v54 = vrot.slane %v53, 4
  %v55 = vsel %vm42, %v54, %v47
  %v56 = vrot.slane %v47, 4
  %v57 = vsel %vm42, %v53, %v56
  %v59 = vunpack.c.l.s4 1934713408
  %v60 = vunpack.c.0.s8 %v59
  %v61 = vperm.slane %v55, %v60
  %v63 = vunpack.c.l.s4 1934713408
  %v64 = vunpack.c.0.s8 %v63
  %v65 = vperm.slane %v57, %v64
  %v66 = vrot.slane %v61, 4
  %v67 = vsel %vm42, 0, %v66
  %v68 = vrot.slane %v65, 4
  %v69 = vsel %vm42, 0, %v68
  %v70 = vrot.slane %v38, 4
  %v71 = vsel %vm42, %v70, %v34
  %v73 = vunpack.c.l.s4 1983009808
  %v74 = vunpack.c.0.s8 %v73
  %v75 = vperm.slane %v71, %v74
  %v76 = vrot.slane %v40, 4
  %v77 = vsel %vm42, %v76, %v36
  %v79 = vunpack.c.l.s4 1983009808
  %v80 = vunpack.c.0.s8 %v79
  %v81 = vperm.slane %v77, %v80
  %v82 = vrot.slane %v81, 4
  %v83 = vsel %vm42, %v82, %v75
  %v84 = vrot.slane %v75, 4
  %v85 = vsel %vm42, %v81, %v84
  %v87 = vunpack.c.l.s4 1934713408
  %v88 = vunpack.c.0.s8 %v87
  %v89 = vperm.slane %v83, %v88
  %v91 = vunpack.c.l.s4 1934713408
  %v92 = vunpack.c.0.s8 %v91
  %v93 = vperm.slane %v85, %v92
  %v94 = vrot.slane %v89, 4
  %v95 = vsel %vm42, 0, %v94
  %v96 = vrot.slane %v93, 4
  %v97 = vsel %vm42, 0, %v96
  %v100 = vpack.i.b16 %v89, %v61
  %v101 = vshrl.u32 %v61, 16
  %v102 = vshrl.u32 %v89, 16
  %v103 = vpack.i.b16 %v102, %v101
  %v106 = vpack.i.b16 %v95, %v67
  %v107 = vshrl.u32 %v67, 16
  %v108 = vshrl.u32 %v95, 16
  %v109 = vpack.i.b16 %v108, %v107
  %v112 = vpack.i.b16 %v93, %v65
  %v113 = vshrl.u32 %v65, 16
  %v114 = vshrl.u32 %v93, 16
  %v115 = vpack.i.b16 %v114, %v113
  %v118 = vpack.i.b16 %v97, %v69
  %v119 = vshrl.u32 %v69, 16
  %v120 = vshrl.u32 %v97, 16
  %v121 = vpack.i.b16 %v120, %v119
  %v122 = vld [vmem:[%s1] sm:$0xf]
  %v123 = vld [vmem:[%s1 + $0x4] sm:$0xf]
  %v124 = vld [vmem:[%s1 + $0x8] sm:$0xf]
  %v125 = vld [vmem:[%s1 + $0xc] sm:$0xf]
  %v126 = vld [vmem:[%s1 + $0x10] sm:$0xf]
  %v127 = vld [vmem:[%s1 + $0x14] sm:$0xf]
  %v128 = vld [vmem:[%s1 + $0x18] sm:$0xf]
  %v129 = vld [vmem:[%s1 + $0x1c] sm:$0xf]
  %v130 = vld [vmem:[%s1 + $0x20] sm:$0xf]
  %v131 = vld [vmem:[%s1 + $0x24] sm:$0xf]
  %v132 = vld [vmem:[%s1 + $0x28] sm:$0xf]
  %v133 = vld [vmem:[%s1 + $0x2c] sm:$0xf]
  %v134 = vld [vmem:[%s1 + $0x30] sm:$0xf]
  %v135 = vld [vmem:[%s1 + $0x34] sm:$0xf]
  %v136 = vld [vmem:[%s1 + $0x38] sm:$0xf]
  %v137 = vld [vmem:[%s1 + $0x3c] sm:$0xf]
  %v138 = vld [vmem:[%s4] sm:$0x1]
  %v140 = vperm.slane %v138, 0
  %v142 = vunpack.c.l.b16 %v100
  %v143 = vunpack.c.l.b16 %v103
  %v144 = vunpack.c.l.b16 %v106
  %v145 = vunpack.c.l.b16 %v109
  %v146 = vunpack.c.l.b16 %v112
  %v147 = vunpack.c.l.b16 %v115
  %v148 = vunpack.c.l.b16 %v118
  %v149 = vunpack.c.l.b16 %v121
  %v150 = vpack.c.b16 %v143, %v142
  %v151 = vpack.c.b16 %v145, %v144
  %v152 = vpack.c.b16 %v147, %v146
  %v153 = vpack.c.b16 %v149, %v148
  %v174 = vunpack.c.l.b16 %v122
  %v175 = vunpack.c.l.b16 %v123
  %v176 = vunpack.c.l.b16 %v124
  %v177 = vunpack.c.l.b16 %v125
  %v178 = vunpack.c.l.b16 %v126
  %v179 = vunpack.c.l.b16 %v127
  %v180 = vunpack.c.l.b16 %v128
  %v181 = vunpack.c.l.b16 %v129
  %v182 = vunpack.c.l.b16 %v130
  %v183 = vunpack.c.l.b16 %v131
  %v184 = vunpack.c.l.b16 %v132
  %v185 = vunpack.c.l.b16 %v133
  %v186 = vunpack.c.l.b16 %v134
  %v187 = vunpack.c.l.b16 %v135
  %v188 = vunpack.c.l.b16 %v136
  %v189 = vunpack.c.l.b16 %v137
  %v190 = vpack.c.b16 %v175, %v174
  %v191 = vpack.c.b16 %v177, %v176
  %v192 = vpack.c.b16 %v179, %v178
  %v193 = vpack.c.b16 %v181, %v180
  %v194 = vpack.c.b16 %v183, %v182
  %v195 = vpack.c.b16 %v185, %v184
  %v196 = vpack.c.b16 %v187, %v186
  %v197 = vpack.c.b16 %v189, %v188
  %206 = vmatpush.bf16.msra.mxu0 %v197
  %207 = vmatpush.bf16.msra.mxu0 %v196
  %208 = vmatpush.bf16.msra.mxu0 %v195
  %209 = vmatpush.bf16.msra.mxu0 %v194
  %210 = vmatpush.bf16.msra.mxu0 %v193
  %211 = vmatpush.bf16.msra.mxu0 %v192
  %212 = vmatpush.bf16.msra.mxu0 %v191
  %213 = vmatpush.bf16.msra.mxu0 %v190
  %214 = vmatmul.bf16.gmra.mxu0 %v150
  %v215 = vpop.f32.mrf.mxu0
  %v216 = vadd.f32 %v140, %v215
  %v217 = vpop.f32.mrf.mxu0
  %v218 = vadd.f32 %v140, %v217
  %219 = vmatmul.bf16.gmra.mxu0 %v151
  %v220 = vpop.f32.mrf.mxu0
  %v221 = vadd.f32 %v140, %v220
  %v222 = vpop.f32.mrf.mxu0
  %v223 = vadd.f32 %v140, %v222
  %224 = vmatmul.bf16.gmra.mxu0 %v152
  %v225 = vpop.f32.mrf.mxu0
  %v226 = vadd.f32 %v140, %v225
  %v227 = vpop.f32.mrf.mxu0
  %v228 = vadd.f32 %v140, %v227
  %229 = vmatmul.bf16.gmra.mxu0 %v153
  %v230 = vpop.f32.mrf.mxu0
  %v231 = vadd.f32 %v140, %v230
  %v232 = vpop.f32.mrf.mxu0
  %v233 = vadd.f32 %v140, %v232
  %234 = vdwg.mxu0
  %v235 = vld [vmem:[%s2] sm:$0xf]
  %v236 = vld [vmem:[%s2 + $0x4] sm:$0xf]
  %v237 = vld [vmem:[%s2 + $0x8] sm:$0xf]
  %v238 = vld [vmem:[%s2 + $0xc] sm:$0xf]
  %v239 = vld [vmem:[%s2 + $0x10] sm:$0xf]
  %v240 = vld [vmem:[%s2 + $0x14] sm:$0xf]
  %v241 = vld [vmem:[%s2 + $0x18] sm:$0xf]
  %v242 = vld [vmem:[%s2 + $0x1c] sm:$0xf]
  %v243 = vld [vmem:[%s2 + $0x20] sm:$0xf]
  %v244 = vld [vmem:[%s2 + $0x24] sm:$0xf]
  %v245 = vld [vmem:[%s2 + $0x28] sm:$0xf]
  %v246 = vld [vmem:[%s2 + $0x2c] sm:$0xf]
  %v247 = vld [vmem:[%s2 + $0x30] sm:$0xf]
  %v248 = vld [vmem:[%s2 + $0x34] sm:$0xf]
  %v249 = vld [vmem:[%s2 + $0x38] sm:$0xf]
  %v250 = vld [vmem:[%s2 + $0x3c] sm:$0xf]
  %v251 = vld [vmem:[%s5] sm:$0x1]
  %v253 = vperm.slane %v251, 0
  %v271 = vunpack.c.l.b16 %v235
  %v272 = vunpack.c.l.b16 %v236
  %v273 = vunpack.c.l.b16 %v237
  %v274 = vunpack.c.l.b16 %v238
  %v275 = vunpack.c.l.b16 %v239
  %v276 = vunpack.c.l.b16 %v240
  %v277 = vunpack.c.l.b16 %v241
  %v278 = vunpack.c.l.b16 %v242
  %v279 = vunpack.c.l.b16 %v243
  %v280 = vunpack.c.l.b16 %v244
  %v281 = vunpack.c.l.b16 %v245
  %v282 = vunpack.c.l.b16 %v246
  %v283 = vunpack.c.l.b16 %v247
  %v284 = vunpack.c.l.b16 %v248
  %v285 = vunpack.c.l.b16 %v249
  %v286 = vunpack.c.l.b16 %v250
  %v287 = vpack.c.b16 %v272, %v271
  %v288 = vpack.c.b16 %v274, %v273
  %v289 = vpack.c.b16 %v276, %v275
  %v290 = vpack.c.b16 %v278, %v277
  %v291 = vpack.c.b16 %v280, %v279
  %v292 = vpack.c.b16 %v282, %v281
  %v293 = vpack.c.b16 %v284, %v283
  %v294 = vpack.c.b16 %v286, %v285
  %303 = vmatpush.bf16.msra.mxu0 %v294
  %304 = vmatpush.bf16.msra.mxu0 %v293
  %305 = vmatpush.bf16.msra.mxu0 %v292
  %306 = vmatpush.bf16.msra.mxu0 %v291
  %307 = vmatpush.bf16.msra.mxu0 %v290
  %308 = vmatpush.bf16.msra.mxu0 %v289
  %309 = vmatpush.bf16.msra.mxu0 %v288
  %310 = vmatpush.bf16.msra.mxu0 %v287
  %311 = vmatmul.bf16.gmra.mxu0 %v150
  %v312 = vpop.f32.mrf.mxu0
  %v313 = vadd.f32 %v253, %v312
  %v314 = vpop.f32.mrf.mxu0
  %v315 = vadd.f32 %v253, %v314
  %316 = vmatmul.bf16.gmra.mxu0 %v151
  %v317 = vpop.f32.mrf.mxu0
  %v318 = vadd.f32 %v253, %v317
  %v319 = vpop.f32.mrf.mxu0
  %v320 = vadd.f32 %v253, %v319
  %321 = vmatmul.bf16.gmra.mxu0 %v152
  %v322 = vpop.f32.mrf.mxu0
  %v323 = vadd.f32 %v253, %v322
  %v324 = vpop.f32.mrf.mxu0
  %v325 = vadd.f32 %v253, %v324
  %326 = vmatmul.bf16.gmra.mxu0 %v153
  %v327 = vpop.f32.mrf.mxu0
  %v328 = vadd.f32 %v253, %v327
  %v329 = vpop.f32.mrf.mxu0
  %v330 = vadd.f32 %v253, %v329
  %331 = vdwg.mxu0
  %v332 = vld [vmem:[%s3] sm:$0xf]
  %v333 = vld [vmem:[%s3 + $0x4] sm:$0xf]
  %v334 = vld [vmem:[%s3 + $0x8] sm:$0xf]
  %v335 = vld [vmem:[%s3 + $0xc] sm:$0xf]
  %v336 = vld [vmem:[%s3 + $0x10] sm:$0xf]
  %v337 = vld [vmem:[%s3 + $0x14] sm:$0xf]
  %v338 = vld [vmem:[%s3 + $0x18] sm:$0xf]
  %v339 = vld [vmem:[%s3 + $0x1c] sm:$0xf]
  %v340 = vld [vmem:[%s3 + $0x20] sm:$0xf]
  %v341 = vld [vmem:[%s3 + $0x24] sm:$0xf]
  %v342 = vld [vmem:[%s3 + $0x28] sm:$0xf]
  %v343 = vld [vmem:[%s3 + $0x2c] sm:$0xf]
  %v344 = vld [vmem:[%s3 + $0x30] sm:$0xf]
  %v345 = vld [vmem:[%s3 + $0x34] sm:$0xf]
  %v346 = vld [vmem:[%s3 + $0x38] sm:$0xf]
  %v347 = vld [vmem:[%s3 + $0x3c] sm:$0xf]
  %v348 = vld [vmem:[%s6] sm:$0x1]
  %v350 = vperm.slane %v348, 0
  %v368 = vunpack.c.l.b16 %v332
  %v369 = vunpack.c.l.b16 %v333
  %v370 = vunpack.c.l.b16 %v334
  %v371 = vunpack.c.l.b16 %v335
  %v372 = vunpack.c.l.b16 %v336
  %v373 = vunpack.c.l.b16 %v337
  %v374 = vunpack.c.l.b16 %v338
  %v375 = vunpack.c.l.b16 %v339
  %v376 = vunpack.c.l.b16 %v340
  %v377 = vunpack.c.l.b16 %v341
  %v378 = vunpack.c.l.b16 %v342
  %v379 = vunpack.c.l.b16 %v343
  %v380 = vunpack.c.l.b16 %v344
  %v381 = vunpack.c.l.b16 %v345
  %v382 = vunpack.c.l.b16 %v346
  %v383 = vunpack.c.l.b16 %v347
  %v384 = vpack.c.b16 %v369, %v368
  %v385 = vpack.c.b16 %v371, %v370
  %v386 = vpack.c.b16 %v373, %v372
  %v387 = vpack.c.b16 %v375, %v374
  %v388 = vpack.c.b16 %v377, %v376
  %v389 = vpack.c.b16 %v379, %v378
  %v390 = vpack.c.b16 %v381, %v380
  %v391 = vpack.c.b16 %v383, %v382
  %400 = vmatpush.bf16.msra.mxu0 %v391
  %401 = vmatpush.bf16.msra.mxu0 %v390
  %402 = vmatpush.bf16.msra.mxu0 %v389
  %403 = vmatpush.bf16.msra.mxu0 %v388
  %404 = vmatpush.bf16.msra.mxu0 %v387
  %405 = vmatpush.bf16.msra.mxu0 %v386
  %406 = vmatpush.bf16.msra.mxu0 %v385
  %407 = vmatpush.bf16.msra.mxu0 %v384
  %408 = vmatmul.bf16.gmra.mxu0 %v150
  %v409 = vpop.f32.mrf.mxu0
  %v410 = vadd.f32 %v350, %v409
  %v411 = vpop.f32.mrf.mxu0
  %v412 = vadd.f32 %v350, %v411
  %413 = vmatmul.bf16.gmra.mxu0 %v151
  %v414 = vpop.f32.mrf.mxu0
  %v415 = vadd.f32 %v350, %v414
  %v416 = vpop.f32.mrf.mxu0
  %v417 = vadd.f32 %v350, %v416
  %418 = vmatmul.bf16.gmra.mxu0 %v152
  %v419 = vpop.f32.mrf.mxu0
  %v420 = vadd.f32 %v350, %v419
  %v421 = vpop.f32.mrf.mxu0
  %v422 = vadd.f32 %v350, %v421
  %423 = vmatmul.bf16.gmra.mxu0 %v153
  %v424 = vpop.f32.mrf.mxu0
  %v425 = vadd.f32 %v350, %v424
  %v426 = vpop.f32.mrf.mxu0
  %v427 = vadd.f32 %v350, %v426
  %428 = vdwg.mxu0
  %v429 = vpack.c.bf16 %v216, %v216
  %v430 = vpack.c.bf16 %v218, %v218
  %v431 = vpack.c.bf16 %v221, %v221
  %v432 = vpack.c.bf16 %v223, %v223
  %v433 = vpack.c.bf16 %v226, %v226
  %v434 = vpack.c.bf16 %v228, %v228
  %v435 = vpack.c.bf16 %v231, %v231
  %v436 = vpack.c.bf16 %v233, %v233
  %v437 = vpack.c.bf16 %v313, %v313
  %v438 = vpack.c.bf16 %v315, %v315
  %v439 = vpack.c.bf16 %v318, %v318
  %v440 = vpack.c.bf16 %v320, %v320
  %v441 = vpack.c.bf16 %v323, %v323
  %v442 = vpack.c.bf16 %v325, %v325
  %v443 = vpack.c.bf16 %v328, %v328
  %v444 = vpack.c.bf16 %v330, %v330
  %v445 = vpack.c.bf16 %v410, %v410
  %v446 = vpack.c.bf16 %v412, %v412
  %v447 = vpack.c.bf16 %v415, %v415
  %v448 = vpack.c.bf16 %v417, %v417
  %v449 = vpack.c.bf16 %v420, %v420
  %v450 = vpack.c.bf16 %v422, %v422
  %v451 = vpack.c.bf16 %v425, %v425
  %v452 = vpack.c.bf16 %v427, %v427
  %vm453 = vcmask 64512
  %v455 = vsel %vm453, %v429, 0
  %v458 = vsel %vm453, %v437, 0
  %460 = vmatpush.bf16.xpose.msra.mxu0 0
  %461 = vmatpush.bf16.xpose.msra.mxu0 0
  %462 = vmatpush.bf16.xpose.msra.mxu0 0
  %463 = vmatpush.bf16.xpose.msra.mxu0 0
  %464 = vmatpush.bf16.xpose.msra.mxu0 0
  %465 = vmatpush.bf16.xpose.msra.mxu0 0
  %466 = vmatpush.bf16.xpose.msra.mxu0 0
  %467 = vmatpush.bf16.xpose.msra.mxu0 %v458
  %468 = vmatmul.bf16.gmra.mxu0 %v455
  %v469 = vpop.f32.mrf.mxu0
  %v470 = vadd.f32 0.0, %v469
  %v471 = vpop.f32.mrf.mxu0
  %472 = vdwg.mxu0
  %v474 = vsel %vm453, %v430, 0
  %v477 = vsel %vm453, %v438, 0
  %479 = vmatpush.bf16.xpose.msra.mxu0 0
  %480 = vmatpush.bf16.xpose.msra.mxu0 0
  %481 = vmatpush.bf16.xpose.msra.mxu0 0
  %482 = vmatpush.bf16.xpose.msra.mxu0 0
  %483 = vmatpush.bf16.xpose.msra.mxu0 0
  %484 = vmatpush.bf16.xpose.msra.mxu0 0
  %485 = vmatpush.bf16.xpose.msra.mxu0 0
  %486 = vmatpush.bf16.xpose.msra.mxu0 %v477
  %487 = vmatmul.bf16.gmra.mxu0 %v474
  %v488 = vpop.f32.mrf.mxu0
  %v489 = vadd.f32 0.0, %v488
  %v490 = vpop.f32.mrf.mxu0
  %491 = vdwg.mxu0
  %v493 = vsel %vm453, %v431, 0
  %v496 = vsel %vm453, %v439, 0
  %498 = vmatpush.bf16.xpose.msra.mxu0 0
  %499 = vmatpush.bf16.xpose.msra.mxu0 0
  %500 = vmatpush.bf16.xpose.msra.mxu0 0
  %501 = vmatpush.bf16.xpose.msra.mxu0 0
  %502 = vmatpush.bf16.xpose.msra.mxu0 0
  %503 = vmatpush.bf16.xpose.msra.mxu0 0
  %504 = vmatpush.bf16.xpose.msra.mxu0 0
  %505 = vmatpush.bf16.xpose.msra.mxu0 %v496
  %506 = vmatmul.bf16.gmra.mxu0 %v493
  %v507 = vpop.f32.mrf.mxu0
  %v508 = vadd.f32 0.0, %v507
  %v509 = vpop.f32.mrf.mxu0
  %510 = vdwg.mxu0
  %v512 = vsel %vm453, %v432, 0
  %v515 = vsel %vm453, %v440, 0
  %517 = vmatpush.bf16.xpose.msra.mxu0 0
  %518 = vmatpush.bf16.xpose.msra.mxu0 0
  %519 = vmatpush.bf16.xpose.msra.mxu0 0
  %520 = vmatpush.bf16.xpose.msra.mxu0 0
  %521 = vmatpush.bf16.xpose.msra.mxu0 0
  %522 = vmatpush.bf16.xpose.msra.mxu0 0
  %523 = vmatpush.bf16.xpose.msra.mxu0 0
  %524 = vmatpush.bf16.xpose.msra.mxu0 %v515
  %525 = vmatmul.bf16.gmra.mxu0 %v512
  %v526 = vpop.f32.mrf.mxu0
  %v527 = vadd.f32 0.0, %v526
  %v528 = vpop.f32.mrf.mxu0
  %529 = vdwg.mxu0
  %v531 = vsel %vm453, %v433, 0
  %v534 = vsel %vm453, %v441, 0
  %536 = vmatpush.bf16.xpose.msra.mxu0 0
  %537 = vmatpush.bf16.xpose.msra.mxu0 0
  %538 = vmatpush.bf16.xpose.msra.mxu0 0
  %539 = vmatpush.bf16.xpose.msra.mxu0 0
  %540 = vmatpush.bf16.xpose.msra.mxu0 0
  %541 = vmatpush.bf16.xpose.msra.mxu0 0
  %542 = vmatpush.bf16.xpose.msra.mxu0 0
  %543 = vmatpush.bf16.xpose.msra.mxu0 %v534
  %544 = vmatmul.bf16.gmra.mxu0 %v531
  %v545 = vpop.f32.mrf.mxu0
  %v546 = vadd.f32 0.0, %v545
  %v547 = vpop.f32.mrf.mxu0
  %548 = vdwg.mxu0
  %v550 = vsel %vm453, %v434, 0
  %v553 = vsel %vm453, %v442, 0
  %555 = vmatpush.bf16.xpose.msra.mxu0 0
  %556 = vmatpush.bf16.xpose.msra.mxu0 0
  %557 = vmatpush.bf16.xpose.msra.mxu0 0
  %558 = vmatpush.bf16.xpose.msra.mxu0 0
  %559 = vmatpush.bf16.xpose.msra.mxu0 0
  %560 = vmatpush.bf16.xpose.msra.mxu0 0
  %561 = vmatpush.bf16.xpose.msra.mxu0 0
  %562 = vmatpush.bf16.xpose.msra.mxu0 %v553
  %563 = vmatmul.bf16.gmra.mxu0 %v550
  %v564 = vpop.f32.mrf.mxu0
  %v565 = vadd.f32 0.0, %v564
  %v566 = vpop.f32.mrf.mxu0
  %567 = vdwg.mxu0
  %v569 = vsel %vm453, %v435, 0
  %v572 = vsel %vm453, %v443, 0
  %574 = vmatpush.bf16.xpose.msra.mxu0 0
  %575 = vmatpush.bf16.xpose.msra.mxu0 0
  %576 = vmatpush.bf16.xpose.msra.mxu0 0
  %577 = vmatpush.bf16.xpose.msra.mxu0 0
  %578 = vmatpush.bf16.xpose.msra.mxu0 0
  %579 = vmatpush.bf16.xpose.msra.mxu0 0
  %580 = vmatpush.bf16.xpose.msra.mxu0 0
  %581 = vmatpush.bf16.xpose.msra.mxu0 %v572
  %582 = vmatmul.bf16.gmra.mxu0 %v569
  %v583 = vpop.f32.mrf.mxu0
  %v584 = vadd.f32 0.0, %v583
  %v585 = vpop.f32.mrf.mxu0
  %586 = vdwg.mxu0
  %v588 = vsel %vm453, %v436, 0
  %v591 = vsel %vm453, %v444, 0
  %593 = vmatpush.bf16.xpose.msra.mxu0 0
  %594 = vmatpush.bf16.xpose.msra.mxu0 0
  %595 = vmatpush.bf16.xpose.msra.mxu0 0
  %596 = vmatpush.bf16.xpose.msra.mxu0 0
  %597 = vmatpush.bf16.xpose.msra.mxu0 0
  %598 = vmatpush.bf16.xpose.msra.mxu0 0
  %599 = vmatpush.bf16.xpose.msra.mxu0 0
  %600 = vmatpush.bf16.xpose.msra.mxu0 %v591
  %601 = vmatmul.bf16.gmra.mxu0 %v588
  %v602 = vpop.f32.mrf.mxu0
  %v603 = vadd.f32 0.0, %v602
  %v604 = vpop.f32.mrf.mxu0
  %605 = vdwg.mxu0
  %v606 = vsel %vm453, %v470, -inf
  %607 = vmax.xlane.f32.xlu0 %v606
  %v608 = vpop.xlane.xlu0 %607
  %v609 = vsel %vm453, %v489, -inf
  %610 = vmax.xlane.f32.xlu0 %v609
  %v611 = vpop.xlane.xlu0 %610
  %v612 = vsel %vm453, %v508, -inf
  %613 = vmax.xlane.f32.xlu0 %v612
  %v614 = vpop.xlane.xlu0 %613
  %v615 = vsel %vm453, %v527, -inf
  %616 = vmax.xlane.f32.xlu0 %v615
  %v617 = vpop.xlane.xlu0 %616
  %v618 = vsel %vm453, %v546, -inf
  %619 = vmax.xlane.f32.xlu0 %v618
  %v620 = vpop.xlane.xlu0 %619
  %v621 = vsel %vm453, %v565, -inf
  %622 = vmax.xlane.f32.xlu0 %v621
  %v623 = vpop.xlane.xlu0 %622
  %v624 = vsel %vm453, %v584, -inf
  %625 = vmax.xlane.f32.xlu0 %v624
  %v626 = vpop.xlane.xlu0 %625
  %v627 = vsel %vm453, %v603, -inf
  %628 = vmax.xlane.f32.xlu0 %v627
  %v629 = vpop.xlane.xlu0 %628
  %v630 = vsub.f32 %v470, %v608
  %v631 = vsub.f32 %v489, %v611
  %v632 = vsub.f32 %v508, %v614
  %v633 = vsub.f32 %v527, %v617
  %v634 = vsub.f32 %v546, %v620
  %v635 = vsub.f32 %v565, %v623
  %v636 = vsub.f32 %v584, %v626
  %v637 = vsub.f32 %v603, %v629
  %v638 = vmul.f32 %v630, 1.442695
  %v639 = vpow.pop %v638
  %v640 = vmul.f32 %v631, 1.442695
  %v641 = vpow.pop %v640
  %v642 = vmul.f32 %v632, 1.442695
  %v643 = vpow.pop %v642
  %v644 = vmul.f32 %v633, 1.442695
  %v645 = vpow.pop %v644
  %v646 = vmul.f32 %v634, 1.442695
  %v647 = vpow.pop %v646
  %v648 = vmul.f32 %v635, 1.442695
  %v649 = vpow.pop %v648
  %v650 = vmul.f32 %v636, 1.442695
  %v651 = vpow.pop %v650
  %v652 = vmul.f32 %v637, 1.442695
  %v653 = vpow.pop %v652
  %v654 = vsel %vm453, %v639, 0.0
  %655 = vadd.xlane.f32.xlu0 %v654
  %v656 = vpop.xlane.xlu0 %655
  %v657 = vsel %vm453, %v641, 0.0
  %658 = vadd.xlane.f32.xlu0 %v657
  %v659 = vpop.xlane.xlu0 %658
  %v660 = vsel %vm453, %v643, 0.0
  %661 = vadd.xlane.f32.xlu0 %v660
  %v662 = vpop.xlane.xlu0 %661
  %v663 = vsel %vm453, %v645, 0.0
  %664 = vadd.xlane.f32.xlu0 %v663
  %v665 = vpop.xlane.xlu0 %664
  %v666 = vsel %vm453, %v647, 0.0
  %667 = vadd.xlane.f32.xlu0 %v666
  %v668 = vpop.xlane.xlu0 %667
  %v669 = vsel %vm453, %v649, 0.0
  %670 = vadd.xlane.f32.xlu0 %v669
  %v671 = vpop.xlane.xlu0 %670
  %v672 = vsel %vm453, %v651, 0.0
  %673 = vadd.xlane.f32.xlu0 %v672
  %v674 = vpop.xlane.xlu0 %673
  %v675 = vsel %vm453, %v653, 0.0
  %676 = vadd.xlane.f32.xlu0 %v675
  %v677 = vpop.xlane.xlu0 %676
  %v678 = vrcp.pop %v656
  %v679 = vmul.f32 %v656, %v678
  %v680 = vsub.f32 1.0, %v679
  %v681 = vmul.f32 %v678, %v680
  %v682 = vadd.f32 %v678, %v681
  %vm683 = vweird.f32 %v656
  %vm684 = vweird.f32 %v678
  %vm685 = vmor %vm683, %vm684
  %v686 = vsel %vm685, %v678, %v682
  %v687 = vand.u32 2147483647, %v656
  %vm688 = vcmp.eq.f32.partialorder %v687, 8.507059e+37
  %v689 = vand.u32 %v656, 2147483648
  %v690 = vor.u32 1.1754944e-38, %v689
  %v691 = vsel %vm688, %v690, %v686
  %v692 = vmul.f32 %v639, %v691
  %v693 = vrcp.pop %v659
  %v694 = vmul.f32 %v659, %v693
  %v695 = vsub.f32 1.0, %v694
  %v696 = vmul.f32 %v693, %v695
  %v697 = vadd.f32 %v693, %v696
  %vm698 = vweird.f32 %v659
  %vm699 = vweird.f32 %v693
  %vm700 = vmor %vm698, %vm699
  %v701 = vsel %vm700, %v693, %v697
  %v702 = vand.u32 2147483647, %v659
  %vm703 = vcmp.eq.f32.partialorder %v702, 8.507059e+37
  %v704 = vand.u32 %v659, 2147483648
  %v705 = vor.u32 1.1754944e-38, %v704
  %v706 = vsel %vm703, %v705, %v701
  %v707 = vmul.f32 %v641, %v706
  %v708 = vrcp.pop %v662
  %v709 = vmul.f32 %v662, %v708
  %v710 = vsub.f32 1.0, %v709
  %v711 = vmul.f32 %v708, %v710
  %v712 = vadd.f32 %v708, %v711
  %vm713 = vweird.f32 %v662
  %vm714 = vweird.f32 %v708
  %vm715 = vmor %vm713, %vm714
  %v716 = vsel %vm715, %v708, %v712
  %v717 = vand.u32 2147483647, %v662
  %vm718 = vcmp.eq.f32.partialorder %v717, 8.507059e+37
  %v719 = vand.u32 %v662, 2147483648
  %v720 = vor.u32 1.1754944e-38, %v719
  %v721 = vsel %vm718, %v720, %v716
  %v722 = vmul.f32 %v643, %v721
  %v723 = vrcp.pop %v665
  %v724 = vmul.f32 %v665, %v723
  %v725 = vsub.f32 1.0, %v724
  %v726 = vmul.f32 %v723, %v725
  %v727 = vadd.f32 %v723, %v726
  %vm728 = vweird.f32 %v665
  %vm729 = vweird.f32 %v723
  %vm730 = vmor %vm728, %vm729
  %v731 = vsel %vm730, %v723, %v727
  %v732 = vand.u32 2147483647, %v665
  %vm733 = vcmp.eq.f32.partialorder %v732, 8.507059e+37
  %v734 = vand.u32 %v665, 2147483648
  %v735 = vor.u32 1.1754944e-38, %v734
  %v736 = vsel %vm733, %v735, %v731
  %v737 = vmul.f32 %v645, %v736
  %v738 = vrcp.pop %v668
  %v739 = vmul.f32 %v668, %v738
  %v740 = vsub.f32 1.0, %v739
  %v741 = vmul.f32 %v738, %v740
  %v742 = vadd.f32 %v738, %v741
  %vm743 = vweird.f32 %v668
  %vm744 = vweird.f32 %v738
  %vm745 = vmor %vm743, %vm744
  %v746 = vsel %vm745, %v738, %v742
  %v747 = vand.u32 2147483647, %v668
  %vm748 = vcmp.eq.f32.partialorder %v747, 8.507059e+37
  %v749 = vand.u32 %v668, 2147483648
  %v750 = vor.u32 1.1754944e-38, %v749
  %v751 = vsel %vm748, %v750, %v746
  %v752 = vmul.f32 %v647, %v751
  %v753 = vrcp.pop %v671
  %v754 = vmul.f32 %v671, %v753
  %v755 = vsub.f32 1.0, %v754
  %v756 = vmul.f32 %v753, %v755
  %v757 = vadd.f32 %v753, %v756
  %vm758 = vweird.f32 %v671
  %vm759 = vweird.f32 %v753
  %vm760 = vmor %vm758, %vm759
  %v761 = vsel %vm760, %v753, %v757
  %v762 = vand.u32 2147483647, %v671
  %vm763 = vcmp.eq.f32.partialorder %v762, 8.507059e+37
  %v764 = vand.u32 %v671, 2147483648
  %v765 = vor.u32 1.1754944e-38, %v764
  %v766 = vsel %vm763, %v765, %v761
  %v767 = vmul.f32 %v649, %v766
  %v768 = vrcp.pop %v674
  %v769 = vmul.f32 %v674, %v768
  %v770 = vsub.f32 1.0, %v769
  %v771 = vmul.f32 %v768, %v770
  %v772 = vadd.f32 %v768, %v771
  %vm773 = vweird.f32 %v674
  %vm774 = vweird.f32 %v768
  %vm775 = vmor %vm773, %vm774
  %v776 = vsel %vm775, %v768, %v772
  %v777 = vand.u32 2147483647, %v674
  %vm778 = vcmp.eq.f32.partialorder %v777, 8.507059e+37
  %v779 = vand.u32 %v674, 2147483648
  %v780 = vor.u32 1.1754944e-38, %v779
  %v781 = vsel %vm778, %v780, %v776
  %v782 = vmul.f32 %v651, %v781
  %v783 = vrcp.pop %v677
  %v784 = vmul.f32 %v677, %v783
  %v785 = vsub.f32 1.0, %v784
  %v786 = vmul.f32 %v783, %v785
  %v787 = vadd.f32 %v783, %v786
  %vm788 = vweird.f32 %v677
  %vm789 = vweird.f32 %v783
  %vm790 = vmor %vm788, %vm789
  %v791 = vsel %vm790, %v783, %v787
  %v792 = vand.u32 2147483647, %v677
  %vm793 = vcmp.eq.f32.partialorder %v792, 8.507059e+37
  %v794 = vand.u32 %v677, 2147483648
  %v795 = vor.u32 1.1754944e-38, %v794
  %v796 = vsel %vm793, %v795, %v791
  %v797 = vmul.f32 %v653, %v796
  %v798 = vpack.c.bf16 %v692, %v692
  %v799 = vpack.c.bf16 %v707, %v707
  %v800 = vpack.c.bf16 %v722, %v722
  %v801 = vpack.c.bf16 %v737, %v737
  %v802 = vpack.c.bf16 %v752, %v752
  %v803 = vpack.c.bf16 %v767, %v767
  %v804 = vpack.c.bf16 %v782, %v782
  %v805 = vpack.c.bf16 %v797, %v797
  %v807 = vsel %vm453, %v798, 0
  %vm809 = vcmask 1043456
  %v811 = vsel %vm809, %v445, 0
  %813 = vmatpush.bf16.msra.mxu0 0
  %814 = vmatpush.bf16.msra.mxu0 0
  %815 = vmatpush.bf16.msra.mxu0 0
  %816 = vmatpush.bf16.msra.mxu0 0
  %817 = vmatpush.bf16.msra.mxu0 0
  %818 = vmatpush.bf16.msra.mxu0 0
  %819 = vmatpush.bf16.msra.mxu0 0
  %820 = vmatpush.bf16.msra.mxu0 %v811
  %821 = vmatmul.bf16.gmra.mxu0 %v807
  %v822 = vpop.f32.mrf.mxu0
  %v823 = vadd.f32 0.0, %v822
  %v824 = vpop.f32.mrf.mxu0
  %825 = vdwg.mxu0
  %v827 = vsel %vm453, %v799, 0
  %v830 = vsel %vm809, %v446, 0
  %832 = vmatpush.bf16.msra.mxu0 0
  %833 = vmatpush.bf16.msra.mxu0 0
  %834 = vmatpush.bf16.msra.mxu0 0
  %835 = vmatpush.bf16.msra.mxu0 0
  %836 = vmatpush.bf16.msra.mxu0 0
  %837 = vmatpush.bf16.msra.mxu0 0
  %838 = vmatpush.bf16.msra.mxu0 0
  %839 = vmatpush.bf16.msra.mxu0 %v830
  %840 = vmatmul.bf16.gmra.mxu0 %v827
  %v841 = vpop.f32.mrf.mxu0
  %v842 = vadd.f32 0.0, %v841
  %v843 = vpop.f32.mrf.mxu0
  %844 = vdwg.mxu0
  %v846 = vsel %vm453, %v800, 0
  %v849 = vsel %vm809, %v447, 0
  %851 = vmatpush.bf16.msra.mxu0 0
  %852 = vmatpush.bf16.msra.mxu0 0
  %853 = vmatpush.bf16.msra.mxu0 0
  %854 = vmatpush.bf16.msra.mxu0 0
  %855 = vmatpush.bf16.msra.mxu0 0
  %856 = vmatpush.bf16.msra.mxu0 0
  %857 = vmatpush.bf16.msra.mxu0 0
  %858 = vmatpush.bf16.msra.mxu0 %v849
  %859 = vmatmul.bf16.gmra.mxu0 %v846
  %v860 = vpop.f32.mrf.mxu0
  %v861 = vadd.f32 0.0, %v860
  %v862 = vpop.f32.mrf.mxu0
  %863 = vdwg.mxu0
  %v865 = vsel %vm453, %v801, 0
  %v868 = vsel %vm809, %v448, 0
  %870 = vmatpush.bf16.msra.mxu0 0
  %871 = vmatpush.bf16.msra.mxu0 0
  %872 = vmatpush.bf16.msra.mxu0 0
  %873 = vmatpush.bf16.msra.mxu0 0
  %874 = vmatpush.bf16.msra.mxu0 0
  %875 = vmatpush.bf16.msra.mxu0 0
  %876 = vmatpush.bf16.msra.mxu0 0
  %877 = vmatpush.bf16.msra.mxu0 %v868
  %878 = vmatmul.bf16.gmra.mxu0 %v865
  %v879 = vpop.f32.mrf.mxu0
  %v880 = vadd.f32 0.0, %v879
  %v881 = vpop.f32.mrf.mxu0
  %882 = vdwg.mxu0
  %v884 = vsel %vm453, %v802, 0
  %v887 = vsel %vm809, %v449, 0
  %889 = vmatpush.bf16.msra.mxu0 0
  %890 = vmatpush.bf16.msra.mxu0 0
  %891 = vmatpush.bf16.msra.mxu0 0
  %892 = vmatpush.bf16.msra.mxu0 0
  %893 = vmatpush.bf16.msra.mxu0 0
  %894 = vmatpush.bf16.msra.mxu0 0
  %895 = vmatpush.bf16.msra.mxu0 0
  %896 = vmatpush.bf16.msra.mxu0 %v887
  %897 = vmatmul.bf16.gmra.mxu0 %v884
  %v898 = vpop.f32.mrf.mxu0
  %v899 = vadd.f32 0.0, %v898
  %v900 = vpop.f32.mrf.mxu0
  %901 = vdwg.mxu0
  %v903 = vsel %vm453, %v803, 0
  %v906 = vsel %vm809, %v450, 0
  %908 = vmatpush.bf16.msra.mxu0 0
  %909 = vmatpush.bf16.msra.mxu0 0
  %910 = vmatpush.bf16.msra.mxu0 0
  %911 = vmatpush.bf16.msra.mxu0 0
  %912 = vmatpush.bf16.msra.mxu0 0
  %913 = vmatpush.bf16.msra.mxu0 0
  %914 = vmatpush.bf16.msra.mxu0 0
  %915 = vmatpush.bf16.msra.mxu0 %v906
  %916 = vmatmul.bf16.gmra.mxu0 %v903
  %v917 = vpop.f32.mrf.mxu0
  %v918 = vadd.f32 0.0, %v917
  %v919 = vpop.f32.mrf.mxu0
  %920 = vdwg.mxu0
  %v922 = vsel %vm453, %v804, 0
  %v925 = vsel %vm809, %v451, 0
  %927 = vmatpush.bf16.msra.mxu0 0
  %928 = vmatpush.bf16.msra.mxu0 0
  %929 = vmatpush.bf16.msra.mxu0 0
  %930 = vmatpush.bf16.msra.mxu0 0
  %931 = vmatpush.bf16.msra.mxu0 0
  %932 = vmatpush.bf16.msra.mxu0 0
  %933 = vmatpush.bf16.msra.mxu0 0
  %934 = vmatpush.bf16.msra.mxu0 %v925
  %935 = vmatmul.bf16.gmra.mxu0 %v922
  %v936 = vpop.f32.mrf.mxu0
  %v937 = vadd.f32 0.0, %v936
  %v938 = vpop.f32.mrf.mxu0
  %939 = vdwg.mxu0
  %v941 = vsel %vm453, %v805, 0
  %v944 = vsel %vm809, %v452, 0
  %946 = vmatpush.bf16.msra.mxu0 0
  %947 = vmatpush.bf16.msra.mxu0 0
  %948 = vmatpush.bf16.msra.mxu0 0
  %949 = vmatpush.bf16.msra.mxu0 0
  %950 = vmatpush.bf16.msra.mxu0 0
  %951 = vmatpush.bf16.msra.mxu0 0
  %952 = vmatpush.bf16.msra.mxu0 0
  %953 = vmatpush.bf16.msra.mxu0 %v944
  %954 = vmatmul.bf16.gmra.mxu0 %v941
  %v955 = vpop.f32.mrf.mxu0
  %v956 = vadd.f32 0.0, %v955
  %v957 = vpop.f32.mrf.mxu0
  %958 = vdwg.mxu0
  %v960 = vunpack.c.l.b16 %v429
  %v961 = vpack.c.b16 %v960, %v960
  %962 = vrot.lane.b32.xlu0 %v961, 120
  %v963 = vpop.permute.xlu0 %962
  %v965 = vunpack.c.l.b16 %v437
  %v966 = vpack.c.b16 %v965, %v965
  %967 = vrot.lane.b32.xlu0 %v966, 120
  %v968 = vpop.permute.xlu0 %967
  %v970 = vsel %vm453, %v963, 0
  %v973 = vsel %vm453, %v968, 0
  %975 = vmatpush.bf16.xpose.msra.mxu0 0
  %976 = vmatpush.bf16.xpose.msra.mxu0 0
  %977 = vmatpush.bf16.xpose.msra.mxu0 0
  %978 = vmatpush.bf16.xpose.msra.mxu0 0
  %979 = vmatpush.bf16.xpose.msra.mxu0 0
  %980 = vmatpush.bf16.xpose.msra.mxu0 0
  %981 = vmatpush.bf16.xpose.msra.mxu0 0
  %982 = vmatpush.bf16.xpose.msra.mxu0 %v973
  %983 = vmatmul.bf16.gmra.mxu0 %v970
  %v984 = vpop.f32.mrf.mxu0
  %v985 = vadd.f32 0.0, %v984
  %v986 = vpop.f32.mrf.mxu0
  %987 = vdwg.mxu0
  %v989 = vunpack.c.l.b16 %v430
  %v990 = vpack.c.b16 %v989, %v989
  %991 = vrot.lane.b32.xlu0 %v990, 120
  %v992 = vpop.permute.xlu0 %991
  %v994 = vunpack.c.l.b16 %v438
  %v995 = vpack.c.b16 %v994, %v994
  %996 = vrot.lane.b32.xlu0 %v995, 120
  %v997 = vpop.permute.xlu0 %996
  %v999 = vsel %vm453, %v992, 0
  %v1002 = vsel %vm453, %v997, 0
  %1004 = vmatpush.bf16.xpose.msra.mxu0 0
  %1005 = vmatpush.bf16.xpose.msra.mxu0 0
  %1006 = vmatpush.bf16.xpose.msra.mxu0 0
  %1007 = vmatpush.bf16.xpose.msra.mxu0 0
  %1008 = vmatpush.bf16.xpose.msra.mxu0 0
  %1009 = vmatpush.bf16.xpose.msra.mxu0 0
  %1010 = vmatpush.bf16.xpose.msra.mxu0 0
  %1011 = vmatpush.bf16.xpose.msra.mxu0 %v1002
  %1012 = vmatmul.bf16.gmra.mxu0 %v999
  %v1013 = vpop.f32.mrf.mxu0
  %v1014 = vadd.f32 0.0, %v1013
  %v1015 = vpop.f32.mrf.mxu0
  %1016 = vdwg.mxu0
  %v1018 = vunpack.c.l.b16 %v431
  %v1019 = vpack.c.b16 %v1018, %v1018
  %1020 = vrot.lane.b32.xlu0 %v1019, 120
  %v1021 = vpop.permute.xlu0 %1020
  %v1023 = vunpack.c.l.b16 %v439
  %v1024 = vpack.c.b16 %v1023, %v1023
  %1025 = vrot.lane.b32.xlu0 %v1024, 120
  %v1026 = vpop.permute.xlu0 %1025
  %v1028 = vsel %vm453, %v1021, 0
  %v1031 = vsel %vm453, %v1026, 0
  %1033 = vmatpush.bf16.xpose.msra.mxu0 0
  %1034 = vmatpush.bf16.xpose.msra.mxu0 0
  %1035 = vmatpush.bf16.xpose.msra.mxu0 0
  %1036 = vmatpush.bf16.xpose.msra.mxu0 0
  %1037 = vmatpush.bf16.xpose.msra.mxu0 0
  %1038 = vmatpush.bf16.xpose.msra.mxu0 0
  %1039 = vmatpush.bf16.xpose.msra.mxu0 0
  %1040 = vmatpush.bf16.xpose.msra.mxu0 %v1031
  %1041 = vmatmul.bf16.gmra.mxu0 %v1028
  %v1042 = vpop.f32.mrf.mxu0
  %v1043 = vadd.f32 0.0, %v1042
  %v1044 = vpop.f32.mrf.mxu0
  %1045 = vdwg.mxu0
  %v1047 = vunpack.c.l.b16 %v432
  %v1048 = vpack.c.b16 %v1047, %v1047
  %1049 = vrot.lane.b32.xlu0 %v1048, 120
  %v1050 = vpop.permute.xlu0 %1049
  %v1052 = vunpack.c.l.b16 %v440
  %v1053 = vpack.c.b16 %v1052, %v1052
  %1054 = vrot.lane.b32.xlu0 %v1053, 120
  %v1055 = vpop.permute.xlu0 %1054
  %v1057 = vsel %vm453, %v1050, 0
  %v1060 = vsel %vm453, %v1055, 0
  %1062 = vmatpush.bf16.xpose.msra.mxu0 0
  %1063 = vmatpush.bf16.xpose.msra.mxu0 0
  %1064 = vmatpush.bf16.xpose.msra.mxu0 0
  %1065 = vmatpush.bf16.xpose.msra.mxu0 0
  %1066 = vmatpush.bf16.xpose.msra.mxu0 0
  %1067 = vmatpush.bf16.xpose.msra.mxu0 0
  %1068 = vmatpush.bf16.xpose.msra.mxu0 0
  %1069 = vmatpush.bf16.xpose.msra.mxu0 %v1060
  %1070 = vmatmul.bf16.gmra.mxu0 %v1057
  %v1071 = vpop.f32.mrf.mxu0
  %v1072 = vadd.f32 0.0, %v1071
  %v1073 = vpop.f32.mrf.mxu0
  %1074 = vdwg.mxu0
  %v1076 = vunpack.c.l.b16 %v433
  %v1077 = vpack.c.b16 %v1076, %v1076
  %1078 = vrot.lane.b32.xlu0 %v1077, 120
  %v1079 = vpop.permute.xlu0 %1078
  %v1081 = vunpack.c.l.b16 %v441
  %v1082 = vpack.c.b16 %v1081, %v1081
  %1083 = vrot.lane.b32.xlu0 %v1082, 120
  %v1084 = vpop.permute.xlu0 %1083
  %v1086 = vsel %vm453, %v1079, 0
  %v1089 = vsel %vm453, %v1084, 0
  %1091 = vmatpush.bf16.xpose.msra.mxu0 0
  %1092 = vmatpush.bf16.xpose.msra.mxu0 0
  %1093 = vmatpush.bf16.xpose.msra.mxu0 0
  %1094 = vmatpush.bf16.xpose.msra.mxu0 0
  %1095 = vmatpush.bf16.xpose.msra.mxu0 0
  %1096 = vmatpush.bf16.xpose.msra.mxu0 0
  %1097 = vmatpush.bf16.xpose.msra.mxu0 0
  %1098 = vmatpush.bf16.xpose.msra.mxu0 %v1089
  %1099 = vmatmul.bf16.gmra.mxu0 %v1086
  %v1100 = vpop.f32.mrf.mxu0
  %v1101 = vadd.f32 0.0, %v1100
  %v1102 = vpop.f32.mrf.mxu0
  %1103 = vdwg.mxu0
  %v1105 = vunpack.c.l.b16 %v434
  %v1106 = vpack.c.b16 %v1105, %v1105
  %1107 = vrot.lane.b32.xlu0 %v1106, 120
  %v1108 = vpop.permute.xlu0 %1107
  %v1110 = vunpack.c.l.b16 %v442
  %v1111 = vpack.c.b16 %v1110, %v1110
  %1112 = vrot.lane.b32.xlu0 %v1111, 120
  %v1113 = vpop.permute.xlu0 %1112
  %v1115 = vsel %vm453, %v1108, 0
  %v1118 = vsel %vm453, %v1113, 0
  %1120 = vmatpush.bf16.xpose.msra.mxu0 0
  %1121 = vmatpush.bf16.xpose.msra.mxu0 0
  %1122 = vmatpush.bf16.xpose.msra.mxu0 0
  %1123 = vmatpush.bf16.xpose.msra.mxu0 0
  %1124 = vmatpush.bf16.xpose.msra.mxu0 0
  %1125 = vmatpush.bf16.xpose.msra.mxu0 0
  %1126 = vmatpush.bf16.xpose.msra.mxu0 0
  %1127 = vmatpush.bf16.xpose.msra.mxu0 %v1118
  %1128 = vmatmul.bf16.gmra.mxu0 %v1115
  %v1129 = vpop.f32.mrf.mxu0
  %v1130 = vadd.f32 0.0, %v1129
  %v1131 = vpop.f32.mrf.mxu0
  %1132 = vdwg.mxu0
  %v1134 = vunpack.c.l.b16 %v435
  %v1135 = vpack.c.b16 %v1134, %v1134
  %1136 = vrot.lane.b32.xlu0 %v1135, 120
  %v1137 = vpop.permute.xlu0 %1136
  %v1139 = vunpack.c.l.b16 %v443
  %v1140 = vpack.c.b16 %v1139, %v1139
  %1141 = vrot.lane.b32.xlu0 %v1140, 120
  %v1142 = vpop.permute.xlu0 %1141
  %v1144 = vsel %vm453, %v1137, 0
  %v1147 = vsel %vm453, %v1142, 0
  %1149 = vmatpush.bf16.xpose.msra.mxu0 0
  %1150 = vmatpush.bf16.xpose.msra.mxu0 0
  %1151 = vmatpush.bf16.xpose.msra.mxu0 0
  %1152 = vmatpush.bf16.xpose.msra.mxu0 0
  %1153 = vmatpush.bf16.xpose.msra.mxu0 0
  %1154 = vmatpush.bf16.xpose.msra.mxu0 0
  %1155 = vmatpush.bf16.xpose.msra.mxu0 0
  %1156 = vmatpush.bf16.xpose.msra.mxu0 %v1147
  %1157 = vmatmul.bf16.gmra.mxu0 %v1144
  %v1158 = vpop.f32.mrf.mxu0
  %v1159 = vadd.f32 0.0, %v1158
  %v1160 = vpop.f32.mrf.mxu0
  %1161 = vdwg.mxu0
  %v1163 = vunpack.c.l.b16 %v436
  %v1164 = vpack.c.b16 %v1163, %v1163
  %1165 = vrot.lane.b32.xlu0 %v1164, 120
  %v1166 = vpop.permute.xlu0 %1165
  %v1168 = vunpack.c.l.b16 %v444
  %v1169 = vpack.c.b16 %v1168, %v1168
  %1170 = vrot.lane.b32.xlu0 %v1169, 120
  %v1171 = vpop.permute.xlu0 %1170
  %v1173 = vsel %vm453, %v1166, 0
  %v1176 = vsel %vm453, %v1171, 0
  %1178 = vmatpush.bf16.xpose.msra.mxu0 0
  %1179 = vmatpush.bf16.xpose.msra.mxu0 0
  %1180 = vmatpush.bf16.xpose.msra.mxu0 0
  %1181 = vmatpush.bf16.xpose.msra.mxu0 0
  %1182 = vmatpush.bf16.xpose.msra.mxu0 0
  %1183 = vmatpush.bf16.xpose.msra.mxu0 0
  %1184 = vmatpush.bf16.xpose.msra.mxu0 0
  %1185 = vmatpush.bf16.xpose.msra.mxu0 %v1176
  %1186 = vmatmul.bf16.gmra.mxu0 %v1173
  %v1187 = vpop.f32.mrf.mxu0
  %v1188 = vadd.f32 0.0, %v1187
  %v1189 = vpop.f32.mrf.mxu0
  %1190 = vdwg.mxu0
  %v1191 = vsel %vm453, %v985, -inf
  %1192 = vmax.xlane.f32.xlu0 %v1191
  %v1193 = vpop.xlane.xlu0 %1192
  %v1194 = vsel %vm453, %v1014, -inf
  %1195 = vmax.xlane.f32.xlu0 %v1194
  %v1196 = vpop.xlane.xlu0 %1195
  %v1197 = vsel %vm453, %v1043, -inf
  %1198 = vmax.xlane.f32.xlu0 %v1197
  %v1199 = vpop.xlane.xlu0 %1198
  %v1200 = vsel %vm453, %v1072, -inf
  %1201 = vmax.xlane.f32.xlu0 %v1200
  %v1202 = vpop.xlane.xlu0 %1201
  %v1203 = vsel %vm453, %v1101, -inf
  %1204 = vmax.xlane.f32.xlu0 %v1203
  %v1205 = vpop.xlane.xlu0 %1204
  %v1206 = vsel %vm453, %v1130, -inf
  %1207 = vmax.xlane.f32.xlu0 %v1206
  %v1208 = vpop.xlane.xlu0 %1207
  %v1209 = vsel %vm453, %v1159, -inf
  %1210 = vmax.xlane.f32.xlu0 %v1209
  %v1211 = vpop.xlane.xlu0 %1210
  %v1212 = vsel %vm453, %v1188, -inf
  %1213 = vmax.xlane.f32.xlu0 %v1212
  %v1214 = vpop.xlane.xlu0 %1213
  %v1215 = vsub.f32 %v985, %v1193
  %v1216 = vsub.f32 %v1014, %v1196
  %v1217 = vsub.f32 %v1043, %v1199
  %v1218 = vsub.f32 %v1072, %v1202
  %v1219 = vsub.f32 %v1101, %v1205
  %v1220 = vsub.f32 %v1130, %v1208
  %v1221 = vsub.f32 %v1159, %v1211
  %v1222 = vsub.f32 %v1188, %v1214
  %v1223 = vmul.f32 %v1215, 1.442695
  %v1224 = vpow.pop %v1223
  %v1225 = vmul.f32 %v1216, 1.442695
  %v1226 = vpow.pop %v1225
  %v1227 = vmul.f32 %v1217, 1.442695
  %v1228 = vpow.pop %v1227
  %v1229 = vmul.f32 %v1218, 1.442695
  %v1230 = vpow.pop %v1229
  %v1231 = vmul.f32 %v1219, 1.442695
  %v1232 = vpow.pop %v1231
  %v1233 = vmul.f32 %v1220, 1.442695
  %v1234 = vpow.pop %v1233
  %v1235 = vmul.f32 %v1221, 1.442695
  %v1236 = vpow.pop %v1235
  %v1237 = vmul.f32 %v1222, 1.442695
  %v1238 = vpow.pop %v1237
  %v1239 = vsel %vm453, %v1224, 0.0
  %1240 = vadd.xlane.f32.xlu0 %v1239
  %v1241 = vpop.xlane.xlu0 %1240
  %v1242 = vsel %vm453, %v1226, 0.0
  %1243 = vadd.xlane.f32.xlu0 %v1242
  %v1244 = vpop.xlane.xlu0 %1243
  %v1245 = vsel %vm453, %v1228, 0.0
  %1246 = vadd.xlane.f32.xlu0 %v1245
  %v1247 = vpop.xlane.xlu0 %1246
  %v1248 = vsel %vm453, %v1230, 0.0
  %1249 = vadd.xlane.f32.xlu0 %v1248
  %v1250 = vpop.xlane.xlu0 %1249
  %v1251 = vsel %vm453, %v1232, 0.0
  %1252 = vadd.xlane.f32.xlu0 %v1251
  %v1253 = vpop.xlane.xlu0 %1252
  %v1254 = vsel %vm453, %v1234, 0.0
  %1255 = vadd.xlane.f32.xlu0 %v1254
  %v1256 = vpop.xlane.xlu0 %1255
  %v1257 = vsel %vm453, %v1236, 0.0
  %1258 = vadd.xlane.f32.xlu0 %v1257
  %v1259 = vpop.xlane.xlu0 %1258
  %v1260 = vsel %vm453, %v1238, 0.0
  %1261 = vadd.xlane.f32.xlu0 %v1260
  %v1262 = vpop.xlane.xlu0 %1261
  %v1263 = vrcp.pop %v1241
  %v1264 = vmul.f32 %v1241, %v1263
  %v1265 = vsub.f32 1.0, %v1264
  %v1266 = vmul.f32 %v1263, %v1265
  %v1267 = vadd.f32 %v1263, %v1266
  %vm1268 = vweird.f32 %v1241
  %vm1269 = vweird.f32 %v1263
  %vm1270 = vmor %vm1268, %vm1269
  %v1271 = vsel %vm1270, %v1263, %v1267
  %v1272 = vand.u32 2147483647, %v1241
  %vm1273 = vcmp.eq.f32.partialorder %v1272, 8.507059e+37
  %v1274 = vand.u32 %v1241, 2147483648
  %v1275 = vor.u32 1.1754944e-38, %v1274
  %v1276 = vsel %vm1273, %v1275, %v1271
  %v1277 = vmul.f32 %v1224, %v1276
  %v1278 = vrcp.pop %v1244
  %v1279 = vmul.f32 %v1244, %v1278
  %v1280 = vsub.f32 1.0, %v1279
  %v1281 = vmul.f32 %v1278, %v1280
  %v1282 = vadd.f32 %v1278, %v1281
  %vm1283 = vweird.f32 %v1244
  %vm1284 = vweird.f32 %v1278
  %vm1285 = vmor %vm1283, %vm1284
  %v1286 = vsel %vm1285, %v1278, %v1282
  %v1287 = vand.u32 2147483647, %v1244
  %vm1288 = vcmp.eq.f32.partialorder %v1287, 8.507059e+37
  %v1289 = vand.u32 %v1244, 2147483648
  %v1290 = vor.u32 1.1754944e-38, %v1289
  %v1291 = vsel %vm1288, %v1290, %v1286
  %v1292 = vmul.f32 %v1226, %v1291
  %v1293 = vrcp.pop %v1247
  %v1294 = vmul.f32 %v1247, %v1293
  %v1295 = vsub.f32 1.0, %v1294
  %v1296 = vmul.f32 %v1293, %v1295
  %v1297 = vadd.f32 %v1293, %v1296
  %vm1298 = vweird.f32 %v1247
  %vm1299 = vweird.f32 %v1293
  %vm1300 = vmor %vm1298, %vm1299
  %v1301 = vsel %vm1300, %v1293, %v1297
  %v1302 = vand.u32 2147483647, %v1247
  %vm1303 = vcmp.eq.f32.partialorder %v1302, 8.507059e+37
  %v1304 = vand.u32 %v1247, 2147483648
  %v1305 = vor.u32 1.1754944e-38, %v1304
  %v1306 = vsel %vm1303, %v1305, %v1301
  %v1307 = vmul.f32 %v1228, %v1306
  %v1308 = vrcp.pop %v1250
  %v1309 = vmul.f32 %v1250, %v1308
  %v1310 = vsub.f32 1.0, %v1309
  %v1311 = vmul.f32 %v1308, %v1310
  %v1312 = vadd.f32 %v1308, %v1311
  %vm1313 = vweird.f32 %v1250
  %vm1314 = vweird.f32 %v1308
  %vm1315 = vmor %vm1313, %vm1314
  %v1316 = vsel %vm1315, %v1308, %v1312
  %v1317 = vand.u32 2147483647, %v1250
  %vm1318 = vcmp.eq.f32.partialorder %v1317, 8.507059e+37
  %v1319 = vand.u32 %v1250, 2147483648
  %v1320 = vor.u32 1.1754944e-38, %v1319
  %v1321 = vsel %vm1318, %v1320, %v1316
  %v1322 = vmul.f32 %v1230, %v1321
  %v1323 = vrcp.pop %v1253
  %v1324 = vmul.f32 %v1253, %v1323
  %v1325 = vsub.f32 1.0, %v1324
  %v1326 = vmul.f32 %v1323, %v1325
  %v1327 = vadd.f32 %v1323, %v1326
  %vm1328 = vweird.f32 %v1253
  %vm1329 = vweird.f32 %v1323
  %vm1330 = vmor %vm1328, %vm1329
  %v1331 = vsel %vm1330, %v1323, %v1327
  %v1332 = vand.u32 2147483647, %v1253
  %vm1333 = vcmp.eq.f32.partialorder %v1332, 8.507059e+37
  %v1334 = vand.u32 %v1253, 2147483648
  %v1335 = vor.u32 1.1754944e-38, %v1334
  %v1336 = vsel %vm1333, %v1335, %v1331
  %v1337 = vmul.f32 %v1232, %v1336
  %v1338 = vrcp.pop %v1256
  %v1339 = vmul.f32 %v1256, %v1338
  %v1340 = vsub.f32 1.0, %v1339
  %v1341 = vmul.f32 %v1338, %v1340
  %v1342 = vadd.f32 %v1338, %v1341
  %vm1343 = vweird.f32 %v1256
  %vm1344 = vweird.f32 %v1338
  %vm1345 = vmor %vm1343, %vm1344
  %v1346 = vsel %vm1345, %v1338, %v1342
  %v1347 = vand.u32 2147483647, %v1256
  %vm1348 = vcmp.eq.f32.partialorder %v1347, 8.507059e+37
  %v1349 = vand.u32 %v1256, 2147483648
  %v1350 = vor.u32 1.1754944e-38, %v1349
  %v1351 = vsel %vm1348, %v1350, %v1346
  %v1352 = vmul.f32 %v1234, %v1351
  %v1353 = vrcp.pop %v1259
  %v1354 = vmul.f32 %v1259, %v1353
  %v1355 = vsub.f32 1.0, %v1354
  %v1356 = vmul.f32 %v1353, %v1355
  %v1357 = vadd.f32 %v1353, %v1356
  %vm1358 = vweird.f32 %v1259
  %vm1359 = vweird.f32 %v1353
  %vm1360 = vmor %vm1358, %vm1359
  %v1361 = vsel %vm1360, %v1353, %v1357
  %v1362 = vand.u32 2147483647, %v1259
  %vm1363 = vcmp.eq.f32.partialorder %v1362, 8.507059e+37
  %v1364 = vand.u32 %v1259, 2147483648
  %v1365 = vor.u32 1.1754944e-38, %v1364
  %v1366 = vsel %vm1363, %v1365, %v1361
  %v1367 = vmul.f32 %v1236, %v1366
  %v1368 = vrcp.pop %v1262
  %v1369 = vmul.f32 %v1262, %v1368
  %v1370 = vsub.f32 1.0, %v1369
  %v1371 = vmul.f32 %v1368, %v1370
  %v1372 = vadd.f32 %v1368, %v1371
  %vm1373 = vweird.f32 %v1262
  %vm1374 = vweird.f32 %v1368
  %vm1375 = vmor %vm1373, %vm1374
  %v1376 = vsel %vm1375, %v1368, %v1372
  %v1377 = vand.u32 2147483647, %v1262
  %vm1378 = vcmp.eq.f32.partialorder %v1377, 8.507059e+37
  %v1379 = vand.u32 %v1262, 2147483648
  %v1380 = vor.u32 1.1754944e-38, %v1379
  %v1381 = vsel %vm1378, %v1380, %v1376
  %v1382 = vmul.f32 %v1238, %v1381
  %v1383 = vpack.c.bf16 %v1277, %v1277
  %v1384 = vpack.c.bf16 %v1292, %v1292
  %v1385 = vpack.c.bf16 %v1307, %v1307
  %v1386 = vpack.c.bf16 %v1322, %v1322
  %v1387 = vpack.c.bf16 %v1337, %v1337
  %v1388 = vpack.c.bf16 %v1352, %v1352
  %v1389 = vpack.c.bf16 %v1367, %v1367
  %v1390 = vpack.c.bf16 %v1382, %v1382
  %v1392 = vunpack.c.l.b16 %v445
  %v1393 = vpack.c.b16 %v1392, %v1392
  %1394 = vrot.lane.b32.xlu0 %v1393, 120
  %v1395 = vpop.permute.xlu0 %1394
  %v1397 = vsel %vm453, %v1383, 0
  %v1400 = vsel %vm809, %v1395, 0
  %1402 = vmatpush.bf16.msra.mxu0 0
  %1403 = vmatpush.bf16.msra.mxu0 0
  %1404 = vmatpush.bf16.msra.mxu0 0
  %1405 = vmatpush.bf16.msra.mxu0 0
  %1406 = vmatpush.bf16.msra.mxu0 0
  %1407 = vmatpush.bf16.msra.mxu0 0
  %1408 = vmatpush.bf16.msra.mxu0 0
  %1409 = vmatpush.bf16.msra.mxu0 %v1400
  %1410 = vmatmul.bf16.gmra.mxu0 %v1397
  %v1411 = vpop.f32.mrf.mxu0
  %v1412 = vadd.f32 0.0, %v1411
  %v1413 = vpop.f32.mrf.mxu0
  %1414 = vdwg.mxu0
  %v1416 = vunpack.c.l.b16 %v446
  %v1417 = vpack.c.b16 %v1416, %v1416
  %1418 = vrot.lane.b32.xlu0 %v1417, 120
  %v1419 = vpop.permute.xlu0 %1418
  %v1421 = vsel %vm453, %v1384, 0
  %v1424 = vsel %vm809, %v1419, 0
  %1426 = vmatpush.bf16.msra.mxu0 0
  %1427 = vmatpush.bf16.msra.mxu0 0
  %1428 = vmatpush.bf16.msra.mxu0 0
  %1429 = vmatpush.bf16.msra.mxu0 0
  %1430 = vmatpush.bf16.msra.mxu0 0
  %1431 = vmatpush.bf16.msra.mxu0 0
  %1432 = vmatpush.bf16.msra.mxu0 0
  %1433 = vmatpush.bf16.msra.mxu0 %v1424
  %1434 = vmatmul.bf16.gmra.mxu0 %v1421
  %v1435 = vpop.f32.mrf.mxu0
  %v1436 = vadd.f32 0.0, %v1435
  %v1437 = vpop.f32.mrf.mxu0
  %1438 = vdwg.mxu0
  %v1440 = vunpack.c.l.b16 %v447
  %v1441 = vpack.c.b16 %v1440, %v1440
  %1442 = vrot.lane.b32.xlu0 %v1441, 120
  %v1443 = vpop.permute.xlu0 %1442
  %v1445 = vsel %vm453, %v1385, 0
  %v1448 = vsel %vm809, %v1443, 0
  %1450 = vmatpush.bf16.msra.mxu0 0
  %1451 = vmatpush.bf16.msra.mxu0 0
  %1452 = vmatpush.bf16.msra.mxu0 0
  %1453 = vmatpush.bf16.msra.mxu0 0
  %1454 = vmatpush.bf16.msra.mxu0 0
  %1455 = vmatpush.bf16.msra.mxu0 0
  %1456 = vmatpush.bf16.msra.mxu0 0
  %1457 = vmatpush.bf16.msra.mxu0 %v1448
  %1458 = vmatmul.bf16.gmra.mxu0 %v1445
  %v1459 = vpop.f32.mrf.mxu0
  %v1460 = vadd.f32 0.0, %v1459
  %v1461 = vpop.f32.mrf.mxu0
  %1462 = vdwg.mxu0
  %v1464 = vunpack.c.l.b16 %v448
  %v1465 = vpack.c.b16 %v1464, %v1464
  %1466 = vrot.lane.b32.xlu0 %v1465, 120
  %v1467 = vpop.permute.xlu0 %1466
  %v1469 = vsel %vm453, %v1386, 0
  %v1472 = vsel %vm809, %v1467, 0
  %1474 = vmatpush.bf16.msra.mxu0 0
  %1475 = vmatpush.bf16.msra.mxu0 0
  %1476 = vmatpush.bf16.msra.mxu0 0
  %1477 = vmatpush.bf16.msra.mxu0 0
  %1478 = vmatpush.bf16.msra.mxu0 0
  %1479 = vmatpush.bf16.msra.mxu0 0
  %1480 = vmatpush.bf16.msra.mxu0 0
  %1481 = vmatpush.bf16.msra.mxu0 %v1472
  %1482 = vmatmul.bf16.gmra.mxu0 %v1469
  %v1483 = vpop.f32.mrf.mxu0
  %v1484 = vadd.f32 0.0, %v1483
  %v1485 = vpop.f32.mrf.mxu0
  %1486 = vdwg.mxu0
  %v1488 = vunpack.c.l.b16 %v449
  %v1489 = vpack.c.b16 %v1488, %v1488
  %1490 = vrot.lane.b32.xlu0 %v1489, 120
  %v1491 = vpop.permute.xlu0 %1490
  %v1493 = vsel %vm453, %v1387, 0
  %v1496 = vsel %vm809, %v1491, 0
  %1498 = vmatpush.bf16.msra.mxu0 0
  %1499 = vmatpush.bf16.msra.mxu0 0
  %1500 = vmatpush.bf16.msra.mxu0 0
  %1501 = vmatpush.bf16.msra.mxu0 0
  %1502 = vmatpush.bf16.msra.mxu0 0
  %1503 = vmatpush.bf16.msra.mxu0 0
  %1504 = vmatpush.bf16.msra.mxu0 0
  %1505 = vmatpush.bf16.msra.mxu0 %v1496
  %1506 = vmatmul.bf16.gmra.mxu0 %v1493
  %v1507 = vpop.f32.mrf.mxu0
  %v1508 = vadd.f32 0.0, %v1507
  %v1509 = vpop.f32.mrf.mxu0
  %1510 = vdwg.mxu0
  %v1512 = vunpack.c.l.b16 %v450
  %v1513 = vpack.c.b16 %v1512, %v1512
  %1514 = vrot.lane.b32.xlu0 %v1513, 120
  %v1515 = vpop.permute.xlu0 %1514
  %v1517 = vsel %vm453, %v1388, 0
  %v1520 = vsel %vm809, %v1515, 0
  %1522 = vmatpush.bf16.msra.mxu0 0
  %1523 = vmatpush.bf16.msra.mxu0 0
  %1524 = vmatpush.bf16.msra.mxu0 0
  %1525 = vmatpush.bf16.msra.mxu0 0
  %1526 = vmatpush.bf16.msra.mxu0 0
  %1527 = vmatpush.bf16.msra.mxu0 0
  %1528 = vmatpush.bf16.msra.mxu0 0
  %1529 = vmatpush.bf16.msra.mxu0 %v1520
  %1530 = vmatmul.bf16.gmra.mxu0 %v1517
  %v1531 = vpop.f32.mrf.mxu0
  %v1532 = vadd.f32 0.0, %v1531
  %v1533 = vpop.f32.mrf.mxu0
  %1534 = vdwg.mxu0
  %v1536 = vunpack.c.l.b16 %v451
  %v1537 = vpack.c.b16 %v1536, %v1536
  %1538 = vrot.lane.b32.xlu0 %v1537, 120
  %v1539 = vpop.permute.xlu0 %1538
  %v1541 = vsel %vm453, %v1389, 0
  %v1544 = vsel %vm809, %v1539, 0
  %1546 = vmatpush.bf16.msra.mxu0 0
  %1547 = vmatpush.bf16.msra.mxu0 0
  %1548 = vmatpush.bf16.msra.mxu0 0
  %1549 = vmatpush.bf16.msra.mxu0 0
  %1550 = vmatpush.bf16.msra.mxu0 0
  %1551 = vmatpush.bf16.msra.mxu0 0
  %1552 = vmatpush.bf16.msra.mxu0 0
  %1553 = vmatpush.bf16.msra.mxu0 %v1544
  %1554 = vmatmul.bf16.gmra.mxu0 %v1541
  %v1555 = vpop.f32.mrf.mxu0
  %v1556 = vadd.f32 0.0, %v1555
  %v1557 = vpop.f32.mrf.mxu0
  %1558 = vdwg.mxu0
  %v1560 = vunpack.c.l.b16 %v452
  %v1561 = vpack.c.b16 %v1560, %v1560
  %1562 = vrot.lane.b32.xlu0 %v1561, 120
  %v1563 = vpop.permute.xlu0 %1562
  %v1565 = vsel %vm453, %v1390, 0
  %v1568 = vsel %vm809, %v1563, 0
  %1570 = vmatpush.bf16.msra.mxu0 0
  %1571 = vmatpush.bf16.msra.mxu0 0
  %1572 = vmatpush.bf16.msra.mxu0 0
  %1573 = vmatpush.bf16.msra.mxu0 0
  %1574 = vmatpush.bf16.msra.mxu0 0
  %1575 = vmatpush.bf16.msra.mxu0 0
  %1576 = vmatpush.bf16.msra.mxu0 0
  %1577 = vmatpush.bf16.msra.mxu0 %v1568
  %1578 = vmatmul.bf16.gmra.mxu0 %v1565
  %v1579 = vpop.f32.mrf.mxu0
  %v1580 = vadd.f32 0.0, %v1579
  %v1581 = vpop.f32.mrf.mxu0
  %1582 = vdwg.mxu0
  %1583 = vrot.lane.b32.xlu0 %v961, 112
  %v1584 = vpop.permute.xlu0 %1583
  %1585 = vrot.lane.b32.xlu0 %v966, 112
  %v1586 = vpop.permute.xlu0 %1585
  %v1588 = vsel %vm453, %v1584, 0
  %v1591 = vsel %vm453, %v1586, 0
  %1593 = vmatpush.bf16.xpose.msra.mxu0 0
  %1594 = vmatpush.bf16.xpose.msra.mxu0 0
  %1595 = vmatpush.bf16.xpose.msra.mxu0 0
  %1596 = vmatpush.bf16.xpose.msra.mxu0 0
  %1597 = vmatpush.bf16.xpose.msra.mxu0 0
  %1598 = vmatpush.bf16.xpose.msra.mxu0 0
  %1599 = vmatpush.bf16.xpose.msra.mxu0 0
  %1600 = vmatpush.bf16.xpose.msra.mxu0 %v1591
  %1601 = vmatmul.bf16.gmra.mxu0 %v1588
  %v1602 = vpop.f32.mrf.mxu0
  %v1603 = vadd.f32 0.0, %v1602
  %v1604 = vpop.f32.mrf.mxu0
  %1605 = vdwg.mxu0
  %1606 = vrot.lane.b32.xlu0 %v990, 112
  %v1607 = vpop.permute.xlu0 %1606
  %1608 = vrot.lane.b32.xlu0 %v995, 112
  %v1609 = vpop.permute.xlu0 %1608
  %v1611 = vsel %vm453, %v1607, 0
  %v1614 = vsel %vm453, %v1609, 0
  %1616 = vmatpush.bf16.xpose.msra.mxu0 0
  %1617 = vmatpush.bf16.xpose.msra.mxu0 0
  %1618 = vmatpush.bf16.xpose.msra.mxu0 0
  %1619 = vmatpush.bf16.xpose.msra.mxu0 0
  %1620 = vmatpush.bf16.xpose.msra.mxu0 0
  %1621 = vmatpush.bf16.xpose.msra.mxu0 0
  %1622 = vmatpush.bf16.xpose.msra.mxu0 0
  %1623 = vmatpush.bf16.xpose.msra.mxu0 %v1614
  %1624 = vmatmul.bf16.gmra.mxu0 %v1611
  %v1625 = vpop.f32.mrf.mxu0
  %v1626 = vadd.f32 0.0, %v1625
  %v1627 = vpop.f32.mrf.mxu0
  %1628 = vdwg.mxu0
  %1629 = vrot.lane.b32.xlu0 %v1019, 112
  %v1630 = vpop.permute.xlu0 %1629
  %1631 = vrot.lane.b32.xlu0 %v1024, 112
  %v1632 = vpop.permute.xlu0 %1631
  %v1634 = vsel %vm453, %v1630, 0
  %v1637 = vsel %vm453, %v1632, 0
  %1639 = vmatpush.bf16.xpose.msra.mxu0 0
  %1640 = vmatpush.bf16.xpose.msra.mxu0 0
  %1641 = vmatpush.bf16.xpose.msra.mxu0 0
  %1642 = vmatpush.bf16.xpose.msra.mxu0 0
  %1643 = vmatpush.bf16.xpose.msra.mxu0 0
  %1644 = vmatpush.bf16.xpose.msra.mxu0 0
  %1645 = vmatpush.bf16.xpose.msra.mxu0 0
  %1646 = vmatpush.bf16.xpose.msra.mxu0 %v1637
  %1647 = vmatmul.bf16.gmra.mxu0 %v1634
  %v1648 = vpop.f32.mrf.mxu0
  %v1649 = vadd.f32 0.0, %v1648
  %v1650 = vpop.f32.mrf.mxu0
  %1651 = vdwg.mxu0
  %1652 = vrot.lane.b32.xlu0 %v1048, 112
  %v1653 = vpop.permute.xlu0 %1652
  %1654 = vrot.lane.b32.xlu0 %v1053, 112
  %v1655 = vpop.permute.xlu0 %1654
  %v1657 = vsel %vm453, %v1653, 0
  %v1660 = vsel %vm453, %v1655, 0
  %1662 = vmatpush.bf16.xpose.msra.mxu0 0
  %1663 = vmatpush.bf16.xpose.msra.mxu0 0
  %1664 = vmatpush.bf16.xpose.msra.mxu0 0
  %1665 = vmatpush.bf16.xpose.msra.mxu0 0
  %1666 = vmatpush.bf16.xpose.msra.mxu0 0
  %1667 = vmatpush.bf16.xpose.msra.mxu0 0
  %1668 = vmatpush.bf16.xpose.msra.mxu0 0
  %1669 = vmatpush.bf16.xpose.msra.mxu0 %v1660
  %1670 = vmatmul.bf16.gmra.mxu0 %v1657
  %v1671 = vpop.f32.mrf.mxu0
  %v1672 = vadd.f32 0.0, %v1671
  %v1673 = vpop.f32.mrf.mxu0
  %1674 = vdwg.mxu0
  %1675 = vrot.lane.b32.xlu0 %v1077, 112
  %v1676 = vpop.permute.xlu0 %1675
  %1677 = vrot.lane.b32.xlu0 %v1082, 112
  %v1678 = vpop.permute.xlu0 %1677
  %v1680 = vsel %vm453, %v1676, 0
  %v1683 = vsel %vm453, %v1678, 0
  %1685 = vmatpush.bf16.xpose.msra.mxu0 0
  %1686 = vmatpush.bf16.xpose.msra.mxu0 0
  %1687 = vmatpush.bf16.xpose.msra.mxu0 0
  %1688 = vmatpush.bf16.xpose.msra.mxu0 0
  %1689 = vmatpush.bf16.xpose.msra.mxu0 0
  %1690 = vmatpush.bf16.xpose.msra.mxu0 0
  %1691 = vmatpush.bf16.xpose.msra.mxu0 0
  %1692 = vmatpush.bf16.xpose.msra.mxu0 %v1683
  %1693 = vmatmul.bf16.gmra.mxu0 %v1680
  %v1694 = vpop.f32.mrf.mxu0
  %v1695 = vadd.f32 0.0, %v1694
  %v1696 = vpop.f32.mrf.mxu0
  %1697 = vdwg.mxu0
  %1698 = vrot.lane.b32.xlu0 %v1106, 112
  %v1699 = vpop.permute.xlu0 %1698
  %1700 = vrot.lane.b32.xlu0 %v1111, 112
  %v1701 = vpop.permute.xlu0 %1700
  %v1703 = vsel %vm453, %v1699, 0
  %v1706 = vsel %vm453, %v1701, 0
  %1708 = vmatpush.bf16.xpose.msra.mxu0 0
  %1709 = vmatpush.bf16.xpose.msra.mxu0 0
  %1710 = vmatpush.bf16.xpose.msra.mxu0 0
  %1711 = vmatpush.bf16.xpose.msra.mxu0 0
  %1712 = vmatpush.bf16.xpose.msra.mxu0 0
  %1713 = vmatpush.bf16.xpose.msra.mxu0 0
  %1714 = vmatpush.bf16.xpose.msra.mxu0 0
  %1715 = vmatpush.bf16.xpose.msra.mxu0 %v1706
  %1716 = vmatmul.bf16.gmra.mxu0 %v1703
  %v1717 = vpop.f32.mrf.mxu0
  %v1718 = vadd.f32 0.0, %v1717
  %v1719 = vpop.f32.mrf.mxu0
  %1720 = vdwg.mxu0
  %1721 = vrot.lane.b32.xlu0 %v1135, 112
  %v1722 = vpop.permute.xlu0 %1721
  %1723 = vrot.lane.b32.xlu0 %v1140, 112
  %v1724 = vpop.permute.xlu0 %1723
  %v1726 = vsel %vm453, %v1722, 0
  %v1729 = vsel %vm453, %v1724, 0
  %1731 = vmatpush.bf16.xpose.msra.mxu0 0
  %1732 = vmatpush.bf16.xpose.msra.mxu0 0
  %1733 = vmatpush.bf16.xpose.msra.mxu0 0
  %1734 = vmatpush.bf16.xpose.msra.mxu0 0
  %1735 = vmatpush.bf16.xpose.msra.mxu0 0
  %1736 = vmatpush.bf16.xpose.msra.mxu0 0
  %1737 = vmatpush.bf16.xpose.msra.mxu0 0
  %1738 = vmatpush.bf16.xpose.msra.mxu0 %v1729
  %1739 = vmatmul.bf16.gmra.mxu0 %v1726
  %v1740 = vpop.f32.mrf.mxu0
  %v1741 = vadd.f32 0.0, %v1740
  %v1742 = vpop.f32.mrf.mxu0
  %1743 = vdwg.mxu0
  %1744 = vrot.lane.b32.xlu0 %v1164, 112
  %v1745 = vpop.permute.xlu0 %1744
  %1746 = vrot.lane.b32.xlu0 %v1169, 112
  %v1747 = vpop.permute.xlu0 %1746
  %v1749 = vsel %vm453, %v1745, 0
  %v1752 = vsel %vm453, %v1747, 0
  %1754 = vmatpush.bf16.xpose.msra.mxu0 0
  %1755 = vmatpush.bf16.xpose.msra.mxu0 0
  %1756 = vmatpush.bf16.xpose.msra.mxu0 0
  %1757 = vmatpush.bf16.xpose.msra.mxu0 0
  %1758 = vmatpush.bf16.xpose.msra.mxu0 0
  %1759 = vmatpush.bf16.xpose.msra.mxu0 0
  %1760 = vmatpush.bf16.xpose.msra.mxu0 0
  %1761 = vmatpush.bf16.xpose.msra.mxu0 %v1752
  %1762 = vmatmul.bf16.gmra.mxu0 %v1749
  %v1763 = vpop.f32.mrf.mxu0
  %v1764 = vadd.f32 0.0, %v1763
  %v1765 = vpop.f32.mrf.mxu0
  %1766 = vdwg.mxu0
  %v1767 = vsel %vm453, %v1603, -inf
  %1768 = vmax.xlane.f32.xlu0 %v1767
  %v1769 = vpop.xlane.xlu0 %1768
  %v1770 = vsel %vm453, %v1626, -inf
  %1771 = vmax.xlane.f32.xlu0 %v1770
  %v1772 = vpop.xlane.xlu0 %1771
  %v1773 = vsel %vm453, %v1649, -inf
  %1774 = vmax.xlane.f32.xlu0 %v1773
  %v1775 = vpop.xlane.xlu0 %1774
  %v1776 = vsel %vm453, %v1672, -inf
  %1777 = vmax.xlane.f32.xlu0 %v1776
  %v1778 = vpop.xlane.xlu0 %1777
  %v1779 = vsel %vm453, %v1695, -inf
  %1780 = vmax.xlane.f32.xlu0 %v1779
  %v1781 = vpop.xlane.xlu0 %1780
  %v1782 = vsel %vm453, %v1718, -inf
  %1783 = vmax.xlane.f32.xlu0 %v1782
  %v1784 = vpop.xlane.xlu0 %1783
  %v1785 = vsel %vm453, %v1741, -inf
  %1786 = vmax.xlane.f32.xlu0 %v1785
  %v1787 = vpop.xlane.xlu0 %1786
  %v1788 = vsel %vm453, %v1764, -inf
  %1789 = vmax.xlane.f32.xlu0 %v1788
  %v1790 = vpop.xlane.xlu0 %1789
  %v1791 = vsub.f32 %v1603, %v1769
  %v1792 = vsub.f32 %v1626, %v1772
  %v1793 = vsub.f32 %v1649, %v1775
  %v1794 = vsub.f32 %v1672, %v1778
  %v1795 = vsub.f32 %v1695, %v1781
  %v1796 = vsub.f32 %v1718, %v1784
  %v1797 = vsub.f32 %v1741, %v1787
  %v1798 = vsub.f32 %v1764, %v1790
  %v1799 = vmul.f32 %v1791, 1.442695
  %v1800 = vpow.pop %v1799
  %v1801 = vmul.f32 %v1792, 1.442695
  %v1802 = vpow.pop %v1801
  %v1803 = vmul.f32 %v1793, 1.442695
  %v1804 = vpow.pop %v1803
  %v1805 = vmul.f32 %v1794, 1.442695
  %v1806 = vpow.pop %v1805
  %v1807 = vmul.f32 %v1795, 1.442695
  %v1808 = vpow.pop %v1807
  %v1809 = vmul.f32 %v1796, 1.442695
  %v1810 = vpow.pop %v1809
  %v1811 = vmul.f32 %v1797, 1.442695
  %v1812 = vpow.pop %v1811
  %v1813 = vmul.f32 %v1798, 1.442695
  %v1814 = vpow.pop %v1813
  %v1815 = vsel %vm453, %v1800, 0.0
  %1816 = vadd.xlane.f32.xlu0 %v1815
  %v1817 = vpop.xlane.xlu0 %1816
  %v1818 = vsel %vm453, %v1802, 0.0
  %1819 = vadd.xlane.f32.xlu0 %v1818
  %v1820 = vpop.xlane.xlu0 %1819
  %v1821 = vsel %vm453, %v1804, 0.0
  %1822 = vadd.xlane.f32.xlu0 %v1821
  %v1823 = vpop.xlane.xlu0 %1822
  %v1824 = vsel %vm453, %v1806, 0.0
  %1825 = vadd.xlane.f32.xlu0 %v1824
  %v1826 = vpop.xlane.xlu0 %1825
  %v1827 = vsel %vm453, %v1808, 0.0
  %1828 = vadd.xlane.f32.xlu0 %v1827
  %v1829 = vpop.xlane.xlu0 %1828
  %v1830 = vsel %vm453, %v1810, 0.0
  %1831 = vadd.xlane.f32.xlu0 %v1830
  %v1832 = vpop.xlane.xlu0 %1831
  %v1833 = vsel %vm453, %v1812, 0.0
  %1834 = vadd.xlane.f32.xlu0 %v1833
  %v1835 = vpop.xlane.xlu0 %1834
  %v1836 = vsel %vm453, %v1814, 0.0
  %1837 = vadd.xlane.f32.xlu0 %v1836
  %v1838 = vpop.xlane.xlu0 %1837
  %v1839 = vrcp.pop %v1817
  %v1840 = vmul.f32 %v1817, %v1839
  %v1841 = vsub.f32 1.0, %v1840
  %v1842 = vmul.f32 %v1839, %v1841
  %v1843 = vadd.f32 %v1839, %v1842
  %vm1844 = vweird.f32 %v1817
  %vm1845 = vweird.f32 %v1839
  %vm1846 = vmor %vm1844, %vm1845
  %v1847 = vsel %vm1846, %v1839, %v1843
  %v1848 = vand.u32 2147483647, %v1817
  %vm1849 = vcmp.eq.f32.partialorder %v1848, 8.507059e+37
  %v1850 = vand.u32 %v1817, 2147483648
  %v1851 = vor.u32 1.1754944e-38, %v1850
  %v1852 = vsel %vm1849, %v1851, %v1847
  %v1853 = vmul.f32 %v1800, %v1852
  %v1854 = vrcp.pop %v1820
  %v1855 = vmul.f32 %v1820, %v1854
  %v1856 = vsub.f32 1.0, %v1855
  %v1857 = vmul.f32 %v1854, %v1856
  %v1858 = vadd.f32 %v1854, %v1857
  %vm1859 = vweird.f32 %v1820
  %vm1860 = vweird.f32 %v1854
  %vm1861 = vmor %vm1859, %vm1860
  %v1862 = vsel %vm1861, %v1854, %v1858
  %v1863 = vand.u32 2147483647, %v1820
  %vm1864 = vcmp.eq.f32.partialorder %v1863, 8.507059e+37
  %v1865 = vand.u32 %v1820, 2147483648
  %v1866 = vor.u32 1.1754944e-38, %v1865
  %v1867 = vsel %vm1864, %v1866, %v1862
  %v1868 = vmul.f32 %v1802, %v1867
  %v1869 = vrcp.pop %v1823
  %v1870 = vmul.f32 %v1823, %v1869
  %v1871 = vsub.f32 1.0, %v1870
  %v1872 = vmul.f32 %v1869, %v1871
  %v1873 = vadd.f32 %v1869, %v1872
  %vm1874 = vweird.f32 %v1823
  %vm1875 = vweird.f32 %v1869
  %vm1876 = vmor %vm1874, %vm1875
  %v1877 = vsel %vm1876, %v1869, %v1873
  %v1878 = vand.u32 2147483647, %v1823
  %vm1879 = vcmp.eq.f32.partialorder %v1878, 8.507059e+37
  %v1880 = vand.u32 %v1823, 2147483648
  %v1881 = vor.u32 1.1754944e-38, %v1880
  %v1882 = vsel %vm1879, %v1881, %v1877
  %v1883 = vmul.f32 %v1804, %v1882
  %v1884 = vrcp.pop %v1826
  %v1885 = vmul.f32 %v1826, %v1884
  %v1886 = vsub.f32 1.0, %v1885
  %v1887 = vmul.f32 %v1884, %v1886
  %v1888 = vadd.f32 %v1884, %v1887
  %vm1889 = vweird.f32 %v1826
  %vm1890 = vweird.f32 %v1884
  %vm1891 = vmor %vm1889, %vm1890
  %v1892 = vsel %vm1891, %v1884, %v1888
  %v1893 = vand.u32 2147483647, %v1826
  %vm1894 = vcmp.eq.f32.partialorder %v1893, 8.507059e+37
  %v1895 = vand.u32 %v1826, 2147483648
  %v1896 = vor.u32 1.1754944e-38, %v1895
  %v1897 = vsel %vm1894, %v1896, %v1892
  %v1898 = vmul.f32 %v1806, %v1897
  %v1899 = vrcp.pop %v1829
  %v1900 = vmul.f32 %v1829, %v1899
  %v1901 = vsub.f32 1.0, %v1900
  %v1902 = vmul.f32 %v1899, %v1901
  %v1903 = vadd.f32 %v1899, %v1902
  %vm1904 = vweird.f32 %v1829
  %vm1905 = vweird.f32 %v1899
  %vm1906 = vmor %vm1904, %vm1905
  %v1907 = vsel %vm1906, %v1899, %v1903
  %v1908 = vand.u32 2147483647, %v1829
  %vm1909 = vcmp.eq.f32.partialorder %v1908, 8.507059e+37
  %v1910 = vand.u32 %v1829, 2147483648
  %v1911 = vor.u32 1.1754944e-38, %v1910
  %v1912 = vsel %vm1909, %v1911, %v1907
  %v1913 = vmul.f32 %v1808, %v1912
  %v1914 = vrcp.pop %v1832
  %v1915 = vmul.f32 %v1832, %v1914
  %v1916 = vsub.f32 1.0, %v1915
  %v1917 = vmul.f32 %v1914, %v1916
  %v1918 = vadd.f32 %v1914, %v1917
  %vm1919 = vweird.f32 %v1832
  %vm1920 = vweird.f32 %v1914
  %vm1921 = vmor %vm1919, %vm1920
  %v1922 = vsel %vm1921, %v1914, %v1918
  %v1923 = vand.u32 2147483647, %v1832
  %vm1924 = vcmp.eq.f32.partialorder %v1923, 8.507059e+37
  %v1925 = vand.u32 %v1832, 2147483648
  %v1926 = vor.u32 1.1754944e-38, %v1925
  %v1927 = vsel %vm1924, %v1926, %v1922
  %v1928 = vmul.f32 %v1810, %v1927
  %v1929 = vrcp.pop %v1835
  %v1930 = vmul.f32 %v1835, %v1929
  %v1931 = vsub.f32 1.0, %v1930
  %v1932 = vmul.f32 %v1929, %v1931
  %v1933 = vadd.f32 %v1929, %v1932
  %vm1934 = vweird.f32 %v1835
  %vm1935 = vweird.f32 %v1929
  %vm1936 = vmor %vm1934, %vm1935
  %v1937 = vsel %vm1936, %v1929, %v1933
  %v1938 = vand.u32 2147483647, %v1835
  %vm1939 = vcmp.eq.f32.partialorder %v1938, 8.507059e+37
  %v1940 = vand.u32 %v1835, 2147483648
  %v1941 = vor.u32 1.1754944e-38, %v1940
  %v1942 = vsel %vm1939, %v1941, %v1937
  %v1943 = vmul.f32 %v1812, %v1942
  %v1944 = vrcp.pop %v1838
  %v1945 = vmul.f32 %v1838, %v1944
  %v1946 = vsub.f32 1.0, %v1945
  %v1947 = vmul.f32 %v1944, %v1946
  %v1948 = vadd.f32 %v1944, %v1947
  %vm1949 = vweird.f32 %v1838
  %vm1950 = vweird.f32 %v1944
  %vm1951 = vmor %vm1949, %vm1950
  %v1952 = vsel %vm1951, %v1944, %v1948
  %v1953 = vand.u32 2147483647, %v1838
  %vm1954 = vcmp.eq.f32.partialorder %v1953, 8.507059e+37
  %v1955 = vand.u32 %v1838, 2147483648
  %v1956 = vor.u32 1.1754944e-38, %v1955
  %v1957 = vsel %vm1954, %v1956, %v1952
  %v1958 = vmul.f32 %v1814, %v1957
  %v1959 = vpack.c.bf16 %v1853, %v1853
  %v1960 = vpack.c.bf16 %v1868, %v1868
  %v1961 = vpack.c.bf16 %v1883, %v1883
  %v1962 = vpack.c.bf16 %v1898, %v1898
  %v1963 = vpack.c.bf16 %v1913, %v1913
  %v1964 = vpack.c.bf16 %v1928, %v1928
  %v1965 = vpack.c.bf16 %v1943, %v1943
  %v1966 = vpack.c.bf16 %v1958, %v1958
  %1967 = vrot.lane.b32.xlu0 %v1393, 112
  %v1968 = vpop.permute.xlu0 %1967
  %v1970 = vsel %vm453, %v1959, 0
  %v1973 = vsel %vm809, %v1968, 0
  %1975 = vmatpush.bf16.msra.mxu0 0
  %1976 = vmatpush.bf16.msra.mxu0 0
  %1977 = vmatpush.bf16.msra.mxu0 0
  %1978 = vmatpush.bf16.msra.mxu0 0
  %1979 = vmatpush.bf16.msra.mxu0 0
  %1980 = vmatpush.bf16.msra.mxu0 0
  %1981 = vmatpush.bf16.msra.mxu0 0
  %1982 = vmatpush.bf16.msra.mxu0 %v1973
  %1983 = vmatmul.bf16.gmra.mxu0 %v1970
  %v1984 = vpop.f32.mrf.mxu0
  %v1985 = vadd.f32 0.0, %v1984
  %v1986 = vpop.f32.mrf.mxu0
  %1987 = vdwg.mxu0
  %1988 = vrot.lane.b32.xlu0 %v1417, 112
  %v1989 = vpop.permute.xlu0 %1988
  %v1991 = vsel %vm453, %v1960, 0
  %v1994 = vsel %vm809, %v1989, 0
  %1996 = vmatpush.bf16.msra.mxu0 0
  %1997 = vmatpush.bf16.msra.mxu0 0
  %1998 = vmatpush.bf16.msra.mxu0 0
  %1999 = vmatpush.bf16.msra.mxu0 0
  %2000 = vmatpush.bf16.msra.mxu0 0
  %2001 = vmatpush.bf16.msra.mxu0 0
  %2002 = vmatpush.bf16.msra.mxu0 0
  %2003 = vmatpush.bf16.msra.mxu0 %v1994
  %2004 = vmatmul.bf16.gmra.mxu0 %v1991
  %v2005 = vpop.f32.mrf.mxu0
  %v2006 = vadd.f32 0.0, %v2005
  %v2007 = vpop.f32.mrf.mxu0
  %2008 = vdwg.mxu0
  %2009 = vrot.lane.b32.xlu0 %v1441, 112
  %v2010 = vpop.permute.xlu0 %2009
  %v2012 = vsel %vm453, %v1961, 0
  %v2015 = vsel %vm809, %v2010, 0
  %2017 = vmatpush.bf16.msra.mxu0 0
  %2018 = vmatpush.bf16.msra.mxu0 0
  %2019 = vmatpush.bf16.msra.mxu0 0
  %2020 = vmatpush.bf16.msra.mxu0 0
  %2021 = vmatpush.bf16.msra.mxu0 0
  %2022 = vmatpush.bf16.msra.mxu0 0
  %2023 = vmatpush.bf16.msra.mxu0 0
  %2024 = vmatpush.bf16.msra.mxu0 %v2015
  %2025 = vmatmul.bf16.gmra.mxu0 %v2012
  %v2026 = vpop.f32.mrf.mxu0
  %v2027 = vadd.f32 0.0, %v2026
  %v2028 = vpop.f32.mrf.mxu0
  %2029 = vdwg.mxu0
  %2030 = vrot.lane.b32.xlu0 %v1465, 112
  %v2031 = vpop.permute.xlu0 %2030
  %v2033 = vsel %vm453, %v1962, 0
  %v2036 = vsel %vm809, %v2031, 0
  %2038 = vmatpush.bf16.msra.mxu0 0
  %2039 = vmatpush.bf16.msra.mxu0 0
  %2040 = vmatpush.bf16.msra.mxu0 0
  %2041 = vmatpush.bf16.msra.mxu0 0
  %2042 = vmatpush.bf16.msra.mxu0 0
  %2043 = vmatpush.bf16.msra.mxu0 0
  %2044 = vmatpush.bf16.msra.mxu0 0
  %2045 = vmatpush.bf16.msra.mxu0 %v2036
  %2046 = vmatmul.bf16.gmra.mxu0 %v2033
  %v2047 = vpop.f32.mrf.mxu0
  %v2048 = vadd.f32 0.0, %v2047
  %v2049 = vpop.f32.mrf.mxu0
  %2050 = vdwg.mxu0
  %2051 = vrot.lane.b32.xlu0 %v1489, 112
  %v2052 = vpop.permute.xlu0 %2051
  %v2054 = vsel %vm453, %v1963, 0
  %v2057 = vsel %vm809, %v2052, 0
  %2059 = vmatpush.bf16.msra.mxu0 0
  %2060 = vmatpush.bf16.msra.mxu0 0
  %2061 = vmatpush.bf16.msra.mxu0 0
  %2062 = vmatpush.bf16.msra.mxu0 0
  %2063 = vmatpush.bf16.msra.mxu0 0
  %2064 = vmatpush.bf16.msra.mxu0 0
  %2065 = vmatpush.bf16.msra.mxu0 0
  %2066 = vmatpush.bf16.msra.mxu0 %v2057
  %2067 = vmatmul.bf16.gmra.mxu0 %v2054
  %v2068 = vpop.f32.mrf.mxu0
  %v2069 = vadd.f32 0.0, %v2068
  %v2070 = vpop.f32.mrf.mxu0
  %2071 = vdwg.mxu0
  %2072 = vrot.lane.b32.xlu0 %v1513, 112
  %v2073 = vpop.permute.xlu0 %2072
  %v2075 = vsel %vm453, %v1964, 0
  %v2078 = vsel %vm809, %v2073, 0
  %2080 = vmatpush.bf16.msra.mxu0 0
  %2081 = vmatpush.bf16.msra.mxu0 0
  %2082 = vmatpush.bf16.msra.mxu0 0
  %2083 = vmatpush.bf16.msra.mxu0 0
  %2084 = vmatpush.bf16.msra.mxu0 0
  %2085 = vmatpush.bf16.msra.mxu0 0
  %2086 = vmatpush.bf16.msra.mxu0 0
  %2087 = vmatpush.bf16.msra.mxu0 %v2078
  %2088 = vmatmul.bf16.gmra.mxu0 %v2075
  %v2089 = vpop.f32.mrf.mxu0
  %v2090 = vadd.f32 0.0, %v2089
  %v2091 = vpop.f32.mrf.mxu0
  %2092 = vdwg.mxu0
  %2093 = vrot.lane.b32.xlu0 %v1537, 112
  %v2094 = vpop.permute.xlu0 %2093
  %v2096 = vsel %vm453, %v1965, 0
  %v2099 = vsel %vm809, %v2094, 0
  %2101 = vmatpush.bf16.msra.mxu0 0
  %2102 = vmatpush.bf16.msra.mxu0 0
  %2103 = vmatpush.bf16.msra.mxu0 0
  %2104 = vmatpush.bf16.msra.mxu0 0
  %2105 = vmatpush.bf16.msra.mxu0 0
  %2106 = vmatpush.bf16.msra.mxu0 0
  %2107 = vmatpush.bf16.msra.mxu0 0
  %2108 = vmatpush.bf16.msra.mxu0 %v2099
  %2109 = vmatmul.bf16.gmra.mxu0 %v2096
  %v2110 = vpop.f32.mrf.mxu0
  %v2111 = vadd.f32 0.0, %v2110
  %v2112 = vpop.f32.mrf.mxu0
  %2113 = vdwg.mxu0
  %2114 = vrot.lane.b32.xlu0 %v1561, 112
  %v2115 = vpop.permute.xlu0 %2114
  %v2117 = vsel %vm453, %v1966, 0
  %v2120 = vsel %vm809, %v2115, 0
  %2122 = vmatpush.bf16.msra.mxu0 0
  %2123 = vmatpush.bf16.msra.mxu0 0
  %2124 = vmatpush.bf16.msra.mxu0 0
  %2125 = vmatpush.bf16.msra.mxu0 0
  %2126 = vmatpush.bf16.msra.mxu0 0
  %2127 = vmatpush.bf16.msra.mxu0 0
  %2128 = vmatpush.bf16.msra.mxu0 0
  %2129 = vmatpush.bf16.msra.mxu0 %v2120
  %2130 = vmatmul.bf16.gmra.mxu0 %v2117
  %v2131 = vpop.f32.mrf.mxu0
  %v2132 = vadd.f32 0.0, %v2131
  %v2133 = vpop.f32.mrf.mxu0
  %2134 = vdwg.mxu0
  %2135 = vrot.lane.b32.xlu0 %v961, 104
  %v2136 = vpop.permute.xlu0 %2135
  %2137 = vrot.lane.b32.xlu0 %v966, 104
  %v2138 = vpop.permute.xlu0 %2137
  %v2140 = vsel %vm453, %v2136, 0
  %v2143 = vsel %vm453, %v2138, 0
  %2145 = vmatpush.bf16.xpose.msra.mxu0 0
  %2146 = vmatpush.bf16.xpose.msra.mxu0 0
  %2147 = vmatpush.bf16.xpose.msra.mxu0 0
  %2148 = vmatpush.bf16.xpose.msra.mxu0 0
  %2149 = vmatpush.bf16.xpose.msra.mxu0 0
  %2150 = vmatpush.bf16.xpose.msra.mxu0 0
  %2151 = vmatpush.bf16.xpose.msra.mxu0 0
  %2152 = vmatpush.bf16.xpose.msra.mxu0 %v2143
  %2153 = vmatmul.bf16.gmra.mxu0 %v2140
  %v2154 = vpop.f32.mrf.mxu0
  %v2155 = vadd.f32 0.0, %v2154
  %v2156 = vpop.f32.mrf.mxu0
  %2157 = vdwg.mxu0
  %2158 = vrot.lane.b32.xlu0 %v990, 104
  %v2159 = vpop.permute.xlu0 %2158
  %2160 = vrot.lane.b32.xlu0 %v995, 104
  %v2161 = vpop.permute.xlu0 %2160
  %v2163 = vsel %vm453, %v2159, 0
  %v2166 = vsel %vm453, %v2161, 0
  %2168 = vmatpush.bf16.xpose.msra.mxu0 0
  %2169 = vmatpush.bf16.xpose.msra.mxu0 0
  %2170 = vmatpush.bf16.xpose.msra.mxu0 0
  %2171 = vmatpush.bf16.xpose.msra.mxu0 0
  %2172 = vmatpush.bf16.xpose.msra.mxu0 0
  %2173 = vmatpush.bf16.xpose.msra.mxu0 0
  %2174 = vmatpush.bf16.xpose.msra.mxu0 0
  %2175 = vmatpush.bf16.xpose.msra.mxu0 %v2166
  %2176 = vmatmul.bf16.gmra.mxu0 %v2163
  %v2177 = vpop.f32.mrf.mxu0
  %v2178 = vadd.f32 0.0, %v2177
  %v2179 = vpop.f32.mrf.mxu0
  %2180 = vdwg.mxu0
  %2181 = vrot.lane.b32.xlu0 %v1019, 104
  %v2182 = vpop.permute.xlu0 %2181
  %2183 = vrot.lane.b32.xlu0 %v1024, 104
  %v2184 = vpop.permute.xlu0 %2183
  %v2186 = vsel %vm453, %v2182, 0
  %v2189 = vsel %vm453, %v2184, 0
  %2191 = vmatpush.bf16.xpose.msra.mxu0 0
  %2192 = vmatpush.bf16.xpose.msra.mxu0 0
  %2193 = vmatpush.bf16.xpose.msra.mxu0 0
  %2194 = vmatpush.bf16.xpose.msra.mxu0 0
  %2195 = vmatpush.bf16.xpose.msra.mxu0 0
  %2196 = vmatpush.bf16.xpose.msra.mxu0 0
  %2197 = vmatpush.bf16.xpose.msra.mxu0 0
  %2198 = vmatpush.bf16.xpose.msra.mxu0 %v2189
  %2199 = vmatmul.bf16.gmra.mxu0 %v2186
  %v2200 = vpop.f32.mrf.mxu0
  %v2201 = vadd.f32 0.0, %v2200
  %v2202 = vpop.f32.mrf.mxu0
  %2203 = vdwg.mxu0
  %2204 = vrot.lane.b32.xlu0 %v1048, 104
  %v2205 = vpop.permute.xlu0 %2204
  %2206 = vrot.lane.b32.xlu0 %v1053, 104
  %v2207 = vpop.permute.xlu0 %2206
  %v2209 = vsel %vm453, %v2205, 0
  %v2212 = vsel %vm453, %v2207, 0
  %2214 = vmatpush.bf16.xpose.msra.mxu0 0
  %2215 = vmatpush.bf16.xpose.msra.mxu0 0
  %2216 = vmatpush.bf16.xpose.msra.mxu0 0
  %2217 = vmatpush.bf16.xpose.msra.mxu0 0
  %2218 = vmatpush.bf16.xpose.msra.mxu0 0
  %2219 = vmatpush.bf16.xpose.msra.mxu0 0
  %2220 = vmatpush.bf16.xpose.msra.mxu0 0
  %2221 = vmatpush.bf16.xpose.msra.mxu0 %v2212
  %2222 = vmatmul.bf16.gmra.mxu0 %v2209
  %v2223 = vpop.f32.mrf.mxu0
  %v2224 = vadd.f32 0.0, %v2223
  %v2225 = vpop.f32.mrf.mxu0
  %2226 = vdwg.mxu0
  %2227 = vrot.lane.b32.xlu0 %v1077, 104
  %v2228 = vpop.permute.xlu0 %2227
  %2229 = vrot.lane.b32.xlu0 %v1082, 104
  %v2230 = vpop.permute.xlu0 %2229
  %v2232 = vsel %vm453, %v2228, 0
  %v2235 = vsel %vm453, %v2230, 0
  %2237 = vmatpush.bf16.xpose.msra.mxu0 0
  %2238 = vmatpush.bf16.xpose.msra.mxu0 0
  %2239 = vmatpush.bf16.xpose.msra.mxu0 0
  %2240 = vmatpush.bf16.xpose.msra.mxu0 0
  %2241 = vmatpush.bf16.xpose.msra.mxu0 0
  %2242 = vmatpush.bf16.xpose.msra.mxu0 0
  %2243 = vmatpush.bf16.xpose.msra.mxu0 0
  %2244 = vmatpush.bf16.xpose.msra.mxu0 %v2235
  %2245 = vmatmul.bf16.gmra.mxu0 %v2232
  %v2246 = vpop.f32.mrf.mxu0
  %v2247 = vadd.f32 0.0, %v2246
  %v2248 = vpop.f32.mrf.mxu0
  %2249 = vdwg.mxu0
  %2250 = vrot.lane.b32.xlu0 %v1106, 104
  %v2251 = vpop.permute.xlu0 %2250
  %2252 = vrot.lane.b32.xlu0 %v1111, 104
  %v2253 = vpop.permute.xlu0 %2252
  %v2255 = vsel %vm453, %v2251, 0
  %v2258 = vsel %vm453, %v2253, 0
  %2260 = vmatpush.bf16.xpose.msra.mxu0 0
  %2261 = vmatpush.bf16.xpose.msra.mxu0 0
  %2262 = vmatpush.bf16.xpose.msra.mxu0 0
  %2263 = vmatpush.bf16.xpose.msra.mxu0 0
  %2264 = vmatpush.bf16.xpose.msra.mxu0 0
  %2265 = vmatpush.bf16.xpose.msra.mxu0 0
  %2266 = vmatpush.bf16.xpose.msra.mxu0 0
  %2267 = vmatpush.bf16.xpose.msra.mxu0 %v2258
  %2268 = vmatmul.bf16.gmra.mxu0 %v2255
  %v2269 = vpop.f32.mrf.mxu0
  %v2270 = vadd.f32 0.0, %v2269
  %v2271 = vpop.f32.mrf.mxu0
  %2272 = vdwg.mxu0
  %2273 = vrot.lane.b32.xlu0 %v1135, 104
  %v2274 = vpop.permute.xlu0 %2273
  %2275 = vrot.lane.b32.xlu0 %v1140, 104
  %v2276 = vpop.permute.xlu0 %2275
  %v2278 = vsel %vm453, %v2274, 0
  %v2281 = vsel %vm453, %v2276, 0
  %2283 = vmatpush.bf16.xpose.msra.mxu0 0
  %2284 = vmatpush.bf16.xpose.msra.mxu0 0
  %2285 = vmatpush.bf16.xpose.msra.mxu0 0
  %2286 = vmatpush.bf16.xpose.msra.mxu0 0
  %2287 = vmatpush.bf16.xpose.msra.mxu0 0
  %2288 = vmatpush.bf16.xpose.msra.mxu0 0
  %2289 = vmatpush.bf16.xpose.msra.mxu0 0
  %2290 = vmatpush.bf16.xpose.msra.mxu0 %v2281
  %2291 = vmatmul.bf16.gmra.mxu0 %v2278
  %v2292 = vpop.f32.mrf.mxu0
  %v2293 = vadd.f32 0.0, %v2292
  %v2294 = vpop.f32.mrf.mxu0
  %2295 = vdwg.mxu0
  %2296 = vrot.lane.b32.xlu0 %v1164, 104
  %v2297 = vpop.permute.xlu0 %2296
  %2298 = vrot.lane.b32.xlu0 %v1169, 104
  %v2299 = vpop.permute.xlu0 %2298
  %v2301 = vsel %vm453, %v2297, 0
  %v2304 = vsel %vm453, %v2299, 0
  %2306 = vmatpush.bf16.xpose.msra.mxu0 0
  %2307 = vmatpush.bf16.xpose.msra.mxu0 0
  %2308 = vmatpush.bf16.xpose.msra.mxu0 0
  %2309 = vmatpush.bf16.xpose.msra.mxu0 0
  %2310 = vmatpush.bf16.xpose.msra.mxu0 0
  %2311 = vmatpush.bf16.xpose.msra.mxu0 0
  %2312 = vmatpush.bf16.xpose.msra.mxu0 0
  %2313 = vmatpush.bf16.xpose.msra.mxu0 %v2304
  %2314 = vmatmul.bf16.gmra.mxu0 %v2301
  %v2315 = vpop.f32.mrf.mxu0
  %v2316 = vadd.f32 0.0, %v2315
  %v2317 = vpop.f32.mrf.mxu0
  %2318 = vdwg.mxu0
  %v2319 = vsel %vm453, %v2155, -inf
  %2320 = vmax.xlane.f32.xlu0 %v2319
  %v2321 = vpop.xlane.xlu0 %2320
  %v2322 = vsel %vm453, %v2178, -inf
  %2323 = vmax.xlane.f32.xlu0 %v2322
  %v2324 = vpop.xlane.xlu0 %2323
  %v2325 = vsel %vm453, %v2201, -inf
  %2326 = vmax.xlane.f32.xlu0 %v2325
  %v2327 = vpop.xlane.xlu0 %2326
  %v2328 = vsel %vm453, %v2224, -inf
  %2329 = vmax.xlane.f32.xlu0 %v2328
  %v2330 = vpop.xlane.xlu0 %2329
  %v2331 = vsel %vm453, %v2247, -inf
  %2332 = vmax.xlane.f32.xlu0 %v2331
  %v2333 = vpop.xlane.xlu0 %2332
  %v2334 = vsel %vm453, %v2270, -inf
  %2335 = vmax.xlane.f32.xlu0 %v2334
  %v2336 = vpop.xlane.xlu0 %2335
  %v2337 = vsel %vm453, %v2293, -inf
  %2338 = vmax.xlane.f32.xlu0 %v2337
  %v2339 = vpop.xlane.xlu0 %2338
  %v2340 = vsel %vm453, %v2316, -inf
  %2341 = vmax.xlane.f32.xlu0 %v2340
  %v2342 = vpop.xlane.xlu0 %2341
  %v2343 = vsub.f32 %v2155, %v2321
  %v2344 = vsub.f32 %v2178, %v2324
  %v2345 = vsub.f32 %v2201, %v2327
  %v2346 = vsub.f32 %v2224, %v2330
  %v2347 = vsub.f32 %v2247, %v2333
  %v2348 = vsub.f32 %v2270, %v2336
  %v2349 = vsub.f32 %v2293, %v2339
  %v2350 = vsub.f32 %v2316, %v2342
  %v2351 = vmul.f32 %v2343, 1.442695
  %v2352 = vpow.pop %v2351
  %v2353 = vmul.f32 %v2344, 1.442695
  %v2354 = vpow.pop %v2353
  %v2355 = vmul.f32 %v2345, 1.442695
  %v2356 = vpow.pop %v2355
  %v2357 = vmul.f32 %v2346, 1.442695
  %v2358 = vpow.pop %v2357
  %v2359 = vmul.f32 %v2347, 1.442695
  %v2360 = vpow.pop %v2359
  %v2361 = vmul.f32 %v2348, 1.442695
  %v2362 = vpow.pop %v2361
  %v2363 = vmul.f32 %v2349, 1.442695
  %v2364 = vpow.pop %v2363
  %v2365 = vmul.f32 %v2350, 1.442695
  %v2366 = vpow.pop %v2365
  %v2367 = vsel %vm453, %v2352, 0.0
  %2368 = vadd.xlane.f32.xlu0 %v2367
  %v2369 = vpop.xlane.xlu0 %2368
  %v2370 = vsel %vm453, %v2354, 0.0
  %2371 = vadd.xlane.f32.xlu0 %v2370
  %v2372 = vpop.xlane.xlu0 %2371
  %v2373 = vsel %vm453, %v2356, 0.0
  %2374 = vadd.xlane.f32.xlu0 %v2373
  %v2375 = vpop.xlane.xlu0 %2374
  %v2376 = vsel %vm453, %v2358, 0.0
  %2377 = vadd.xlane.f32.xlu0 %v2376
  %v2378 = vpop.xlane.xlu0 %2377
  %v2379 = vsel %vm453, %v2360, 0.0
  %2380 = vadd.xlane.f32.xlu0 %v2379
  %v2381 = vpop.xlane.xlu0 %2380
  %v2382 = vsel %vm453, %v2362, 0.0
  %2383 = vadd.xlane.f32.xlu0 %v2382
  %v2384 = vpop.xlane.xlu0 %2383
  %v2385 = vsel %vm453, %v2364, 0.0
  %2386 = vadd.xlane.f32.xlu0 %v2385
  %v2387 = vpop.xlane.xlu0 %2386
  %v2388 = vsel %vm453, %v2366, 0.0
  %2389 = vadd.xlane.f32.xlu0 %v2388
  %v2390 = vpop.xlane.xlu0 %2389
  %v2391 = vrcp.pop %v2369
  %v2392 = vmul.f32 %v2369, %v2391
  %v2393 = vsub.f32 1.0, %v2392
  %v2394 = vmul.f32 %v2391, %v2393
  %v2395 = vadd.f32 %v2391, %v2394
  %vm2396 = vweird.f32 %v2369
  %vm2397 = vweird.f32 %v2391
  %vm2398 = vmor %vm2396, %vm2397
  %v2399 = vsel %vm2398, %v2391, %v2395
  %v2400 = vand.u32 2147483647, %v2369
  %vm2401 = vcmp.eq.f32.partialorder %v2400, 8.507059e+37
  %v2402 = vand.u32 %v2369, 2147483648
  %v2403 = vor.u32 1.1754944e-38, %v2402
  %v2404 = vsel %vm2401, %v2403, %v2399
  %v2405 = vmul.f32 %v2352, %v2404
  %v2406 = vrcp.pop %v2372
  %v2407 = vmul.f32 %v2372, %v2406
  %v2408 = vsub.f32 1.0, %v2407
  %v2409 = vmul.f32 %v2406, %v2408
  %v2410 = vadd.f32 %v2406, %v2409
  %vm2411 = vweird.f32 %v2372
  %vm2412 = vweird.f32 %v2406
  %vm2413 = vmor %vm2411, %vm2412
  %v2414 = vsel %vm2413, %v2406, %v2410
  %v2415 = vand.u32 2147483647, %v2372
  %vm2416 = vcmp.eq.f32.partialorder %v2415, 8.507059e+37
  %v2417 = vand.u32 %v2372, 2147483648
  %v2418 = vor.u32 1.1754944e-38, %v2417
  %v2419 = vsel %vm2416, %v2418, %v2414
  %v2420 = vmul.f32 %v2354, %v2419
  %v2421 = vrcp.pop %v2375
  %v2422 = vmul.f32 %v2375, %v2421
  %v2423 = vsub.f32 1.0, %v2422
  %v2424 = vmul.f32 %v2421, %v2423
  %v2425 = vadd.f32 %v2421, %v2424
  %vm2426 = vweird.f32 %v2375
  %vm2427 = vweird.f32 %v2421
  %vm2428 = vmor %vm2426, %vm2427
  %v2429 = vsel %vm2428, %v2421, %v2425
  %v2430 = vand.u32 2147483647, %v2375
  %vm2431 = vcmp.eq.f32.partialorder %v2430, 8.507059e+37
  %v2432 = vand.u32 %v2375, 2147483648
  %v2433 = vor.u32 1.1754944e-38, %v2432
  %v2434 = vsel %vm2431, %v2433, %v2429
  %v2435 = vmul.f32 %v2356, %v2434
  %v2436 = vrcp.pop %v2378
  %v2437 = vmul.f32 %v2378, %v2436
  %v2438 = vsub.f32 1.0, %v2437
  %v2439 = vmul.f32 %v2436, %v2438
  %v2440 = vadd.f32 %v2436, %v2439
  %vm2441 = vweird.f32 %v2378
  %vm2442 = vweird.f32 %v2436
  %vm2443 = vmor %vm2441, %vm2442
  %v2444 = vsel %vm2443, %v2436, %v2440
  %v2445 = vand.u32 2147483647, %v2378
  %vm2446 = vcmp.eq.f32.partialorder %v2445, 8.507059e+37
  %v2447 = vand.u32 %v2378, 2147483648
  %v2448 = vor.u32 1.1754944e-38, %v2447
  %v2449 = vsel %vm2446, %v2448, %v2444
  %v2450 = vmul.f32 %v2358, %v2449
  %v2451 = vrcp.pop %v2381
  %v2452 = vmul.f32 %v2381, %v2451
  %v2453 = vsub.f32 1.0, %v2452
  %v2454 = vmul.f32 %v2451, %v2453
  %v2455 = vadd.f32 %v2451, %v2454
  %vm2456 = vweird.f32 %v2381
  %vm2457 = vweird.f32 %v2451
  %vm2458 = vmor %vm2456, %vm2457
  %v2459 = vsel %vm2458, %v2451, %v2455
  %v2460 = vand.u32 2147483647, %v2381
  %vm2461 = vcmp.eq.f32.partialorder %v2460, 8.507059e+37
  %v2462 = vand.u32 %v2381, 2147483648
  %v2463 = vor.u32 1.1754944e-38, %v2462
  %v2464 = vsel %vm2461, %v2463, %v2459
  %v2465 = vmul.f32 %v2360, %v2464
  %v2466 = vrcp.pop %v2384
  %v2467 = vmul.f32 %v2384, %v2466
  %v2468 = vsub.f32 1.0, %v2467
  %v2469 = vmul.f32 %v2466, %v2468
  %v2470 = vadd.f32 %v2466, %v2469
  %vm2471 = vweird.f32 %v2384
  %vm2472 = vweird.f32 %v2466
  %vm2473 = vmor %vm2471, %vm2472
  %v2474 = vsel %vm2473, %v2466, %v2470
  %v2475 = vand.u32 2147483647, %v2384
  %vm2476 = vcmp.eq.f32.partialorder %v2475, 8.507059e+37
  %v2477 = vand.u32 %v2384, 2147483648
  %v2478 = vor.u32 1.1754944e-38, %v2477
  %v2479 = vsel %vm2476, %v2478, %v2474
  %v2480 = vmul.f32 %v2362, %v2479
  %v2481 = vrcp.pop %v2387
  %v2482 = vmul.f32 %v2387, %v2481
  %v2483 = vsub.f32 1.0, %v2482
  %v2484 = vmul.f32 %v2481, %v2483
  %v2485 = vadd.f32 %v2481, %v2484
  %vm2486 = vweird.f32 %v2387
  %vm2487 = vweird.f32 %v2481
  %vm2488 = vmor %vm2486, %vm2487
  %v2489 = vsel %vm2488, %v2481, %v2485
  %v2490 = vand.u32 2147483647, %v2387
  %vm2491 = vcmp.eq.f32.partialorder %v2490, 8.507059e+37
  %v2492 = vand.u32 %v2387, 2147483648
  %v2493 = vor.u32 1.1754944e-38, %v2492
  %v2494 = vsel %vm2491, %v2493, %v2489
  %v2495 = vmul.f32 %v2364, %v2494
  %v2496 = vrcp.pop %v2390
  %v2497 = vmul.f32 %v2390, %v2496
  %v2498 = vsub.f32 1.0, %v2497
  %v2499 = vmul.f32 %v2496, %v2498
  %v2500 = vadd.f32 %v2496, %v2499
  %vm2501 = vweird.f32 %v2390
  %vm2502 = vweird.f32 %v2496
  %vm2503 = vmor %vm2501, %vm2502
  %v2504 = vsel %vm2503, %v2496, %v2500
  %v2505 = vand.u32 2147483647, %v2390
  %vm2506 = vcmp.eq.f32.partialorder %v2505, 8.507059e+37
  %v2507 = vand.u32 %v2390, 2147483648
  %v2508 = vor.u32 1.1754944e-38, %v2507
  %v2509 = vsel %vm2506, %v2508, %v2504
  %v2510 = vmul.f32 %v2366, %v2509
  %v2511 = vpack.c.bf16 %v2405, %v2405
  %v2512 = vpack.c.bf16 %v2420, %v2420
  %v2513 = vpack.c.bf16 %v2435, %v2435
  %v2514 = vpack.c.bf16 %v2450, %v2450
  %v2515 = vpack.c.bf16 %v2465, %v2465
  %v2516 = vpack.c.bf16 %v2480, %v2480
  %v2517 = vpack.c.bf16 %v2495, %v2495
  %v2518 = vpack.c.bf16 %v2510, %v2510
  %2519 = vrot.lane.b32.xlu0 %v1393, 104
  %v2520 = vpop.permute.xlu0 %2519
  %v2522 = vsel %vm453, %v2511, 0
  %v2525 = vsel %vm809, %v2520, 0
  %2527 = vmatpush.bf16.msra.mxu0 0
  %2528 = vmatpush.bf16.msra.mxu0 0
  %2529 = vmatpush.bf16.msra.mxu0 0
  %2530 = vmatpush.bf16.msra.mxu0 0
  %2531 = vmatpush.bf16.msra.mxu0 0
  %2532 = vmatpush.bf16.msra.mxu0 0
  %2533 = vmatpush.bf16.msra.mxu0 0
  %2534 = vmatpush.bf16.msra.mxu0 %v2525
  %2535 = vmatmul.bf16.gmra.mxu0 %v2522
  %v2536 = vpop.f32.mrf.mxu0
  %v2537 = vadd.f32 0.0, %v2536
  %v2538 = vpop.f32.mrf.mxu0
  %2539 = vdwg.mxu0
  %2540 = vrot.lane.b32.xlu0 %v1417, 104
  %v2541 = vpop.permute.xlu0 %2540
  %v2543 = vsel %vm453, %v2512, 0
  %v2546 = vsel %vm809, %v2541, 0
  %2548 = vmatpush.bf16.msra.mxu0 0
  %2549 = vmatpush.bf16.msra.mxu0 0
  %2550 = vmatpush.bf16.msra.mxu0 0
  %2551 = vmatpush.bf16.msra.mxu0 0
  %2552 = vmatpush.bf16.msra.mxu0 0
  %2553 = vmatpush.bf16.msra.mxu0 0
  %2554 = vmatpush.bf16.msra.mxu0 0
  %2555 = vmatpush.bf16.msra.mxu0 %v2546
  %2556 = vmatmul.bf16.gmra.mxu0 %v2543
  %v2557 = vpop.f32.mrf.mxu0
  %v2558 = vadd.f32 0.0, %v2557
  %v2559 = vpop.f32.mrf.mxu0
  %2560 = vdwg.mxu0
  %2561 = vrot.lane.b32.xlu0 %v1441, 104
  %v2562 = vpop.permute.xlu0 %2561
  %v2564 = vsel %vm453, %v2513, 0
  %v2567 = vsel %vm809, %v2562, 0
  %2569 = vmatpush.bf16.msra.mxu0 0
  %2570 = vmatpush.bf16.msra.mxu0 0
  %2571 = vmatpush.bf16.msra.mxu0 0
  %2572 = vmatpush.bf16.msra.mxu0 0
  %2573 = vmatpush.bf16.msra.mxu0 0
  %2574 = vmatpush.bf16.msra.mxu0 0
  %2575 = vmatpush.bf16.msra.mxu0 0
  %2576 = vmatpush.bf16.msra.mxu0 %v2567
  %2577 = vmatmul.bf16.gmra.mxu0 %v2564
  %v2578 = vpop.f32.mrf.mxu0
  %v2579 = vadd.f32 0.0, %v2578
  %v2580 = vpop.f32.mrf.mxu0
  %2581 = vdwg.mxu0
  %2582 = vrot.lane.b32.xlu0 %v1465, 104
  %v2583 = vpop.permute.xlu0 %2582
  %v2585 = vsel %vm453, %v2514, 0
  %v2588 = vsel %vm809, %v2583, 0
  %2590 = vmatpush.bf16.msra.mxu0 0
  %2591 = vmatpush.bf16.msra.mxu0 0
  %2592 = vmatpush.bf16.msra.mxu0 0
  %2593 = vmatpush.bf16.msra.mxu0 0
  %2594 = vmatpush.bf16.msra.mxu0 0
  %2595 = vmatpush.bf16.msra.mxu0 0
  %2596 = vmatpush.bf16.msra.mxu0 0
  %2597 = vmatpush.bf16.msra.mxu0 %v2588
  %2598 = vmatmul.bf16.gmra.mxu0 %v2585
  %v2599 = vpop.f32.mrf.mxu0
  %v2600 = vadd.f32 0.0, %v2599
  %v2601 = vpop.f32.mrf.mxu0
  %2602 = vdwg.mxu0
  %2603 = vrot.lane.b32.xlu0 %v1489, 104
  %v2604 = vpop.permute.xlu0 %2603
  %v2606 = vsel %vm453, %v2515, 0
  %v2609 = vsel %vm809, %v2604, 0
  %2611 = vmatpush.bf16.msra.mxu0 0
  %2612 = vmatpush.bf16.msra.mxu0 0
  %2613 = vmatpush.bf16.msra.mxu0 0
  %2614 = vmatpush.bf16.msra.mxu0 0
  %2615 = vmatpush.bf16.msra.mxu0 0
  %2616 = vmatpush.bf16.msra.mxu0 0
  %2617 = vmatpush.bf16.msra.mxu0 0
  %2618 = vmatpush.bf16.msra.mxu0 %v2609
  %2619 = vmatmul.bf16.gmra.mxu0 %v2606
  %v2620 = vpop.f32.mrf.mxu0
  %v2621 = vadd.f32 0.0, %v2620
  %v2622 = vpop.f32.mrf.mxu0
  %2623 = vdwg.mxu0
  %2624 = vrot.lane.b32.xlu0 %v1513, 104
  %v2625 = vpop.permute.xlu0 %2624
  %v2627 = vsel %vm453, %v2516, 0
  %v2630 = vsel %vm809, %v2625, 0
  %2632 = vmatpush.bf16.msra.mxu0 0
  %2633 = vmatpush.bf16.msra.mxu0 0
  %2634 = vmatpush.bf16.msra.mxu0 0
  %2635 = vmatpush.bf16.msra.mxu0 0
  %2636 = vmatpush.bf16.msra.mxu0 0
  %2637 = vmatpush.bf16.msra.mxu0 0
  %2638 = vmatpush.bf16.msra.mxu0 0
  %2639 = vmatpush.bf16.msra.mxu0 %v2630
  %2640 = vmatmul.bf16.gmra.mxu0 %v2627
  %v2641 = vpop.f32.mrf.mxu0
  %v2642 = vadd.f32 0.0, %v2641
  %v2643 = vpop.f32.mrf.mxu0
  %2644 = vdwg.mxu0
  %2645 = vrot.lane.b32.xlu0 %v1537, 104
  %v2646 = vpop.permute.xlu0 %2645
  %v2648 = vsel %vm453, %v2517, 0
  %v2651 = vsel %vm809, %v2646, 0
  %2653 = vmatpush.bf16.msra.mxu0 0
  %2654 = vmatpush.bf16.msra.mxu0 0
  %2655 = vmatpush.bf16.msra.mxu0 0
  %2656 = vmatpush.bf16.msra.mxu0 0
  %2657 = vmatpush.bf16.msra.mxu0 0
  %2658 = vmatpush.bf16.msra.mxu0 0
  %2659 = vmatpush.bf16.msra.mxu0 0
  %2660 = vmatpush.bf16.msra.mxu0 %v2651
  %2661 = vmatmul.bf16.gmra.mxu0 %v2648
  %v2662 = vpop.f32.mrf.mxu0
  %v2663 = vadd.f32 0.0, %v2662
  %v2664 = vpop.f32.mrf.mxu0
  %2665 = vdwg.mxu0
  %2666 = vrot.lane.b32.xlu0 %v1561, 104
  %v2667 = vpop.permute.xlu0 %2666
  %v2669 = vsel %vm453, %v2518, 0
  %v2672 = vsel %vm809, %v2667, 0
  %2674 = vmatpush.bf16.msra.mxu0 0
  %2675 = vmatpush.bf16.msra.mxu0 0
  %2676 = vmatpush.bf16.msra.mxu0 0
  %2677 = vmatpush.bf16.msra.mxu0 0
  %2678 = vmatpush.bf16.msra.mxu0 0
  %2679 = vmatpush.bf16.msra.mxu0 0
  %2680 = vmatpush.bf16.msra.mxu0 0
  %2681 = vmatpush.bf16.msra.mxu0 %v2672
  %2682 = vmatmul.bf16.gmra.mxu0 %v2669
  %v2683 = vpop.f32.mrf.mxu0
  %v2684 = vadd.f32 0.0, %v2683
  %v2685 = vpop.f32.mrf.mxu0
  %2686 = vdwg.mxu0
  %2695 = vrot.lane.b32.xlu0 %v1412, 8
  %v2696 = vpop.permute.xlu0 %2695
  %2697 = vrot.lane.b32.xlu0 %v1436, 8
  %v2698 = vpop.permute.xlu0 %2697
  %2699 = vrot.lane.b32.xlu0 %v1460, 8
  %v2700 = vpop.permute.xlu0 %2699
  %2701 = vrot.lane.b32.xlu0 %v1484, 8
  %v2702 = vpop.permute.xlu0 %2701
  %2703 = vrot.lane.b32.xlu0 %v1508, 8
  %v2704 = vpop.permute.xlu0 %2703
  %2705 = vrot.lane.b32.xlu0 %v1532, 8
  %v2706 = vpop.permute.xlu0 %2705
  %2707 = vrot.lane.b32.xlu0 %v1556, 8
  %v2708 = vpop.permute.xlu0 %2707
  %2709 = vrot.lane.b32.xlu0 %v1580, 8
  %v2710 = vpop.permute.xlu0 %2709
  %2727 = vrot.lane.b32.xlu0 %v1985, 16
  %v2728 = vpop.permute.xlu0 %2727
  %2729 = vrot.lane.b32.xlu0 %v2006, 16
  %v2730 = vpop.permute.xlu0 %2729
  %2731 = vrot.lane.b32.xlu0 %v2027, 16
  %v2732 = vpop.permute.xlu0 %2731
  %2733 = vrot.lane.b32.xlu0 %v2048, 16
  %v2734 = vpop.permute.xlu0 %2733
  %2735 = vrot.lane.b32.xlu0 %v2069, 16
  %v2736 = vpop.permute.xlu0 %2735
  %2737 = vrot.lane.b32.xlu0 %v2090, 16
  %v2738 = vpop.permute.xlu0 %2737
  %2739 = vrot.lane.b32.xlu0 %v2111, 16
  %v2740 = vpop.permute.xlu0 %2739
  %2741 = vrot.lane.b32.xlu0 %v2132, 16
  %v2742 = vpop.permute.xlu0 %2741
  %2759 = vrot.lane.b32.xlu0 %v2537, 24
  %v2760 = vpop.permute.xlu0 %2759
  %2761 = vrot.lane.b32.xlu0 %v2558, 24
  %v2762 = vpop.permute.xlu0 %2761
  %2763 = vrot.lane.b32.xlu0 %v2579, 24
  %v2764 = vpop.permute.xlu0 %2763
  %2765 = vrot.lane.b32.xlu0 %v2600, 24
  %v2766 = vpop.permute.xlu0 %2765
  %2767 = vrot.lane.b32.xlu0 %v2621, 24
  %v2768 = vpop.permute.xlu0 %2767
  %2769 = vrot.lane.b32.xlu0 %v2642, 24
  %v2770 = vpop.permute.xlu0 %2769
  %2771 = vrot.lane.b32.xlu0 %v2663, 24
  %v2772 = vpop.permute.xlu0 %2771
  %2773 = vrot.lane.b32.xlu0 %v2684, 24
  %v2774 = vpop.permute.xlu0 %2773
  %v2783 = vsel %vm453, %v823, %v2696
  %v2784 = vsel %vm453, %v842, %v2698
  %v2785 = vsel %vm453, %v861, %v2700
  %v2786 = vsel %vm453, %v880, %v2702
  %v2787 = vsel %vm453, %v899, %v2704
  %v2788 = vsel %vm453, %v918, %v2706
  %v2789 = vsel %vm453, %v937, %v2708
  %v2790 = vsel %vm453, %v956, %v2710
  %vm2791 = vcmask 130048
  %v2792 = vsel %vm2791, %v2783, %v2728
  %v2793 = vsel %vm2791, %v2784, %v2730
  %v2794 = vsel %vm2791, %v2785, %v2732
  %v2795 = vsel %vm2791, %v2786, %v2734
  %v2796 = vsel %vm2791, %v2787, %v2736
  %v2797 = vsel %vm2791, %v2788, %v2738
  %v2798 = vsel %vm2791, %v2789, %v2740
  %v2799 = vsel %vm2791, %v2790, %v2742
  %vm2800 = vcmask 195584
  %v2801 = vsel %vm2800, %v2792, %v2760
  %v2802 = vsel %vm2800, %v2793, %v2762
  %v2803 = vsel %vm2800, %v2794, %v2764
  %v2804 = vsel %vm2800, %v2795, %v2766
  %v2805 = vsel %vm2800, %v2796, %v2768
  %v2806 = vsel %vm2800, %v2797, %v2770
  %v2807 = vsel %vm2800, %v2798, %v2772
  %v2808 = vsel %vm2800, %v2799, %v2774
  %v2809 = vpack.c.bf16 %v2802, %v2801
  %v2810 = vpack.c.bf16 %v2804, %v2803
  %v2811 = vpack.c.bf16 %v2806, %v2805
  %v2812 = vpack.c.bf16 %v2808, %v2807
  %v2813 = vld [vmem:[%s7] sm:$0xf]
  %v2814 = vld [vmem:[%s7 + $0x4] sm:$0xf]
  %v2815 = vld [vmem:[%s7 + $0x8] sm:$0xf]
  %v2816 = vld [vmem:[%s7 + $0xc] sm:$0xf]
  %v2817 = vld [vmem:[%s8] sm:$0x1]
  %v2819 = vperm.slane %v2817, 0
  %v2825 = vunpack.c.l.b16 %v2813
  %v2826 = vunpack.c.l.b16 %v2814
  %v2827 = vunpack.c.l.b16 %v2815
  %v2828 = vunpack.c.l.b16 %v2816
  %v2829 = vpack.c.b16 %v2826, %v2825
  %v2830 = vpack.c.b16 %v2828, %v2827
  %vm2833 = vcmask 261120
  %v2835 = vsel %vm2833, %v2809, 0
  %v2838 = vsel %vm2833, %v2810, 0
  %v2841 = vsel %vm2833, %v2811, 0
  %v2844 = vsel %vm2833, %v2812, 0
  %2846 = vmatpush.bf16.msra.mxu0 0
  %2847 = vmatpush.bf16.msra.mxu0 0
  %2848 = vmatpush.bf16.msra.mxu0 0
  %2849 = vmatpush.bf16.msra.mxu0 0
  %2850 = vmatpush.bf16.msra.mxu0 0
  %2851 = vmatpush.bf16.msra.mxu0 0
  %2852 = vmatpush.bf16.msra.mxu0 %v2830
  %2853 = vmatpush.bf16.msra.mxu0 %v2829
  %2854 = vmatmul.bf16.gmra.mxu0 %v2835
  %v2855 = vpop.f32.mrf.mxu0
  %v2856 = vadd.f32 %v2819, %v2855
  %v2857 = vpop.f32.mrf.mxu0
  %v2858 = vadd.f32 %v2819, %v2857
  %2859 = vmatmul.bf16.gmra.mxu0 %v2838
  %v2860 = vpop.f32.mrf.mxu0
  %v2861 = vadd.f32 %v2819, %v2860
  %v2862 = vpop.f32.mrf.mxu0
  %v2863 = vadd.f32 %v2819, %v2862
  %2864 = vmatmul.bf16.gmra.mxu0 %v2841
  %v2865 = vpop.f32.mrf.mxu0
  %v2866 = vadd.f32 %v2819, %v2865
  %v2867 = vpop.f32.mrf.mxu0
  %v2868 = vadd.f32 %v2819, %v2867
  %2869 = vmatmul.bf16.gmra.mxu0 %v2844
  %v2870 = vpop.f32.mrf.mxu0
  %v2871 = vadd.f32 %v2819, %v2870
  %v2872 = vpop.f32.mrf.mxu0
  %v2873 = vadd.f32 %v2819, %v2872
  %2874 = vdwg.mxu0
  %v2875 = vpack.c.bf16 %v2856, %v2856
  %v2876 = vpack.c.bf16 %v2858, %v2858
  %v2877 = vpack.c.bf16 %v2861, %v2861
  %v2878 = vpack.c.bf16 %v2863, %v2863
  %v2879 = vpack.c.bf16 %v2866, %v2866
  %v2880 = vpack.c.bf16 %v2868, %v2868
  %v2881 = vpack.c.bf16 %v2871, %v2871
  %v2882 = vpack.c.bf16 %v2873, %v2873
  %2883 = vst [vmem:[%s9] sm:$0xf] %v2875
  %2884 = vst [vmem:[%s9 + $0x4] sm:$0xf] %v2876
  %2885 = vst [vmem:[%s9 + $0x8] sm:$0xf] %v2877
  %2886 = vst [vmem:[%s9 + $0xc] sm:$0xf] %v2878
  %2887 = vst [vmem:[%s9 + $0x10] sm:$0xf] %v2879
  %2888 = vst [vmem:[%s9 + $0x14] sm:$0xf] %v2880
  %2889 = vst [vmem:[%s9 + $0x18] sm:$0xf] %v2881
  %2890 = vst [vmem:[%s9 + $0x1c] sm:$0xf] %v2882
  // Predicated region
  $region38: #{liquid_nn_forward.4} parent=0 // pred_check
    _
  $region39: #{liquid_nn_forward.4} parent=0 // pred_check_branch
    %2892 = sbr.rel (0) target = $region41
  $region40: #{liquid_nn_forward.4} parent=0 // pred_region
    _
  $region41: #{liquid_nn_forward.4} parent=0 // pred_fallthru
    _
  // Predicated region
  $region42: #{liquid_nn_forward.4} parent=0 // pred_check
    _
  $region43: #{liquid_nn_forward.4} parent=0 // pred_check_branch
    %2894 = sbr.rel (0) target = $region45
  $region44: #{liquid_nn_forward.4} parent=0 // pred_region
    _
  $region45: #{liquid_nn_forward.4} parent=0 // pred_fallthru
    _

</llo_original>
